<compile_context>
chip_gen: v5e
topology: v5e:2x2
jax: 0.10.0
libtpu: 0.0.40
codegen_flags: <defaults>
</compile_context>

<pallas_src>
import jax
import jax.numpy as jnp
from jax import lax
from jax.experimental import pallas as pl
from jax.experimental.pallas import tpu as pltpu

LANE = 128          # TPU lane width: output-channel dims padded to this
K0_PAD = 32         # conv1 im2col K (3*3*3 = 27) padded to one bf16 sublane tile
OUT_ROWS = 8        # rows of the GAP / fc tail padded to one sublane group

# Bias "slots" inside the single coalesced (1, _B_TOTAL) f32 bias array.
# Order: conv1/bn1, 7 stages, conv2/bn2, fc.   (reduction=1 channel plan)
_B_SLOT_W = (128, 128, 128, 128, 128, 128, 256, 256, 2048, 128)
_B_OFF = tuple(int(sum(_B_SLOT_W[:i])) for i in range(len(_B_SLOT_W)))
_B_TOTAL = int(sum(_B_SLOT_W))

# (cin, cout) of the pointwise-approximated stages (reduction=1):
_STAGE_DIMS = (
    (16, 16),     # IBSSL(16, 16, stride=1, expansion=4)
    (16, 32),     # IBPool(16, 32, stride=1, expansion=5)
    (32, 64),     # FEBlock3n2s(32, 64)   (stride 2)
    (64, 128),    # FEBlock4n2s(64, 128)  (stride 2)
    (128, 128),   # FEBlock4n1s(128, 128)
    (128, 256),   # FEBlock4n2s(128, 256) (stride 2)
    (256, 256),   # FEBlock3n1s(256, 256)
)


def _round_up(x, m):
    return ((x + m - 1) // m) * m


def _cpad(c):
    return max(LANE, _round_up(c, LANE))


# --------------------------------------------------------------------------
# The single fused Pallas kernel
# --------------------------------------------------------------------------
def _fenet_kernel(x0_ref, sel_ref, gap_ref, bias_ref,
                  w1_ref, ws0_ref, ws1_ref, ws2_ref, ws3_ref,
                  ws4_ref, ws5_ref, ws6_ref,
                  w2_hbm, wfc_hbm,
                  out_ref,
                  w2_vmem, wfc_vmem, dma_sem):
    """Whole FENet forward; small weights VMEM-resident via BlockSpec, the two
    big late weights (conv2, fc) DMA'd manually so they overlap early compute."""
    f32, bf16 = jnp.float32, jnp.bfloat16

    # Kick off the big late-weight DMAs immediately (overlap with everything
    # up to conv2 / fc).  conv2 weight is ~70% of all HBM bytes of this call.
    w2_cp = pltpu.make_async_copy(w2_hbm, w2_vmem, dma_sem.at[0])
    wfc_cp = pltpu.make_async_copy(wfc_hbm, wfc_vmem, dma_sem.at[1])
    w2_cp.start()
    wfc_cp.start()

    def layer(x, w, b_off, relu, out_bf16=True):
        # 1x1-conv-as-matmul on the MXU (bf16 operands, f32 accumulator);
        # folded-BN bias (+ ReLU) on the VPU in f32 (v5e has no bf16 VPU);
        # single bf16 cast in the epilogue for the next layer's MXU operand.
        k = w.shape[0]
        lhs = x if x.shape[1] == k else x[:, :k]      # drop zero-padded lanes
        y = jnp.dot(lhs, w, preferred_element_type=f32)
        y = y + bias_ref[:, b_off:b_off + w.shape[1]]
        if relu:
            y = jnp.maximum(y, 0.0)
        return y.astype(bf16) if out_bf16 else y

    # conv1 (3x3/s2/p1 as im2col matmul) + folded bn1 — no ReLU in the
    # reference forward (x = bn1(conv1(x)) feeds ibssl directly).
    x = layer(x0_ref[...], w1_ref[...], _B_OFF[0], relu=False)

    # The three stride-2 downsamples of the (pointwise-approximated) stages
    # commute with 1x1 convs, so they are composed into ONE 0/1 row selector
    # applied right after conv1: every later layer runs on 8 rows, not 512.
    x = jnp.dot(sel_ref[...], x, preferred_element_type=f32).astype(bf16)

    # TODO(synk): IBSSL / IBPool / FEBlock{3n2s,4n2s,4n1s,3n1s} internals are
    # not defined in the reference file; each stage is approximated by a 1x1
    # conv + folded BatchNorm + ReLU matching the constructor's channel/stride
    # signature (strides handled by the composed selector above).
    x = layer(x, ws0_ref[...], _B_OFF[1], relu=True)    # IBSSL       16 -> 16
    x = layer(x, ws1_ref[...], _B_OFF[2], relu=True)    # IBPool      16 -> 32
    x = layer(x, ws2_ref[...], _B_OFF[3], relu=True)    # FEBlock3n2s 32 -> 64
    x = layer(x, ws3_ref[...], _B_OFF[4], relu=True)    # FEBlock4n2s 64 -> 128
    x = layer(x, ws4_ref[...], _B_OFF[5], relu=True)    # FEBlock4n1s 128 -> 128
    x = layer(x, ws5_ref[...], _B_OFF[6], relu=True)    # FEBlock4n2s 128 -> 256
    x = layer(x, ws6_ref[...], _B_OFF[7], relu=True)    # FEBlock3n1s 256 -> 256

    # conv2 + bn2 + ReLU: its weight arrives via the overlapped manual DMA.
    w2_cp.wait()
    x = layer(x, w2_vmem[...], _B_OFF[8], relu=True)

    # AdaptiveAvgPool2d((1,1)) over the 4 surviving positions per image, as a
    # tiny constant averaging matmul.  Dropout(p=0.2) is identity at inference.
    x = jnp.dot(gap_ref[...], x, preferred_element_type=f32).astype(bf16)

    # fc (1x1 conv with bias).  Weight is stored transposed/compact (16, 2048)
    # to avoid shipping 112 padded lanes; contract on dim 1 of both operands.
    wfc_cp.wait()
    y = lax.dot_general(x, wfc_vmem[...], (((1,), (1,)), ((), ())),
                        preferred_element_type=f32)
    out_ref[...] = y + bias_ref[:, _B_OFF[9]:_B_OFF[9] + y.shape[1]]


# --------------------------------------------------------------------------
# Host-side glue: BN folding, padding, selection matrices, parameter init
# --------------------------------------------------------------------------
def bn_fold(gamma, beta, mean, var, eps=1e-5):
    scale = gamma / jnp.sqrt(var + eps)
    bias = beta - mean * scale
    return scale, bias


def init_params(key, num_classes=10):
    def nxt():
        nonlocal key
        key, sub = jax.random.split(key)
        return sub

    def conv_w(k_in, cout):
        return 0.1 * jax.random.normal(nxt(), (k_in, cout), jnp.float32)

    def bn(c):
        gamma = 1.0 + 0.1 * jax.random.normal(nxt(), (c,), jnp.float32)
        beta = 0.1 * jax.random.normal(nxt(), (c,), jnp.float32)
        mean = 0.1 * jax.random.normal(nxt(), (c,), jnp.float32)
        var = 1.0 + 0.1 * jnp.abs(jax.random.normal(nxt(), (c,), jnp.float32))
        return bn_fold(gamma, beta, mean, var)

    params = {}
    params["conv1_w"] = conv_w(3 * 3 * 3, 16)               # Conv2d(3, 16, 3, s2, p1)
    params["bn1_scale"], params["bn1_bias"] = bn(16)

    stages = []
    for cin, cout in _STAGE_DIMS:
        w = conv_w(cin, cout)
        s, b = bn(cout)
        stages.append((w, s, b))
    params["stages"] = stages

    params["conv2_w"] = conv_w(256, 1932)                   # Conv2d(256, 1932, 1)
    params["bn2_scale"], params["bn2_bias"] = bn(1932)

    params["fc_w"] = conv_w(1932, num_classes)              # Conv2d(1932, nc, 1, bias)
    params["fc_b"] = 0.1 * jax.random.normal(nxt(), (num_classes,), jnp.float32)
    return params


def _pad_weight(w, k_pad, n_pad):
    k, n = w.shape
    return jnp.pad(w, ((0, k_pad - k), (0, n_pad - n))).astype(jnp.bfloat16)


def _composed_downsample_matrix(n, ho, wo, steps=3):
    """0/1 selector implementing x[:, ::2, ::2, :] applied `steps` times, on
    row-major (n*ho*wo, C) activations.  Shape (n*hf*wf, n*ho*wo)."""
    f = 2 ** steps
    hf, wf = ho // f, wo // f
    rows = n * hf * wf
    out_idx = jnp.arange(rows)
    b = out_idx // (hf * wf)
    r = (out_idx // wf) % hf
    c = out_idx % wf
    in_idx = b * (ho * wo) + (f * r) * wo + (f * c)
    sel = jnp.zeros((rows, n * ho * wo), jnp.float32).at[out_idx, in_idx].set(1.0)
    return sel.astype(jnp.bfloat16)


def _gap_matrix(n, positions, rows_out):
    """Averaging matrix implementing AdaptiveAvgPool2d((1,1)); rows >= n zero."""
    out_idx = jnp.repeat(jnp.arange(n), positions)
    in_idx = jnp.arange(n * positions)
    m = jnp.zeros((rows_out, n * positions), jnp.float32)
    m = m.at[out_idx, in_idx].set(1.0 / positions)
    return m.astype(jnp.bfloat16)


def _pack_biases(bias_list):
    slots = []
    for b, w in zip(bias_list, _B_SLOT_W):
        slots.append(jnp.pad(b.astype(jnp.float32), (0, w - b.shape[0])))
    return jnp.concatenate(slots).reshape(1, _B_TOTAL)


def pack_params(params, batch, height, width):
    """Fold BN into weights, pad channel dims (compact K, 128-lane N), build
    the composed stride-2 selector, GAP matrix and the coalesced bias array."""
    ho, wo = height // 2, width // 2          # spatial after conv1 (3x3/s2/p1)
    assert ho % 8 == 0 and wo % 8 == 0, "need room for three stride-2 stages"

    # conv1 + bn1
    w1 = _pad_weight(params["conv1_w"] * params["bn1_scale"][None, :],
                     K0_PAD, _cpad(16))

    # composed downsample selector (all three stride-2 steps)
    sel = _composed_downsample_matrix(batch, ho, wo, steps=3)
    positions = (ho // 8) * (wo // 8)

    # stages: compact K (real cin), N padded to 128 lanes
    stage_ws, stage_bs = [], []
    for (wgt, scale, bias) in params["stages"]:
        cin, cout = wgt.shape
        stage_ws.append(_pad_weight(wgt * scale[None, :], cin, _cpad(cout)))
        stage_bs.append(bias)

    # conv2 + bn2 (1932 -> 2048 lanes)
    w2 = _pad_weight(params["conv2_w"] * params["bn2_scale"][None, :],
                     256, _cpad(1932))

    # GAP over the surviving positions of each image
    gap = _gap_matrix(batch, positions, OUT_ROWS)

    # fc: stored transposed + compact, (num_classes -> 16, 1932 -> 2048)
    nc_pad = 16
    wfc_t = _pad_weight(params["fc_w"].T, nc_pad, _cpad(1932))

    bias = _pack_biases([params["bn1_bias"]] + stage_bs
                        + [params["bn2_bias"], params["fc_b"]])

    return (sel, gap, bias, w1) + tuple(stage_ws) + (w2, wfc_t)


# --------------------------------------------------------------------------
# Forward pass (jitted wrapper around the single pallas_call)
# --------------------------------------------------------------------------
def fenet_forward(packed, x_nchw, num_classes):
    n = x_nchw.shape[0]

    # 3x3 / stride-2 / pad-1 patch extraction as one fused XLA gather, in NHWC
    # so the patch features land in the last (lane) dim with no extra
    # transpose.  Feature ordering is (cin, kh, kw), i.e. torch
    # conv1.weight.reshape(16, 27).T would drop straight in.
    x_nhwc = jnp.transpose(x_nchw, (0, 2, 3, 1))
    patches = lax.conv_general_dilated_patches(
        x_nhwc, filter_shape=(3, 3), window_strides=(2, 2),
        padding=((1, 1), (1, 1)),
        dimension_numbers=("NHWC", "HWIO", "NHWC"))       # (N, Ho, Wo, 27)
    ho, wo = patches.shape[1], patches.shape[2]
    x0 = patches.reshape(n * ho * wo, patches.shape[3])
    x0 = jnp.pad(x0, ((0, 0), (0, K0_PAD - x0.shape[1]))).astype(jnp.bfloat16)

    flat_inputs = (x0,) + tuple(packed)
    w2, wfc_t = flat_inputs[-2], flat_inputs[-1]
    nc_pad = wfc_t.shape[0]

    # All small weights / selectors / the coalesced bias go in via BlockSpec
    # (auto-DMA, VMEM-resident); the two big late weights stay in HBM (ANY)
    # and are copied manually inside the kernel to overlap with early compute.
    in_specs = [pl.BlockSpec(a.shape, lambda i: (0, 0))
                for a in flat_inputs[:-2]]
    in_specs += [pl.BlockSpec(memory_space=pl.ANY),
                 pl.BlockSpec(memory_space=pl.ANY)]

    out = pl.pallas_call(
        _fenet_kernel,
        out_shape=jax.ShapeDtypeStruct((OUT_ROWS, nc_pad), jnp.float32),
        grid=(1,),
        in_specs=in_specs,
        out_specs=pl.BlockSpec((OUT_ROWS, nc_pad), lambda i: (0, 0)),
        scratch_shapes=[
            pltpu.VMEM(w2.shape, jnp.bfloat16),       # conv2 weight landing buf
            pltpu.VMEM(wfc_t.shape, jnp.bfloat16),    # fc weight landing buf
            pltpu.SemaphoreType.DMA((2,)),
        ],
        compiler_params=pltpu.CompilerParams(
            dimension_semantics=("arbitrary",)),
    )(*flat_inputs)
    return out[:n, :num_classes]


# --------------------------------------------------------------------------
if __name__ == "__main__":
    key = jax.random.PRNGKey(0)
    pkey, xkey = jax.random.split(key)

    num_classes = 10
    params = init_params(pkey, num_classes=num_classes)
    packed = pack_params(params, batch=2, height=32, width=32)

    # small deterministic input, NCHW like the PyTorch module expects
    x = jax.random.normal(xkey, (2, 3, 32, 32), jnp.float32)

    fwd = jax.jit(fenet_forward, static_argnums=(2,))
    out = jax.block_until_ready(fwd(packed, x, num_classes))

    assert out.shape == (2, num_classes), out.shape
    assert bool(jnp.all(jnp.isfinite(out)))
    print("KERNEL_OK")
</pallas_src>

<mosaic_0001>
module attributes {stable_mosaic.version = 11 : i64} {
  func.func @_fenet_kernel(%arg0: i32, %arg1: memref<512x32xbf16, #tpu.memory_space<vmem>>, %arg2: memref<8x512xbf16, #tpu.memory_space<vmem>>, %arg3: memref<8x8xbf16, #tpu.memory_space<vmem>>, %arg4: memref<1x3456xf32, #tpu.memory_space<vmem>>, %arg5: memref<32x128xbf16, #tpu.memory_space<vmem>>, %arg6: memref<16x128xbf16, #tpu.memory_space<vmem>>, %arg7: memref<16x128xbf16, #tpu.memory_space<vmem>>, %arg8: memref<32x128xbf16, #tpu.memory_space<vmem>>, %arg9: memref<64x128xbf16, #tpu.memory_space<vmem>>, %arg10: memref<128x128xbf16, #tpu.memory_space<vmem>>, %arg11: memref<128x256xbf16, #tpu.memory_space<vmem>>, %arg12: memref<256x256xbf16, #tpu.memory_space<vmem>>, %arg13: memref<256x2048xbf16, #tpu.memory_space<any>>, %arg14: memref<16x2048xbf16, #tpu.memory_space<any>>, %arg15: memref<8x16xf32, #tpu.memory_space<vmem>>, %arg16: memref<256x2048xbf16, #tpu.memory_space<vmem>>, %arg17: memref<16x2048xbf16, #tpu.memory_space<vmem>>, %arg18: memref<2x!tpu.dma_semaphore, #tpu.memory_space<semaphore_mem>>) attributes {dimension_semantics = [#tpu.dimension_semantics<arbitrary>], iteration_bounds = array<i64: 1>, scalar_prefetch = 0 : i64, scratch_operands = 3 : i64, tpu.core_type = #tpu.core_type<tc>, window_params = [{pipeline_mode = #tpu.pipeline_mode<synchronous>, transform_indices = @transform_0, window_bounds = array<i64: 512, 32>}, {pipeline_mode = #tpu.pipeline_mode<synchronous>, transform_indices = @transform_1, window_bounds = array<i64: 8, 512>}, {pipeline_mode = #tpu.pipeline_mode<synchronous>, transform_indices = @transform_2, window_bounds = array<i64: 8, 8>}, {pipeline_mode = #tpu.pipeline_mode<synchronous>, transform_indices = @transform_3, window_bounds = array<i64: 1, 3456>}, {pipeline_mode = #tpu.pipeline_mode<synchronous>, transform_indices = @transform_4, window_bounds = array<i64: 32, 128>}, {pipeline_mode = #tpu.pipeline_mode<synchronous>, transform_indices = @transform_5, window_bounds = array<i64: 16, 128>}, {pipeline_mode = #tpu.pipeline_mode<synchronous>, transform_indices = @transform_6, window_bounds = array<i64: 16, 128>}, {pipeline_mode = #tpu.pipeline_mode<synchronous>, transform_indices = @transform_7, window_bounds = array<i64: 32, 128>}, {pipeline_mode = #tpu.pipeline_mode<synchronous>, transform_indices = @transform_8, window_bounds = array<i64: 64, 128>}, {pipeline_mode = #tpu.pipeline_mode<synchronous>, transform_indices = @transform_9, window_bounds = array<i64: 128, 128>}, {pipeline_mode = #tpu.pipeline_mode<synchronous>, transform_indices = @transform_10, window_bounds = array<i64: 128, 256>}, {pipeline_mode = #tpu.pipeline_mode<synchronous>, transform_indices = @transform_11, window_bounds = array<i64: 256, 256>}, {}, {}, {pipeline_mode = #tpu.pipeline_mode<synchronous>, transform_indices = @transform_14, window_bounds = array<i64: 8, 16>}]} {
    %c0_i32 = arith.constant 0 : i32
    %0 = tpu.memref_slice %arg18[%c0_i32] : memref<2x!tpu.dma_semaphore, #tpu.memory_space<semaphore_mem>> -> memref<1x!tpu.dma_semaphore, #tpu.memory_space<semaphore_mem>>
    %1 = tpu.memref_squeeze %0 : memref<1x!tpu.dma_semaphore, #tpu.memory_space<semaphore_mem>> -> memref<!tpu.dma_semaphore, #tpu.memory_space<semaphore_mem>>
    tpu.enqueue_dma source(%arg13 : memref<256x2048xbf16, #tpu.memory_space<any>>) target(%arg16 : memref<256x2048xbf16, #tpu.memory_space<vmem>>) target_semaphore(%1 : memref<!tpu.dma_semaphore, #tpu.memory_space<semaphore_mem>>)
    %c1_i32 = arith.constant 1 : i32
    %2 = tpu.memref_slice %arg18[%c1_i32] : memref<2x!tpu.dma_semaphore, #tpu.memory_space<semaphore_mem>> -> memref<1x!tpu.dma_semaphore, #tpu.memory_space<semaphore_mem>>
    %3 = tpu.memref_squeeze %2 : memref<1x!tpu.dma_semaphore, #tpu.memory_space<semaphore_mem>> -> memref<!tpu.dma_semaphore, #tpu.memory_space<semaphore_mem>>
    tpu.enqueue_dma source(%arg14 : memref<16x2048xbf16, #tpu.memory_space<any>>) target(%arg17 : memref<16x2048xbf16, #tpu.memory_space<vmem>>) target_semaphore(%3 : memref<!tpu.dma_semaphore, #tpu.memory_space<semaphore_mem>>)
    %c0 = arith.constant 0 : index
    %c0_0 = arith.constant 0 : index
    %4 = vector.load %arg1[%c0, %c0_0] : memref<512x32xbf16, #tpu.memory_space<vmem>>, vector<512x32xbf16>
    %c0_1 = arith.constant 0 : index
    %c0_2 = arith.constant 0 : index
    %5 = vector.load %arg5[%c0_1, %c0_2] : memref<32x128xbf16, #tpu.memory_space<vmem>>, vector<32x128xbf16>
    %cst = arith.constant dense<0.000000e+00> : vector<512x128xf32>
    %6 = tpu.matmul %4, %5, %cst {dimension_numbers = #tpu.dot_dimension_numbers<[1], [0], [0], [1], [0, 0, 1, 1], [], []>} : vector<512x32xbf16>, vector<32x128xbf16>, vector<512x128xf32> -> vector<512x128xf32>
    %c0_3 = arith.constant 0 : index
    %c0_4 = arith.constant 0 : index
    %7 = vector.load %arg4[%c0_3, %c0_4] : memref<1x3456xf32, #tpu.memory_space<vmem>>, vector<1x128xf32>
    %8 = vector.broadcast %7 : vector<1x128xf32> to vector<512x128xf32>
    %9 = arith.addf %6, %8 : vector<512x128xf32>
    %10 = arith.truncf %9 : vector<512x128xf32> to vector<512x128xbf16>
    %c0_5 = arith.constant 0 : index
    %c0_6 = arith.constant 0 : index
    %11 = vector.load %arg2[%c0_5, %c0_6] : memref<8x512xbf16, #tpu.memory_space<vmem>>, vector<8x512xbf16>
    %cst_7 = arith.constant dense<0.000000e+00> : vector<8x128xf32>
    %12 = tpu.matmul %11, %10, %cst_7 {dimension_numbers = #tpu.dot_dimension_numbers<[1], [0], [0], [1], [0, 0, 1, 1], [], []>} : vector<8x512xbf16>, vector<512x128xbf16>, vector<8x128xf32> -> vector<8x128xf32>
    %13 = arith.truncf %12 : vector<8x128xf32> to vector<8x128xbf16>
    %c0_8 = arith.constant 0 : index
    %c0_9 = arith.constant 0 : index
    %14 = vector.load %arg6[%c0_8, %c0_9] : memref<16x128xbf16, #tpu.memory_space<vmem>>, vector<16x128xbf16>
    %15 = vector.extract_strided_slice %13 {offsets = [0, 0], sizes = [8, 16], strides = [1, 1]} : vector<8x128xbf16> to vector<8x16xbf16>
    %cst_10 = arith.constant dense<0.000000e+00> : vector<8x128xf32>
    %16 = tpu.matmul %15, %14, %cst_10 {dimension_numbers = #tpu.dot_dimension_numbers<[1], [0], [0], [1], [0, 0, 1, 1], [], []>} : vector<8x16xbf16>, vector<16x128xbf16>, vector<8x128xf32> -> vector<8x128xf32>
    %c0_11 = arith.constant 0 : index
    %c128 = arith.constant 128 : index
    %17 = vector.load %arg4[%c0_11, %c128] : memref<1x3456xf32, #tpu.memory_space<vmem>>, vector<1x128xf32>
    %18 = vector.broadcast %17 : vector<1x128xf32> to vector<8x128xf32>
    %19 = arith.addf %16, %18 : vector<8x128xf32>
    %cst_12 = arith.constant 0.000000e+00 : f32
    %20 = vector.broadcast %cst_12 : f32 to vector<8x128xf32>
    %21 = arith.maximumf %19, %20 : vector<8x128xf32>
    %22 = arith.truncf %21 : vector<8x128xf32> to vector<8x128xbf16>
    %c0_13 = arith.constant 0 : index
    %c0_14 = arith.constant 0 : index
    %23 = vector.load %arg7[%c0_13, %c0_14] : memref<16x128xbf16, #tpu.memory_space<vmem>>, vector<16x128xbf16>
    %24 = vector.extract_strided_slice %22 {offsets = [0, 0], sizes = [8, 16], strides = [1, 1]} : vector<8x128xbf16> to vector<8x16xbf16>
    %cst_15 = arith.constant dense<0.000000e+00> : vector<8x128xf32>
    %25 = tpu.matmul %24, %23, %cst_15 {dimension_numbers = #tpu.dot_dimension_numbers<[1], [0], [0], [1], [0, 0, 1, 1], [], []>} : vector<8x16xbf16>, vector<16x128xbf16>, vector<8x128xf32> -> vector<8x128xf32>
    %c0_16 = arith.constant 0 : index
    %c256 = arith.constant 256 : index
    %26 = vector.load %arg4[%c0_16, %c256] : memref<1x3456xf32, #tpu.memory_space<vmem>>, vector<1x128xf32>
    %27 = vector.broadcast %26 : vector<1x128xf32> to vector<8x128xf32>
    %28 = arith.addf %25, %27 : vector<8x128xf32>
    %cst_17 = arith.constant 0.000000e+00 : f32
    %29 = vector.broadcast %cst_17 : f32 to vector<8x128xf32>
    %30 = arith.maximumf %28, %29 : vector<8x128xf32>
    %31 = arith.truncf %30 : vector<8x128xf32> to vector<8x128xbf16>
    %c0_18 = arith.constant 0 : index
    %c0_19 = arith.constant 0 : index
    %32 = vector.load %arg8[%c0_18, %c0_19] : memref<32x128xbf16, #tpu.memory_space<vmem>>, vector<32x128xbf16>
    %33 = vector.extract_strided_slice %31 {offsets = [0, 0], sizes = [8, 32], strides = [1, 1]} : vector<8x128xbf16> to vector<8x32xbf16>
    %cst_20 = arith.constant dense<0.000000e+00> : vector<8x128xf32>
    %34 = tpu.matmul %33, %32, %cst_20 {dimension_numbers = #tpu.dot_dimension_numbers<[1], [0], [0], [1], [0, 0, 1, 1], [], []>} : vector<8x32xbf16>, vector<32x128xbf16>, vector<8x128xf32> -> vector<8x128xf32>
    %c0_21 = arith.constant 0 : index
    %c384 = arith.constant 384 : index
    %35 = vector.load %arg4[%c0_21, %c384] : memref<1x3456xf32, #tpu.memory_space<vmem>>, vector<1x128xf32>
    %36 = vector.broadcast %35 : vector<1x128xf32> to vector<8x128xf32>
    %37 = arith.addf %34, %36 : vector<8x128xf32>
    %cst_22 = arith.constant 0.000000e+00 : f32
    %38 = vector.broadcast %cst_22 : f32 to vector<8x128xf32>
    %39 = arith.maximumf %37, %38 : vector<8x128xf32>
    %40 = arith.truncf %39 : vector<8x128xf32> to vector<8x128xbf16>
    %c0_23 = arith.constant 0 : index
    %c0_24 = arith.constant 0 : index
    %41 = vector.load %arg9[%c0_23, %c0_24] : memref<64x128xbf16, #tpu.memory_space<vmem>>, vector<64x128xbf16>
    %42 = vector.extract_strided_slice %40 {offsets = [0, 0], sizes = [8, 64], strides = [1, 1]} : vector<8x128xbf16> to vector<8x64xbf16>
    %cst_25 = arith.constant dense<0.000000e+00> : vector<8x128xf32>
    %43 = tpu.matmul %42, %41, %cst_25 {dimension_numbers = #tpu.dot_dimension_numbers<[1], [0], [0], [1], [0, 0, 1, 1], [], []>} : vector<8x64xbf16>, vector<64x128xbf16>, vector<8x128xf32> -> vector<8x128xf32>
    %c0_26 = arith.constant 0 : index
    %c512 = arith.constant 512 : index
    %44 = vector.load %arg4[%c0_26, %c512] : memref<1x3456xf32, #tpu.memory_space<vmem>>, vector<1x128xf32>
    %45 = vector.broadcast %44 : vector<1x128xf32> to vector<8x128xf32>
    %46 = arith.addf %43, %45 : vector<8x128xf32>
    %cst_27 = arith.constant 0.000000e+00 : f32
    %47 = vector.broadcast %cst_27 : f32 to vector<8x128xf32>
    %48 = arith.maximumf %46, %47 : vector<8x128xf32>
    %49 = arith.truncf %48 : vector<8x128xf32> to vector<8x128xbf16>
    %c0_28 = arith.constant 0 : index
    %c0_29 = arith.constant 0 : index
    %50 = vector.load %arg10[%c0_28, %c0_29] : memref<128x128xbf16, #tpu.memory_space<vmem>>, vector<128x128xbf16>
    %cst_30 = arith.constant dense<0.000000e+00> : vector<8x128xf32>
    %51 = tpu.matmul %49, %50, %cst_30 {dimension_numbers = #tpu.dot_dimension_numbers<[1], [0], [0], [1], [0, 0, 1, 1], [], []>} : vector<8x128xbf16>, vector<128x128xbf16>, vector<8x128xf32> -> vector<8x128xf32>
    %c0_31 = arith.constant 0 : index
    %c640 = arith.constant 640 : index
    %52 = vector.load %arg4[%c0_31, %c640] : memref<1x3456xf32, #tpu.memory_space<vmem>>, vector<1x128xf32>
    %53 = vector.broadcast %52 : vector<1x128xf32> to vector<8x128xf32>
    %54 = arith.addf %51, %53 : vector<8x128xf32>
    %cst_32 = arith.constant 0.000000e+00 : f32
    %55 = vector.broadcast %cst_32 : f32 to vector<8x128xf32>
    %56 = arith.maximumf %54, %55 : vector<8x128xf32>
    %57 = arith.truncf %56 : vector<8x128xf32> to vector<8x128xbf16>
    %c0_33 = arith.constant 0 : index
    %c0_34 = arith.constant 0 : index
    %58 = vector.load %arg11[%c0_33, %c0_34] : memref<128x256xbf16, #tpu.memory_space<vmem>>, vector<128x256xbf16>
    %cst_35 = arith.constant dense<0.000000e+00> : vector<8x256xf32>
    %59 = tpu.matmul %57, %58, %cst_35 {dimension_numbers = #tpu.dot_dimension_numbers<[1], [0], [0], [1], [0, 0, 1, 1], [], []>} : vector<8x128xbf16>, vector<128x256xbf16>, vector<8x256xf32> -> vector<8x256xf32>
    %c0_36 = arith.constant 0 : index
    %c768 = arith.constant 768 : index
    %60 = vector.load %arg4[%c0_36, %c768] : memref<1x3456xf32, #tpu.memory_space<vmem>>, vector<1x256xf32>
    %61 = vector.broadcast %60 : vector<1x256xf32> to vector<8x256xf32>
    %62 = arith.addf %59, %61 : vector<8x256xf32>
    %cst_37 = arith.constant 0.000000e+00 : f32
    %63 = vector.broadcast %cst_37 : f32 to vector<8x256xf32>
    %64 = arith.maximumf %62, %63 : vector<8x256xf32>
    %65 = arith.truncf %64 : vector<8x256xf32> to vector<8x256xbf16>
    %c0_38 = arith.constant 0 : index
    %c0_39 = arith.constant 0 : index
    %66 = vector.load %arg12[%c0_38, %c0_39] : memref<256x256xbf16, #tpu.memory_space<vmem>>, vector<256x256xbf16>
    %cst_40 = arith.constant dense<0.000000e+00> : vector<8x256xf32>
    %67 = tpu.matmul %65, %66, %cst_40 {dimension_numbers = #tpu.dot_dimension_numbers<[1], [0], [0], [1], [0, 0, 1, 1], [], []>} : vector<8x256xbf16>, vector<256x256xbf16>, vector<8x256xf32> -> vector<8x256xf32>
    %c0_41 = arith.constant 0 : index
    %c1024 = arith.constant 1024 : index
    %68 = vector.load %arg4[%c0_41, %c1024] : memref<1x3456xf32, #tpu.memory_space<vmem>>, vector<1x256xf32>
    %69 = vector.broadcast %68 : vector<1x256xf32> to vector<8x256xf32>
    %70 = arith.addf %67, %69 : vector<8x256xf32>
    %cst_42 = arith.constant 0.000000e+00 : f32
    %71 = vector.broadcast %cst_42 : f32 to vector<8x256xf32>
    %72 = arith.maximumf %70, %71 : vector<8x256xf32>
    %73 = arith.truncf %72 : vector<8x256xf32> to vector<8x256xbf16>
    %c0_i32_43 = arith.constant 0 : i32
    %74 = tpu.memref_slice %arg18[%c0_i32_43] : memref<2x!tpu.dma_semaphore, #tpu.memory_space<semaphore_mem>> -> memref<1x!tpu.dma_semaphore, #tpu.memory_space<semaphore_mem>>
    %75 = tpu.memref_squeeze %74 : memref<1x!tpu.dma_semaphore, #tpu.memory_space<semaphore_mem>> -> memref<!tpu.dma_semaphore, #tpu.memory_space<semaphore_mem>>
    tpu.wait_dma2 semaphore(%75 : memref<!tpu.dma_semaphore, #tpu.memory_space<semaphore_mem>>) src(%arg13 : memref<256x2048xbf16, #tpu.memory_space<any>>) dst(%arg16 : memref<256x2048xbf16, #tpu.memory_space<vmem>>)
    %c0_44 = arith.constant 0 : index
    %c0_45 = arith.constant 0 : index
    %76 = vector.load %arg16[%c0_44, %c0_45] : memref<256x2048xbf16, #tpu.memory_space<vmem>>, vector<256x2048xbf16>
    %cst_46 = arith.constant dense<0.000000e+00> : vector<8x2048xf32>
    %77 = tpu.matmul %73, %76, %cst_46 {dimension_numbers = #tpu.dot_dimension_numbers<[1], [0], [0], [1], [0, 0, 1, 1], [], []>} : vector<8x256xbf16>, vector<256x2048xbf16>, vector<8x2048xf32> -> vector<8x2048xf32>
    %c0_47 = arith.constant 0 : index
    %c1280 = arith.constant 1280 : index
    %78 = vector.load %arg4[%c0_47, %c1280] : memref<1x3456xf32, #tpu.memory_space<vmem>>, vector<1x2048xf32>
    %79 = vector.broadcast %78 : vector<1x2048xf32> to vector<8x2048xf32>
    %80 = arith.addf %77, %79 : vector<8x2048xf32>
    %cst_48 = arith.constant 0.000000e+00 : f32
    %81 = vector.broadcast %cst_48 : f32 to vector<8x2048xf32>
    %82 = arith.maximumf %80, %81 : vector<8x2048xf32>
    %83 = arith.truncf %82 : vector<8x2048xf32> to vector<8x2048xbf16>
    %c0_49 = arith.constant 0 : index
    %c0_50 = arith.constant 0 : index
    %84 = vector.load %arg3[%c0_49, %c0_50] : memref<8x8xbf16, #tpu.memory_space<vmem>>, vector<8x8xbf16>
    %cst_51 = arith.constant dense<0.000000e+00> : vector<8x2048xf32>
    %85 = tpu.matmul %84, %83, %cst_51 {dimension_numbers = #tpu.dot_dimension_numbers<[1], [0], [0], [1], [0, 0, 1, 1], [], []>} : vector<8x8xbf16>, vector<8x2048xbf16>, vector<8x2048xf32> -> vector<8x2048xf32>
    %86 = arith.truncf %85 : vector<8x2048xf32> to vector<8x2048xbf16>
    %c1_i32_52 = arith.constant 1 : i32
    %87 = tpu.memref_slice %arg18[%c1_i32_52] : memref<2x!tpu.dma_semaphore, #tpu.memory_space<semaphore_mem>> -> memref<1x!tpu.dma_semaphore, #tpu.memory_space<semaphore_mem>>
    %88 = tpu.memref_squeeze %87 : memref<1x!tpu.dma_semaphore, #tpu.memory_space<semaphore_mem>> -> memref<!tpu.dma_semaphore, #tpu.memory_space<semaphore_mem>>
    tpu.wait_dma2 semaphore(%88 : memref<!tpu.dma_semaphore, #tpu.memory_space<semaphore_mem>>) src(%arg14 : memref<16x2048xbf16, #tpu.memory_space<any>>) dst(%arg17 : memref<16x2048xbf16, #tpu.memory_space<vmem>>)
    %c0_53 = arith.constant 0 : index
    %c0_54 = arith.constant 0 : index
    %89 = vector.load %arg17[%c0_53, %c0_54] : memref<16x2048xbf16, #tpu.memory_space<vmem>>, vector<16x2048xbf16>
    %cst_55 = arith.constant dense<0.000000e+00> : vector<8x16xf32>
    %90 = tpu.matmul %86, %89, %cst_55 {dimension_numbers = #tpu.dot_dimension_numbers<[1], [1], [0], [0], [0, 0, 1, 0], [], []>} : vector<8x2048xbf16>, vector<16x2048xbf16>, vector<8x16xf32> -> vector<8x16xf32>
    %c0_56 = arith.constant 0 : index
    %c3328 = arith.constant 3328 : index
    %91 = vector.load %arg4[%c0_56, %c3328] : memref<1x3456xf32, #tpu.memory_space<vmem>>, vector<1x16xf32>
    %92 = vector.broadcast %91 : vector<1x16xf32> to vector<8x16xf32>
    %93 = arith.addf %90, %92 : vector<8x16xf32>
    %c0_57 = arith.constant 0 : index
    %c0_58 = arith.constant 0 : index
    %94 = vector.load %arg15[%c0_57, %c0_58] : memref<8x16xf32, #tpu.memory_space<vmem>>, vector<8x16xf32>
    tpu.vector_store %arg15[%c0_57, %c0_58], %93 {strides = array<i32>} : memref<8x16xf32, #tpu.memory_space<vmem>>, vector<8x16xf32>,
    return
  }
  func.func @transform_0(%arg0: i32) -> (i32, i32) {
    %c0_i32 = arith.constant 0 : i32
    %c0_i32_0 = arith.constant 0 : i32
    %c0_i32_1 = arith.constant 0 : i32
    return %c0_i32, %c0_i32_0 : i32, i32
  }
  func.func @transform_1(%arg0: i32) -> (i32, i32) {
    %c0_i32 = arith.constant 0 : i32
    %c0_i32_0 = arith.constant 0 : i32
    %c0_i32_1 = arith.constant 0 : i32
    return %c0_i32, %c0_i32_0 : i32, i32
  }
  func.func @transform_2(%arg0: i32) -> (i32, i32) {
    %c0_i32 = arith.constant 0 : i32
    %c0_i32_0 = arith.constant 0 : i32
    %c0_i32_1 = arith.constant 0 : i32
    return %c0_i32, %c0_i32_0 : i32, i32
  }
  func.func @transform_3(%arg0: i32) -> (i32, i32) {
    %c0_i32 = arith.constant 0 : i32
    %c0_i32_0 = arith.constant 0 : i32
    %c0_i32_1 = arith.constant 0 : i32
    return %c0_i32, %c0_i32_0 : i32, i32
  }
  func.func @transform_4(%arg0: i32) -> (i32, i32) {
    %c0_i32 = arith.constant 0 : i32
    %c0_i32_0 = arith.constant 0 : i32
    %c0_i32_1 = arith.constant 0 : i32
    return %c0_i32, %c0_i32_0 : i32, i32
  }
  func.func @transform_5(%arg0: i32) -> (i32, i32) {
    %c0_i32 = arith.constant 0 : i32
    %c0_i32_0 = arith.constant 0 : i32
    %c0_i32_1 = arith.constant 0 : i32
    return %c0_i32, %c0_i32_0 : i32, i32
  }
  func.func @transform_6(%arg0: i32) -> (i32, i32) {
    %c0_i32 = arith.constant 0 : i32
    %c0_i32_0 = arith.constant 0 : i32
    %c0_i32_1 = arith.constant 0 : i32
    return %c0_i32, %c0_i32_0 : i32, i32
  }
  func.func @transform_7(%arg0: i32) -> (i32, i32) {
    %c0_i32 = arith.constant 0 : i32
    %c0_i32_0 = arith.constant 0 : i32
    %c0_i32_1 = arith.constant 0 : i32
    return %c0_i32, %c0_i32_0 : i32, i32
  }
  func.func @transform_8(%arg0: i32) -> (i32, i32) {
    %c0_i32 = arith.constant 0 : i32
    %c0_i32_0 = arith.constant 0 : i32
    %c0_i32_1 = arith.constant 0 : i32
    return %c0_i32, %c0_i32_0 : i32, i32
  }
  func.func @transform_9(%arg0: i32) -> (i32, i32) {
    %c0_i32 = arith.constant 0 : i32
    %c0_i32_0 = arith.constant 0 : i32
    %c0_i32_1 = arith.constant 0 : i32
    return %c0_i32, %c0_i32_0 : i32, i32
  }
  func.func @transform_10(%arg0: i32) -> (i32, i32) {
    %c0_i32 = arith.constant 0 : i32
    %c0_i32_0 = arith.constant 0 : i32
    %c0_i32_1 = arith.constant 0 : i32
    return %c0_i32, %c0_i32_0 : i32, i32
  }
  func.func @transform_11(%arg0: i32) -> (i32, i32) {
    %c0_i32 = arith.constant 0 : i32
    %c0_i32_0 = arith.constant 0 : i32
    %c0_i32_1 = arith.constant 0 : i32
    return %c0_i32, %c0_i32_0 : i32, i32
  }
  func.func @transform_14(%arg0: i32) -> (i32, i32) {
    %c0_i32 = arith.constant 0 : i32
    %c0_i32_0 = arith.constant 0 : i32
    %c0_i32_1 = arith.constant 0 : i32
    return %c0_i32, %c0_i32_0 : i32, i32
  }
}

</mosaic_0001>

<llo_original>
// kernel: fenet_forward.1
$region0: #{fenet_forward.1}
  #allocation0 [shape = 'u32[]', space=smem, size = 0x4, offset = 0x4, fixed_abs, tag = 'smem constant byte address 0x4 - core index']
  #allocation1 [shape = 'u32[72,128]{1,0:T(1,128)}', space=vmem, size = 0x9000, scoped, tag = 'internal scratch']
  #allocation2 [shape = 'bf16[256,2048]{1,0:T(8,128)(2,1)}', space=vmem, size = 0x100000, scoped, tag = 'scratch operand']
  #allocation3 [shape = 'bf16[16,2048]{1,0:T(8,128)(2,1)}', space=vmem, size = 0x10000, scoped, tag = 'scratch operand']
  #allocation4 [shape = 's32[2]{0}', space=sflag, size = 0x8, scoped, tag = 'scratch operand']
  #allocation5 [shape = 's32[]', space=sflag, size = 0x4, offset = 0, fixed_abs, tag = 'sflag constant byte address 0x0 - dummy sync flag']
  #allocation6 [shape = 's32[]', space=sflag, size = 0x4, offset = 0, fixed_abs, tag = 'sflag constant byte address 0x0 - dummy sync flag']
  %s0 = inlined_call_operand.vmem [shape: bf16[512,32], index: 0, kind: input, shape index: {}]
  %s1 = inlined_call_operand.vmem [shape: bf16[8,512], index: 1, kind: input, shape index: {}]
  %s2 = inlined_call_operand.vmem [shape: bf16[8,8], index: 2, kind: input, shape index: {}]
  %s3 = inlined_call_operand.vmem [shape: f32[1,3456], index: 3, kind: input, shape index: {}]
  %s4 = inlined_call_operand.vmem [shape: bf16[32,128], index: 4, kind: input, shape index: {}]
  %s5 = inlined_call_operand.vmem [shape: bf16[16,128], index: 5, kind: input, shape index: {}]
  %s6 = inlined_call_operand.vmem [shape: bf16[16,128], index: 6, kind: input, shape index: {}]
  %s7 = inlined_call_operand.vmem [shape: bf16[32,128], index: 7, kind: input, shape index: {}]
  %s8 = inlined_call_operand.vmem [shape: bf16[64,128], index: 8, kind: input, shape index: {}]
  %s9 = inlined_call_operand.vmem [shape: bf16[128,128], index: 9, kind: input, shape index: {}]
  %s10 = inlined_call_operand.vmem [shape: bf16[128,256], index: 10, kind: input, shape index: {}]
  %s11 = inlined_call_operand.vmem [shape: bf16[256,256], index: 11, kind: input, shape index: {}]
  %s12 = inlined_call_operand.vmem [shape: bf16[256,2048], index: 12, kind: input, shape index: {}]
  %s13 = inlined_call_operand.vmem [shape: bf16[16,2048], index: 13, kind: input, shape index: {}]
  %s14 = inlined_call_operand.vmem [shape: f32[8,16], index: 14, kind: output, shape index: {}]
  %s15 = sld [smem:[#allocation0]]
  $region96: #{fenet_forward.1} parent=0
    _
  %s17 = ssub.s32 1, %s15
  %s18 = scalar_select 0, %s17, %s15
  // Predicated region
  $region2: #{fenet_forward.1} parent=0 // pred_check
    _
  $region3: #{fenet_forward.1} parent=0 // pred_check_branch
    %20 = sbr.rel (0) target = $region5
  $region4: #{fenet_forward.1} parent=0 // pred_region
    _
  $region5: #{fenet_forward.1} parent=0 // pred_fallthru
    _
  // Predicated region
  $region6: #{fenet_forward.1} parent=0 // pred_check
    _
  $region7: #{fenet_forward.1} parent=0 // pred_check_branch
    %22 = sbr.rel (0) target = $region9
  $region8: #{fenet_forward.1} parent=0 // pred_region
    _
  $region9: #{fenet_forward.1} parent=0 // pred_fallthru
    _
  // Predicated region
  $region10: #{fenet_forward.1} parent=0 // pred_check
    _
  $region11: #{fenet_forward.1} parent=0 // pred_check_branch
    %24 = sbr.rel (0) target = $region13
  $region12: #{fenet_forward.1} parent=0 // pred_region
    _
  $region13: #{fenet_forward.1} parent=0 // pred_fallthru
    _
  // Predicated region
  $region14: #{fenet_forward.1} parent=0 // pred_check
    _
  $region15: #{fenet_forward.1} parent=0 // pred_check_branch
    %26 = sbr.rel (0) target = $region17
  $region16: #{fenet_forward.1} parent=0 // pred_region
    _
  $region17: #{fenet_forward.1} parent=0 // pred_fallthru
    _
  // Predicated region
  $region18: #{fenet_forward.1} parent=0 // pred_check
    _
  $region19: #{fenet_forward.1} parent=0 // pred_check_branch
    %28 = sbr.rel (0) target = $region21
  $region20: #{fenet_forward.1} parent=0 // pred_region
    _
  $region21: #{fenet_forward.1} parent=0 // pred_fallthru
    _
  // Predicated region
  $region22: #{fenet_forward.1} parent=0 // pred_check
    _
  $region23: #{fenet_forward.1} parent=0 // pred_check_branch
    %30 = sbr.rel (0) target = $region25
  $region24: #{fenet_forward.1} parent=0 // pred_region
    _
  $region25: #{fenet_forward.1} parent=0 // pred_fallthru
    _
  // Predicated region
  $region26: #{fenet_forward.1} parent=0 // pred_check
    _
  $region27: #{fenet_forward.1} parent=0 // pred_check_branch
    %32 = sbr.rel (0) target = $region29
  $region28: #{fenet_forward.1} parent=0 // pred_region
    _
  $region29: #{fenet_forward.1} parent=0 // pred_fallthru
    _
  // Predicated region
  $region30: #{fenet_forward.1} parent=0 // pred_check
    _
  $region31: #{fenet_forward.1} parent=0 // pred_check_branch
    %34 = sbr.rel (0) target = $region33
  $region32: #{fenet_forward.1} parent=0 // pred_region
    _
  $region33: #{fenet_forward.1} parent=0 // pred_fallthru
    _
  // Predicated region
  $region34: #{fenet_forward.1} parent=0 // pred_check
    _
  $region35: #{fenet_forward.1} parent=0 // pred_check_branch
    %36 = sbr.rel (0) target = $region37
  $region36: #{fenet_forward.1} parent=0 // pred_region
    _
  $region37: #{fenet_forward.1} parent=0 // pred_fallthru
    _
  // Predicated region
  $region38: #{fenet_forward.1} parent=0 // pred_check
    _
  $region39: #{fenet_forward.1} parent=0 // pred_check_branch
    %38 = sbr.rel (0) target = $region41
  $region40: #{fenet_forward.1} parent=0 // pred_region
    _
  $region41: #{fenet_forward.1} parent=0 // pred_fallthru
    _
  // Predicated region
  $region42: #{fenet_forward.1} parent=0 // pred_check
    _
  $region43: #{fenet_forward.1} parent=0 // pred_check_branch
    %40 = sbr.rel (0) target = $region45
  $region44: #{fenet_forward.1} parent=0 // pred_region
    _
  $region45: #{fenet_forward.1} parent=0 // pred_fallthru
    _
  // Predicated region
  $region46: #{fenet_forward.1} parent=0 // pred_check
    _
  $region47: #{fenet_forward.1} parent=0 // pred_check_branch
    %42 = sbr.rel (0) target = $region49
  $region48: #{fenet_forward.1} parent=0 // pred_region
    _
  $region49: #{fenet_forward.1} parent=0 // pred_fallthru
    _
  // Predicated region
  $region50: #{fenet_forward.1} parent=0 // pred_check
    _
  $region51: #{fenet_forward.1} parent=0 // pred_check_branch
    %45 = sbr.rel (0) target = $region53
  $region52: #{fenet_forward.1} parent=0 // pred_region
    loop: start=0, step=1, limit=1
    $region54: #{fenet_forward.1} parent=52 // loop_pre_header
      _
    $region55: #{fenet_forward.1} parent=52 // loop_header
      %s47 = sphi 0, %s51
      %p48 = scmp.ge.s32.totalorder %s47, 1
      %s52 = sphi %s12, %s12
      %s53 = sphi [#allocation2], [#allocation2]
    $region56: #{fenet_forward.1} parent=52 // loop_header_branch
      %50 = sbr.rel (%p48) target = $region60
    $region57: #{fenet_forward.1} parent=52 // loop_body
      %v54 = vld [vmem:[%s52] sm:$0xff]
      %55 = vst [vmem:[%s53] sm:$0xff] %v54
      %v56 = vld [vmem:[%s52 + $0x8] sm:$0xff]
      %57 = vst [vmem:[%s53 + $0x8] sm:$0xff] %v56
      %v58 = vld [vmem:[%s52 + $0x10] sm:$0xff]
      %59 = vst [vmem:[%s53 + $0x10] sm:$0xff] %v58
      %v60 = vld [vmem:[%s52 + $0x18] sm:$0xff]
      %61 = vst [vmem:[%s53 + $0x18] sm:$0xff] %v60
      %v62 = vld [vmem:[%s52 + $0x20] sm:$0xff]
      %63 = vst [vmem:[%s53 + $0x20] sm:$0xff] %v62
      %v64 = vld [vmem:[%s52 + $0x28] sm:$0xff]
      %65 = vst [vmem:[%s53 + $0x28] sm:$0xff] %v64
      %v66 = vld [vmem:[%s52 + $0x30] sm:$0xff]
      %67 = vst [vmem:[%s53 + $0x30] sm:$0xff] %v66
      %v68 = vld [vmem:[%s52 + $0x38] sm:$0xff]
      %69 = vst [vmem:[%s53 + $0x38] sm:$0xff] %v68
      %v70 = vld [vmem:[%s52 + $0x40] sm:$0xff]
      %71 = vst [vmem:[%s53 + $0x40] sm:$0xff] %v70
      %v72 = vld [vmem:[%s52 + $0x48] sm:$0xff]
      %73 = vst [vmem:[%s53 + $0x48] sm:$0xff] %v72
      %v74 = vld [vmem:[%s52 + $0x50] sm:$0xff]
      %75 = vst [vmem:[%s53 + $0x50] sm:$0xff] %v74
      %v76 = vld [vmem:[%s52 + $0x58] sm:$0xff]
      %77 = vst [vmem:[%s53 + $0x58] sm:$0xff] %v76
      %v78 = vld [vmem:[%s52 + $0x60] sm:$0xff]
      %79 = vst [vmem:[%s53 + $0x60] sm:$0xff] %v78
      %v80 = vld [vmem:[%s52 + $0x68] sm:$0xff]
      %81 = vst [vmem:[%s53 + $0x68] sm:$0xff] %v80
      %v82 = vld [vmem:[%s52 + $0x70] sm:$0xff]
      %83 = vst [vmem:[%s53 + $0x70] sm:$0xff] %v82
      %v84 = vld [vmem:[%s52 + $0x78] sm:$0xff]
      %85 = vst [vmem:[%s53 + $0x78] sm:$0xff] %v84
      %v86 = vld [vmem:[%s52 + $0x80] sm:$0xff]
      %87 = vst [vmem:[%s53 + $0x80] sm:$0xff] %v86
      %v88 = vld [vmem:[%s52 + $0x88] sm:$0xff]
      %89 = vst [vmem:[%s53 + $0x88] sm:$0xff] %v88
      %v90 = vld [vmem:[%s52 + $0x90] sm:$0xff]
      %91 = vst [vmem:[%s53 + $0x90] sm:$0xff] %v90
      %v92 = vld [vmem:[%s52 + $0x98] sm:$0xff]
      %93 = vst [vmem:[%s53 + $0x98] sm:$0xff] %v92
      %v94 = vld [vmem:[%s52 + $0xa0] sm:$0xff]
      %95 = vst [vmem:[%s53 + $0xa0] sm:$0xff] %v94
      %v96 = vld [vmem:[%s52 + $0xa8] sm:$0xff]
      %97 = vst [vmem:[%s53 + $0xa8] sm:$0xff] %v96
      %v98 = vld [vmem:[%s52 + $0xb0] sm:$0xff]
      %99 = vst [vmem:[%s53 + $0xb0] sm:$0xff] %v98
      %v100 = vld [vmem:[%s52 + $0xb8] sm:$0xff]
      %101 = vst [vmem:[%s53 + $0xb8] sm:$0xff] %v100
      %v102 = vld [vmem:[%s52 + $0xc0] sm:$0xff]
      %103 = vst [vmem:[%s53 + $0xc0] sm:$0xff] %v102
      %v104 = vld [vmem:[%s52 + $0xc8] sm:$0xff]
      %105 = vst [vmem:[%s53 + $0xc8] sm:$0xff] %v104
      %v106 = vld [vmem:[%s52 + $0xd0] sm:$0xff]
      %107 = vst [vmem:[%s53 + $0xd0] sm:$0xff] %v106
      %v108 = vld [vmem:[%s52 + $0xd8] sm:$0xff]
      %109 = vst [vmem:[%s53 + $0xd8] sm:$0xff] %v108
      %v110 = vld [vmem:[%s52 + $0xe0] sm:$0xff]
      %111 = vst [vmem:[%s53 + $0xe0] sm:$0xff] %v110
      %v112 = vld [vmem:[%s52 + $0xe8] sm:$0xff]
      %113 = vst [vmem:[%s53 + $0xe8] sm:$0xff] %v112
      %v114 = vld [vmem:[%s52 + $0xf0] sm:$0xff]
      %115 = vst [vmem:[%s53 + $0xf0] sm:$0xff] %v114
      %v116 = vld [vmem:[%s52 + $0xf8] sm:$0xff]
      %117 = vst [vmem:[%s53 + $0xf8] sm:$0xff] %v116
      %v118 = vld [vmem:[%s52 + $0x100] sm:$0xff]
      %119 = vst [vmem:[%s53 + $0x100] sm:$0xff] %v118
      %v120 = vld [vmem:[%s52 + $0x108] sm:$0xff]
      %121 = vst [vmem:[%s53 + $0x108] sm:$0xff] %v120
      %v122 = vld [vmem:[%s52 + $0x110] sm:$0xff]
      %123 = vst [vmem:[%s53 + $0x110] sm:$0xff] %v122
      %v124 = vld [vmem:[%s52 + $0x118] sm:$0xff]
      %125 = vst [vmem:[%s53 + $0x118] sm:$0xff] %v124
      %v126 = vld [vmem:[%s52 + $0x120] sm:$0xff]
      %127 = vst [vmem:[%s53 + $0x120] sm:$0xff] %v126
      %v128 = vld [vmem:[%s52 + $0x128] sm:$0xff]
      %129 = vst [vmem:[%s53 + $0x128] sm:$0xff] %v128
      %v130 = vld [vmem:[%s52 + $0x130] sm:$0xff]
      %131 = vst [vmem:[%s53 + $0x130] sm:$0xff] %v130
      %v132 = vld [vmem:[%s52 + $0x138] sm:$0xff]
      %133 = vst [vmem:[%s53 + $0x138] sm:$0xff] %v132
      %v134 = vld [vmem:[%s52 + $0x140] sm:$0xff]
      %135 = vst [vmem:[%s53 + $0x140] sm:$0xff] %v134
      %v136 = vld [vmem:[%s52 + $0x148] sm:$0xff]
      %137 = vst [vmem:[%s53 + $0x148] sm:$0xff] %v136
      %v138 = vld [vmem:[%s52 + $0x150] sm:$0xff]
      %139 = vst [vmem:[%s53 + $0x150] sm:$0xff] %v138
      %v140 = vld [vmem:[%s52 + $0x158] sm:$0xff]
      %141 = vst [vmem:[%s53 + $0x158] sm:$0xff] %v140
      %v142 = vld [vmem:[%s52 + $0x160] sm:$0xff]
      %143 = vst [vmem:[%s53 + $0x160] sm:$0xff] %v142
      %v144 = vld [vmem:[%s52 + $0x168] sm:$0xff]
      %145 = vst [vmem:[%s53 + $0x168] sm:$0xff] %v144
      %v146 = vld [vmem:[%s52 + $0x170] sm:$0xff]
      %147 = vst [vmem:[%s53 + $0x170] sm:$0xff] %v146
      %v148 = vld [vmem:[%s52 + $0x178] sm:$0xff]
      %149 = vst [vmem:[%s53 + $0x178] sm:$0xff] %v148
      %v150 = vld [vmem:[%s52 + $0x180] sm:$0xff]
      %151 = vst [vmem:[%s53 + $0x180] sm:$0xff] %v150
      %v152 = vld [vmem:[%s52 + $0x188] sm:$0xff]
      %153 = vst [vmem:[%s53 + $0x188] sm:$0xff] %v152
      %v154 = vld [vmem:[%s52 + $0x190] sm:$0xff]
      %155 = vst [vmem:[%s53 + $0x190] sm:$0xff] %v154
      %v156 = vld [vmem:[%s52 + $0x198] sm:$0xff]
      %157 = vst [vmem:[%s53 + $0x198] sm:$0xff] %v156
      %v158 = vld [vmem:[%s52 + $0x1a0] sm:$0xff]
      %159 = vst [vmem:[%s53 + $0x1a0] sm:$0xff] %v158
      %v160 = vld [vmem:[%s52 + $0x1a8] sm:$0xff]
      %161 = vst [vmem:[%s53 + $0x1a8] sm:$0xff] %v160
      %v162 = vld [vmem:[%s52 + $0x1b0] sm:$0xff]
      %163 = vst [vmem:[%s53 + $0x1b0] sm:$0xff] %v162
      %v164 = vld [vmem:[%s52 + $0x1b8] sm:$0xff]
      %165 = vst [vmem:[%s53 + $0x1b8] sm:$0xff] %v164
      %v166 = vld [vmem:[%s52 + $0x1c0] sm:$0xff]
      %167 = vst [vmem:[%s53 + $0x1c0] sm:$0xff] %v166
      %v168 = vld [vmem:[%s52 + $0x1c8] sm:$0xff]
      %169 = vst [vmem:[%s53 + $0x1c8] sm:$0xff] %v168
      %v170 = vld [vmem:[%s52 + $0x1d0] sm:$0xff]
      %171 = vst [vmem:[%s53 + $0x1d0] sm:$0xff] %v170
      %v172 = vld [vmem:[%s52 + $0x1d8] sm:$0xff]
      %173 = vst [vmem:[%s53 + $0x1d8] sm:$0xff] %v172
      %v174 = vld [vmem:[%s52 + $0x1e0] sm:$0xff]
      %175 = vst [vmem:[%s53 + $0x1e0] sm:$0xff] %v174
      %v176 = vld [vmem:[%s52 + $0x1e8] sm:$0xff]
      %177 = vst [vmem:[%s53 + $0x1e8] sm:$0xff] %v176
      %v178 = vld [vmem:[%s52 + $0x1f0] sm:$0xff]
      %179 = vst [vmem:[%s53 + $0x1f0] sm:$0xff] %v178
      %v180 = vld [vmem:[%s52 + $0x1f8] sm:$0xff]
      %181 = vst [vmem:[%s53 + $0x1f8] sm:$0xff] %v180
      %v182 = vld [vmem:[%s52 + $0x200] sm:$0xff]
      %183 = vst [vmem:[%s53 + $0x200] sm:$0xff] %v182
      %v184 = vld [vmem:[%s52 + $0x208] sm:$0xff]
      %185 = vst [vmem:[%s53 + $0x208] sm:$0xff] %v184
      %v186 = vld [vmem:[%s52 + $0x210] sm:$0xff]
      %187 = vst [vmem:[%s53 + $0x210] sm:$0xff] %v186
      %v188 = vld [vmem:[%s52 + $0x218] sm:$0xff]
      %189 = vst [vmem:[%s53 + $0x218] sm:$0xff] %v188
      %v190 = vld [vmem:[%s52 + $0x220] sm:$0xff]
      %191 = vst [vmem:[%s53 + $0x220] sm:$0xff] %v190
      %v192 = vld [vmem:[%s52 + $0x228] sm:$0xff]
      %193 = vst [vmem:[%s53 + $0x228] sm:$0xff] %v192
      %v194 = vld [vmem:[%s52 + $0x230] sm:$0xff]
      %195 = vst [vmem:[%s53 + $0x230] sm:$0xff] %v194
      %v196 = vld [vmem:[%s52 + $0x238] sm:$0xff]
      %197 = vst [vmem:[%s53 + $0x238] sm:$0xff] %v196
      %v198 = vld [vmem:[%s52 + $0x240] sm:$0xff]
      %199 = vst [vmem:[%s53 + $0x240] sm:$0xff] %v198
      %v200 = vld [vmem:[%s52 + $0x248] sm:$0xff]
      %201 = vst [vmem:[%s53 + $0x248] sm:$0xff] %v200
      %v202 = vld [vmem:[%s52 + $0x250] sm:$0xff]
      %203 = vst [vmem:[%s53 + $0x250] sm:$0xff] %v202
      %v204 = vld [vmem:[%s52 + $0x258] sm:$0xff]
      %205 = vst [vmem:[%s53 + $0x258] sm:$0xff] %v204
      %v206 = vld [vmem:[%s52 + $0x260] sm:$0xff]
      %207 = vst [vmem:[%s53 + $0x260] sm:$0xff] %v206
      %v208 = vld [vmem:[%s52 + $0x268] sm:$0xff]
      %209 = vst [vmem:[%s53 + $0x268] sm:$0xff] %v208
      %v210 = vld [vmem:[%s52 + $0x270] sm:$0xff]
      %211 = vst [vmem:[%s53 + $0x270] sm:$0xff] %v210
      %v212 = vld [vmem:[%s52 + $0x278] sm:$0xff]
      %213 = vst [vmem:[%s53 + $0x278] sm:$0xff] %v212
      %v214 = vld [vmem:[%s52 + $0x280] sm:$0xff]
      %215 = vst [vmem:[%s53 + $0x280] sm:$0xff] %v214
      %v216 = vld [vmem:[%s52 + $0x288] sm:$0xff]
      %217 = vst [vmem:[%s53 + $0x288] sm:$0xff] %v216
      %v218 = vld [vmem:[%s52 + $0x290] sm:$0xff]
      %219 = vst [vmem:[%s53 + $0x290] sm:$0xff] %v218
      %v220 = vld [vmem:[%s52 + $0x298] sm:$0xff]
      %221 = vst [vmem:[%s53 + $0x298] sm:$0xff] %v220
      %v222 = vld [vmem:[%s52 + $0x2a0] sm:$0xff]
      %223 = vst [vmem:[%s53 + $0x2a0] sm:$0xff] %v222
      %v224 = vld [vmem:[%s52 + $0x2a8] sm:$0xff]
      %225 = vst [vmem:[%s53 + $0x2a8] sm:$0xff] %v224
      %v226 = vld [vmem:[%s52 + $0x2b0] sm:$0xff]
      %227 = vst [vmem:[%s53 + $0x2b0] sm:$0xff] %v226
      %v228 = vld [vmem:[%s52 + $0x2b8] sm:$0xff]
      %229 = vst [vmem:[%s53 + $0x2b8] sm:$0xff] %v228
      %v230 = vld [vmem:[%s52 + $0x2c0] sm:$0xff]
      %231 = vst [vmem:[%s53 + $0x2c0] sm:$0xff] %v230
      %v232 = vld [vmem:[%s52 + $0x2c8] sm:$0xff]
      %233 = vst [vmem:[%s53 + $0x2c8] sm:$0xff] %v232
      %v234 = vld [vmem:[%s52 + $0x2d0] sm:$0xff]
      %235 = vst [vmem:[%s53 + $0x2d0] sm:$0xff] %v234
      %v236 = vld [vmem:[%s52 + $0x2d8] sm:$0xff]
      %237 = vst [vmem:[%s53 + $0x2d8] sm:$0xff] %v236
      %v238 = vld [vmem:[%s52 + $0x2e0] sm:$0xff]
      %239 = vst [vmem:[%s53 + $0x2e0] sm:$0xff] %v238
      %v240 = vld [vmem:[%s52 + $0x2e8] sm:$0xff]
      %241 = vst [vmem:[%s53 + $0x2e8] sm:$0xff] %v240
      %v242 = vld [vmem:[%s52 + $0x2f0] sm:$0xff]
      %243 = vst [vmem:[%s53 + $0x2f0] sm:$0xff] %v242
      %v244 = vld [vmem:[%s52 + $0x2f8] sm:$0xff]
      %245 = vst [vmem:[%s53 + $0x2f8] sm:$0xff] %v244
      %v246 = vld [vmem:[%s52 + $0x300] sm:$0xff]
      %247 = vst [vmem:[%s53 + $0x300] sm:$0xff] %v246
      %v248 = vld [vmem:[%s52 + $0x308] sm:$0xff]
      %249 = vst [vmem:[%s53 + $0x308] sm:$0xff] %v248
      %v250 = vld [vmem:[%s52 + $0x310] sm:$0xff]
      %251 = vst [vmem:[%s53 + $0x310] sm:$0xff] %v250
      %v252 = vld [vmem:[%s52 + $0x318] sm:$0xff]
      %253 = vst [vmem:[%s53 + $0x318] sm:$0xff] %v252
      %v254 = vld [vmem:[%s52 + $0x320] sm:$0xff]
      %255 = vst [vmem:[%s53 + $0x320] sm:$0xff] %v254
      %v256 = vld [vmem:[%s52 + $0x328] sm:$0xff]
      %257 = vst [vmem:[%s53 + $0x328] sm:$0xff] %v256
      %v258 = vld [vmem:[%s52 + $0x330] sm:$0xff]
      %259 = vst [vmem:[%s53 + $0x330] sm:$0xff] %v258
      %v260 = vld [vmem:[%s52 + $0x338] sm:$0xff]
      %261 = vst [vmem:[%s53 + $0x338] sm:$0xff] %v260
      %v262 = vld [vmem:[%s52 + $0x340] sm:$0xff]
      %263 = vst [vmem:[%s53 + $0x340] sm:$0xff] %v262
      %v264 = vld [vmem:[%s52 + $0x348] sm:$0xff]
      %265 = vst [vmem:[%s53 + $0x348] sm:$0xff] %v264
      %v266 = vld [vmem:[%s52 + $0x350] sm:$0xff]
      %267 = vst [vmem:[%s53 + $0x350] sm:$0xff] %v266
      %v268 = vld [vmem:[%s52 + $0x358] sm:$0xff]
      %269 = vst [vmem:[%s53 + $0x358] sm:$0xff] %v268
      %v270 = vld [vmem:[%s52 + $0x360] sm:$0xff]
      %271 = vst [vmem:[%s53 + $0x360] sm:$0xff] %v270
      %v272 = vld [vmem:[%s52 + $0x368] sm:$0xff]
      %273 = vst [vmem:[%s53 + $0x368] sm:$0xff] %v272
      %v274 = vld [vmem:[%s52 + $0x370] sm:$0xff]
      %275 = vst [vmem:[%s53 + $0x370] sm:$0xff] %v274
      %v276 = vld [vmem:[%s52 + $0x378] sm:$0xff]
      %277 = vst [vmem:[%s53 + $0x378] sm:$0xff] %v276
      %v278 = vld [vmem:[%s52 + $0x380] sm:$0xff]
      %279 = vst [vmem:[%s53 + $0x380] sm:$0xff] %v278
      %v280 = vld [vmem:[%s52 + $0x388] sm:$0xff]
      %281 = vst [vmem:[%s53 + $0x388] sm:$0xff] %v280
      %v282 = vld [vmem:[%s52 + $0x390] sm:$0xff]
      %283 = vst [vmem:[%s53 + $0x390] sm:$0xff] %v282
      %v284 = vld [vmem:[%s52 + $0x398] sm:$0xff]
      %285 = vst [vmem:[%s53 + $0x398] sm:$0xff] %v284
      %v286 = vld [vmem:[%s52 + $0x3a0] sm:$0xff]
      %287 = vst [vmem:[%s53 + $0x3a0] sm:$0xff] %v286
      %v288 = vld [vmem:[%s52 + $0x3a8] sm:$0xff]
      %289 = vst [vmem:[%s53 + $0x3a8] sm:$0xff] %v288
      %v290 = vld [vmem:[%s52 + $0x3b0] sm:$0xff]
      %291 = vst [vmem:[%s53 + $0x3b0] sm:$0xff] %v290
      %v292 = vld [vmem:[%s52 + $0x3b8] sm:$0xff]
      %293 = vst [vmem:[%s53 + $0x3b8] sm:$0xff] %v292
      %v294 = vld [vmem:[%s52 + $0x3c0] sm:$0xff]
      %295 = vst [vmem:[%s53 + $0x3c0] sm:$0xff] %v294
      %v296 = vld [vmem:[%s52 + $0x3c8] sm:$0xff]
      %297 = vst [vmem:[%s53 + $0x3c8] sm:$0xff] %v296
      %v298 = vld [vmem:[%s52 + $0x3d0] sm:$0xff]
      %299 = vst [vmem:[%s53 + $0x3d0] sm:$0xff] %v298
      %v300 = vld [vmem:[%s52 + $0x3d8] sm:$0xff]
      %301 = vst [vmem:[%s53 + $0x3d8] sm:$0xff] %v300
      %v302 = vld [vmem:[%s52 + $0x3e0] sm:$0xff]
      %303 = vst [vmem:[%s53 + $0x3e0] sm:$0xff] %v302
      %v304 = vld [vmem:[%s52 + $0x3e8] sm:$0xff]
      %305 = vst [vmem:[%s53 + $0x3e8] sm:$0xff] %v304
      %v306 = vld [vmem:[%s52 + $0x3f0] sm:$0xff]
      %307 = vst [vmem:[%s53 + $0x3f0] sm:$0xff] %v306
      %v308 = vld [vmem:[%s52 + $0x3f8] sm:$0xff]
      %309 = vst [vmem:[%s53 + $0x3f8] sm:$0xff] %v308
      %v310 = vld [vmem:[%s52 + $0x400] sm:$0xff]
      %311 = vst [vmem:[%s53 + $0x400] sm:$0xff] %v310
      %v312 = vld [vmem:[%s52 + $0x408] sm:$0xff]
      %313 = vst [vmem:[%s53 + $0x408] sm:$0xff] %v312
      %v314 = vld [vmem:[%s52 + $0x410] sm:$0xff]
      %315 = vst [vmem:[%s53 + $0x410] sm:$0xff] %v314
      %v316 = vld [vmem:[%s52 + $0x418] sm:$0xff]
      %317 = vst [vmem:[%s53 + $0x418] sm:$0xff] %v316
      %v318 = vld [vmem:[%s52 + $0x420] sm:$0xff]
      %319 = vst [vmem:[%s53 + $0x420] sm:$0xff] %v318
      %v320 = vld [vmem:[%s52 + $0x428] sm:$0xff]
      %321 = vst [vmem:[%s53 + $0x428] sm:$0xff] %v320
      %v322 = vld [vmem:[%s52 + $0x430] sm:$0xff]
      %323 = vst [vmem:[%s53 + $0x430] sm:$0xff] %v322
      %v324 = vld [vmem:[%s52 + $0x438] sm:$0xff]
      %325 = vst [vmem:[%s53 + $0x438] sm:$0xff] %v324
      %v326 = vld [vmem:[%s52 + $0x440] sm:$0xff]
      %327 = vst [vmem:[%s53 + $0x440] sm:$0xff] %v326
      %v328 = vld [vmem:[%s52 + $0x448] sm:$0xff]
      %329 = vst [vmem:[%s53 + $0x448] sm:$0xff] %v328
      %v330 = vld [vmem:[%s52 + $0x450] sm:$0xff]
      %331 = vst [vmem:[%s53 + $0x450] sm:$0xff] %v330
      %v332 = vld [vmem:[%s52 + $0x458] sm:$0xff]
      %333 = vst [vmem:[%s53 + $0x458] sm:$0xff] %v332
      %v334 = vld [vmem:[%s52 + $0x460] sm:$0xff]
      %335 = vst [vmem:[%s53 + $0x460] sm:$0xff] %v334
      %v336 = vld [vmem:[%s52 + $0x468] sm:$0xff]
      %337 = vst [vmem:[%s53 + $0x468] sm:$0xff] %v336
      %v338 = vld [vmem:[%s52 + $0x470] sm:$0xff]
      %339 = vst [vmem:[%s53 + $0x470] sm:$0xff] %v338
      %v340 = vld [vmem:[%s52 + $0x478] sm:$0xff]
      %341 = vst [vmem:[%s53 + $0x478] sm:$0xff] %v340
      %v342 = vld [vmem:[%s52 + $0x480] sm:$0xff]
      %343 = vst [vmem:[%s53 + $0x480] sm:$0xff] %v342
      %v344 = vld [vmem:[%s52 + $0x488] sm:$0xff]
      %345 = vst [vmem:[%s53 + $0x488] sm:$0xff] %v344
      %v346 = vld [vmem:[%s52 + $0x490] sm:$0xff]
      %347 = vst [vmem:[%s53 + $0x490] sm:$0xff] %v346
      %v348 = vld [vmem:[%s52 + $0x498] sm:$0xff]
      %349 = vst [vmem:[%s53 + $0x498] sm:$0xff] %v348
      %v350 = vld [vmem:[%s52 + $0x4a0] sm:$0xff]
      %351 = vst [vmem:[%s53 + $0x4a0] sm:$0xff] %v350
      %v352 = vld [vmem:[%s52 + $0x4a8] sm:$0xff]
      %353 = vst [vmem:[%s53 + $0x4a8] sm:$0xff] %v352
      %v354 = vld [vmem:[%s52 + $0x4b0] sm:$0xff]
      %355 = vst [vmem:[%s53 + $0x4b0] sm:$0xff] %v354
      %v356 = vld [vmem:[%s52 + $0x4b8] sm:$0xff]
      %357 = vst [vmem:[%s53 + $0x4b8] sm:$0xff] %v356
      %v358 = vld [vmem:[%s52 + $0x4c0] sm:$0xff]
      %359 = vst [vmem:[%s53 + $0x4c0] sm:$0xff] %v358
      %v360 = vld [vmem:[%s52 + $0x4c8] sm:$0xff]
      %361 = vst [vmem:[%s53 + $0x4c8] sm:$0xff] %v360
      %v362 = vld [vmem:[%s52 + $0x4d0] sm:$0xff]
      %363 = vst [vmem:[%s53 + $0x4d0] sm:$0xff] %v362
      %v364 = vld [vmem:[%s52 + $0x4d8] sm:$0xff]
      %365 = vst [vmem:[%s53 + $0x4d8] sm:$0xff] %v364
      %v366 = vld [vmem:[%s52 + $0x4e0] sm:$0xff]
      %367 = vst [vmem:[%s53 + $0x4e0] sm:$0xff] %v366
      %v368 = vld [vmem:[%s52 + $0x4e8] sm:$0xff]
      %369 = vst [vmem:[%s53 + $0x4e8] sm:$0xff] %v368
      %v370 = vld [vmem:[%s52 + $0x4f0] sm:$0xff]
      %371 = vst [vmem:[%s53 + $0x4f0] sm:$0xff] %v370
      %v372 = vld [vmem:[%s52 + $0x4f8] sm:$0xff]
      %373 = vst [vmem:[%s53 + $0x4f8] sm:$0xff] %v372
      %v374 = vld [vmem:[%s52 + $0x500] sm:$0xff]
      %375 = vst [vmem:[%s53 + $0x500] sm:$0xff] %v374
      %v376 = vld [vmem:[%s52 + $0x508] sm:$0xff]
      %377 = vst [vmem:[%s53 + $0x508] sm:$0xff] %v376
      %v378 = vld [vmem:[%s52 + $0x510] sm:$0xff]
      %379 = vst [vmem:[%s53 + $0x510] sm:$0xff] %v378
      %v380 = vld [vmem:[%s52 + $0x518] sm:$0xff]
      %381 = vst [vmem:[%s53 + $0x518] sm:$0xff] %v380
      %v382 = vld [vmem:[%s52 + $0x520] sm:$0xff]
      %383 = vst [vmem:[%s53 + $0x520] sm:$0xff] %v382
      %v384 = vld [vmem:[%s52 + $0x528] sm:$0xff]
      %385 = vst [vmem:[%s53 + $0x528] sm:$0xff] %v384
      %v386 = vld [vmem:[%s52 + $0x530] sm:$0xff]
      %387 = vst [vmem:[%s53 + $0x530] sm:$0xff] %v386
      %v388 = vld [vmem:[%s52 + $0x538] sm:$0xff]
      %389 = vst [vmem:[%s53 + $0x538] sm:$0xff] %v388
      %v390 = vld [vmem:[%s52 + $0x540] sm:$0xff]
      %391 = vst [vmem:[%s53 + $0x540] sm:$0xff] %v390
      %v392 = vld [vmem:[%s52 + $0x548] sm:$0xff]
      %393 = vst [vmem:[%s53 + $0x548] sm:$0xff] %v392
      %v394 = vld [vmem:[%s52 + $0x550] sm:$0xff]
      %395 = vst [vmem:[%s53 + $0x550] sm:$0xff] %v394
      %v396 = vld [vmem:[%s52 + $0x558] sm:$0xff]
      %397 = vst [vmem:[%s53 + $0x558] sm:$0xff] %v396
      %v398 = vld [vmem:[%s52 + $0x560] sm:$0xff]
      %399 = vst [vmem:[%s53 + $0x560] sm:$0xff] %v398
      %v400 = vld [vmem:[%s52 + $0x568] sm:$0xff]
      %401 = vst [vmem:[%s53 + $0x568] sm:$0xff] %v400
      %v402 = vld [vmem:[%s52 + $0x570] sm:$0xff]
      %403 = vst [vmem:[%s53 + $0x570] sm:$0xff] %v402
      %v404 = vld [vmem:[%s52 + $0x578] sm:$0xff]
      %405 = vst [vmem:[%s53 + $0x578] sm:$0xff] %v404
      %v406 = vld [vmem:[%s52 + $0x580] sm:$0xff]
      %407 = vst [vmem:[%s53 + $0x580] sm:$0xff] %v406
      %v408 = vld [vmem:[%s52 + $0x588] sm:$0xff]
      %409 = vst [vmem:[%s53 + $0x588] sm:$0xff] %v408
      %v410 = vld [vmem:[%s52 + $0x590] sm:$0xff]
      %411 = vst [vmem:[%s53 + $0x590] sm:$0xff] %v410
      %v412 = vld [vmem:[%s52 + $0x598] sm:$0xff]
      %413 = vst [vmem:[%s53 + $0x598] sm:$0xff] %v412
      %v414 = vld [vmem:[%s52 + $0x5a0] sm:$0xff]
      %415 = vst [vmem:[%s53 + $0x5a0] sm:$0xff] %v414
      %v416 = vld [vmem:[%s52 + $0x5a8] sm:$0xff]
      %417 = vst [vmem:[%s53 + $0x5a8] sm:$0xff] %v416
      %v418 = vld [vmem:[%s52 + $0x5b0] sm:$0xff]
      %419 = vst [vmem:[%s53 + $0x5b0] sm:$0xff] %v418
      %v420 = vld [vmem:[%s52 + $0x5b8] sm:$0xff]
      %421 = vst [vmem:[%s53 + $0x5b8] sm:$0xff] %v420
      %v422 = vld [vmem:[%s52 + $0x5c0] sm:$0xff]
      %423 = vst [vmem:[%s53 + $0x5c0] sm:$0xff] %v422
      %v424 = vld [vmem:[%s52 + $0x5c8] sm:$0xff]
      %425 = vst [vmem:[%s53 + $0x5c8] sm:$0xff] %v424
      %v426 = vld [vmem:[%s52 + $0x5d0] sm:$0xff]
      %427 = vst [vmem:[%s53 + $0x5d0] sm:$0xff] %v426
      %v428 = vld [vmem:[%s52 + $0x5d8] sm:$0xff]
      %429 = vst [vmem:[%s53 + $0x5d8] sm:$0xff] %v428
      %v430 = vld [vmem:[%s52 + $0x5e0] sm:$0xff]
      %431 = vst [vmem:[%s53 + $0x5e0] sm:$0xff] %v430
      %v432 = vld [vmem:[%s52 + $0x5e8] sm:$0xff]
      %433 = vst [vmem:[%s53 + $0x5e8] sm:$0xff] %v432
      %v434 = vld [vmem:[%s52 + $0x5f0] sm:$0xff]
      %435 = vst [vmem:[%s53 + $0x5f0] sm:$0xff] %v434
      %v436 = vld [vmem:[%s52 + $0x5f8] sm:$0xff]
      %437 = vst [vmem:[%s53 + $0x5f8] sm:$0xff] %v436
      %v438 = vld [vmem:[%s52 + $0x600] sm:$0xff]
      %439 = vst [vmem:[%s53 + $0x600] sm:$0xff] %v438
      %v440 = vld [vmem:[%s52 + $0x608] sm:$0xff]
      %441 = vst [vmem:[%s53 + $0x608] sm:$0xff] %v440
      %v442 = vld [vmem:[%s52 + $0x610] sm:$0xff]
      %443 = vst [vmem:[%s53 + $0x610] sm:$0xff] %v442
      %v444 = vld [vmem:[%s52 + $0x618] sm:$0xff]
      %445 = vst [vmem:[%s53 + $0x618] sm:$0xff] %v444
      %v446 = vld [vmem:[%s52 + $0x620] sm:$0xff]
      %447 = vst [vmem:[%s53 + $0x620] sm:$0xff] %v446
      %v448 = vld [vmem:[%s52 + $0x628] sm:$0xff]
      %449 = vst [vmem:[%s53 + $0x628] sm:$0xff] %v448
      %v450 = vld [vmem:[%s52 + $0x630] sm:$0xff]
      %451 = vst [vmem:[%s53 + $0x630] sm:$0xff] %v450
      %v452 = vld [vmem:[%s52 + $0x638] sm:$0xff]
      %453 = vst [vmem:[%s53 + $0x638] sm:$0xff] %v452
      %v454 = vld [vmem:[%s52 + $0x640] sm:$0xff]
      %455 = vst [vmem:[%s53 + $0x640] sm:$0xff] %v454
      %v456 = vld [vmem:[%s52 + $0x648] sm:$0xff]
      %457 = vst [vmem:[%s53 + $0x648] sm:$0xff] %v456
      %v458 = vld [vmem:[%s52 + $0x650] sm:$0xff]
      %459 = vst [vmem:[%s53 + $0x650] sm:$0xff] %v458
      %v460 = vld [vmem:[%s52 + $0x658] sm:$0xff]
      %461 = vst [vmem:[%s53 + $0x658] sm:$0xff] %v460
      %v462 = vld [vmem:[%s52 + $0x660] sm:$0xff]
      %463 = vst [vmem:[%s53 + $0x660] sm:$0xff] %v462
      %v464 = vld [vmem:[%s52 + $0x668] sm:$0xff]
      %465 = vst [vmem:[%s53 + $0x668] sm:$0xff] %v464
      %v466 = vld [vmem:[%s52 + $0x670] sm:$0xff]
      %467 = vst [vmem:[%s53 + $0x670] sm:$0xff] %v466
      %v468 = vld [vmem:[%s52 + $0x678] sm:$0xff]
      %469 = vst [vmem:[%s53 + $0x678] sm:$0xff] %v468
      %v470 = vld [vmem:[%s52 + $0x680] sm:$0xff]
      %471 = vst [vmem:[%s53 + $0x680] sm:$0xff] %v470
      %v472 = vld [vmem:[%s52 + $0x688] sm:$0xff]
      %473 = vst [vmem:[%s53 + $0x688] sm:$0xff] %v472
      %v474 = vld [vmem:[%s52 + $0x690] sm:$0xff]
      %475 = vst [vmem:[%s53 + $0x690] sm:$0xff] %v474
      %v476 = vld [vmem:[%s52 + $0x698] sm:$0xff]
      %477 = vst [vmem:[%s53 + $0x698] sm:$0xff] %v476
      %v478 = vld [vmem:[%s52 + $0x6a0] sm:$0xff]
      %479 = vst [vmem:[%s53 + $0x6a0] sm:$0xff] %v478
      %v480 = vld [vmem:[%s52 + $0x6a8] sm:$0xff]
      %481 = vst [vmem:[%s53 + $0x6a8] sm:$0xff] %v480
      %v482 = vld [vmem:[%s52 + $0x6b0] sm:$0xff]
      %483 = vst [vmem:[%s53 + $0x6b0] sm:$0xff] %v482
      %v484 = vld [vmem:[%s52 + $0x6b8] sm:$0xff]
      %485 = vst [vmem:[%s53 + $0x6b8] sm:$0xff] %v484
      %v486 = vld [vmem:[%s52 + $0x6c0] sm:$0xff]
      %487 = vst [vmem:[%s53 + $0x6c0] sm:$0xff] %v486
      %v488 = vld [vmem:[%s52 + $0x6c8] sm:$0xff]
      %489 = vst [vmem:[%s53 + $0x6c8] sm:$0xff] %v488
      %v490 = vld [vmem:[%s52 + $0x6d0] sm:$0xff]
      %491 = vst [vmem:[%s53 + $0x6d0] sm:$0xff] %v490
      %v492 = vld [vmem:[%s52 + $0x6d8] sm:$0xff]
      %493 = vst [vmem:[%s53 + $0x6d8] sm:$0xff] %v492
      %v494 = vld [vmem:[%s52 + $0x6e0] sm:$0xff]
      %495 = vst [vmem:[%s53 + $0x6e0] sm:$0xff] %v494
      %v496 = vld [vmem:[%s52 + $0x6e8] sm:$0xff]
      %497 = vst [vmem:[%s53 + $0x6e8] sm:$0xff] %v496
      %v498 = vld [vmem:[%s52 + $0x6f0] sm:$0xff]
      %499 = vst [vmem:[%s53 + $0x6f0] sm:$0xff] %v498
      %v500 = vld [vmem:[%s52 + $0x6f8] sm:$0xff]
      %501 = vst [vmem:[%s53 + $0x6f8] sm:$0xff] %v500
      %v502 = vld [vmem:[%s52 + $0x700] sm:$0xff]
      %503 = vst [vmem:[%s53 + $0x700] sm:$0xff] %v502
      %v504 = vld [vmem:[%s52 + $0x708] sm:$0xff]
      %505 = vst [vmem:[%s53 + $0x708] sm:$0xff] %v504
      %v506 = vld [vmem:[%s52 + $0x710] sm:$0xff]
      %507 = vst [vmem:[%s53 + $0x710] sm:$0xff] %v506
      %v508 = vld [vmem:[%s52 + $0x718] sm:$0xff]
      %509 = vst [vmem:[%s53 + $0x718] sm:$0xff] %v508
      %v510 = vld [vmem:[%s52 + $0x720] sm:$0xff]
      %511 = vst [vmem:[%s53 + $0x720] sm:$0xff] %v510
      %v512 = vld [vmem:[%s52 + $0x728] sm:$0xff]
      %513 = vst [vmem:[%s53 + $0x728] sm:$0xff] %v512
      %v514 = vld [vmem:[%s52 + $0x730] sm:$0xff]
      %515 = vst [vmem:[%s53 + $0x730] sm:$0xff] %v514
      %v516 = vld [vmem:[%s52 + $0x738] sm:$0xff]
      %517 = vst [vmem:[%s53 + $0x738] sm:$0xff] %v516
      %v518 = vld [vmem:[%s52 + $0x740] sm:$0xff]
      %519 = vst [vmem:[%s53 + $0x740] sm:$0xff] %v518
      %v520 = vld [vmem:[%s52 + $0x748] sm:$0xff]
      %521 = vst [vmem:[%s53 + $0x748] sm:$0xff] %v520
      %v522 = vld [vmem:[%s52 + $0x750] sm:$0xff]
      %523 = vst [vmem:[%s53 + $0x750] sm:$0xff] %v522
      %v524 = vld [vmem:[%s52 + $0x758] sm:$0xff]
      %525 = vst [vmem:[%s53 + $0x758] sm:$0xff] %v524
      %v526 = vld [vmem:[%s52 + $0x760] sm:$0xff]
      %527 = vst [vmem:[%s53 + $0x760] sm:$0xff] %v526
      %v528 = vld [vmem:[%s52 + $0x768] sm:$0xff]
      %529 = vst [vmem:[%s53 + $0x768] sm:$0xff] %v528
      %v530 = vld [vmem:[%s52 + $0x770] sm:$0xff]
      %531 = vst [vmem:[%s53 + $0x770] sm:$0xff] %v530
      %v532 = vld [vmem:[%s52 + $0x778] sm:$0xff]
      %533 = vst [vmem:[%s53 + $0x778] sm:$0xff] %v532
      %v534 = vld [vmem:[%s52 + $0x780] sm:$0xff]
      %535 = vst [vmem:[%s53 + $0x780] sm:$0xff] %v534
      %v536 = vld [vmem:[%s52 + $0x788] sm:$0xff]
      %537 = vst [vmem:[%s53 + $0x788] sm:$0xff] %v536
      %v538 = vld [vmem:[%s52 + $0x790] sm:$0xff]
      %539 = vst [vmem:[%s53 + $0x790] sm:$0xff] %v538
      %v540 = vld [vmem:[%s52 + $0x798] sm:$0xff]
      %541 = vst [vmem:[%s53 + $0x798] sm:$0xff] %v540
      %v542 = vld [vmem:[%s52 + $0x7a0] sm:$0xff]
      %543 = vst [vmem:[%s53 + $0x7a0] sm:$0xff] %v542
      %v544 = vld [vmem:[%s52 + $0x7a8] sm:$0xff]
      %545 = vst [vmem:[%s53 + $0x7a8] sm:$0xff] %v544
      %v546 = vld [vmem:[%s52 + $0x7b0] sm:$0xff]
      %547 = vst [vmem:[%s53 + $0x7b0] sm:$0xff] %v546
      %v548 = vld [vmem:[%s52 + $0x7b8] sm:$0xff]
      %549 = vst [vmem:[%s53 + $0x7b8] sm:$0xff] %v548
      %v550 = vld [vmem:[%s52 + $0x7c0] sm:$0xff]
      %551 = vst [vmem:[%s53 + $0x7c0] sm:$0xff] %v550
      %v552 = vld [vmem:[%s52 + $0x7c8] sm:$0xff]
      %553 = vst [vmem:[%s53 + $0x7c8] sm:$0xff] %v552
      %v554 = vld [vmem:[%s52 + $0x7d0] sm:$0xff]
      %555 = vst [vmem:[%s53 + $0x7d0] sm:$0xff] %v554
      %v556 = vld [vmem:[%s52 + $0x7d8] sm:$0xff]
      %557 = vst [vmem:[%s53 + $0x7d8] sm:$0xff] %v556
      %v558 = vld [vmem:[%s52 + $0x7e0] sm:$0xff]
      %559 = vst [vmem:[%s53 + $0x7e0] sm:$0xff] %v558
      %v560 = vld [vmem:[%s52 + $0x7e8] sm:$0xff]
      %561 = vst [vmem:[%s53 + $0x7e8] sm:$0xff] %v560
      %v562 = vld [vmem:[%s52 + $0x7f0] sm:$0xff]
      %563 = vst [vmem:[%s53 + $0x7f0] sm:$0xff] %v562
      %v564 = vld [vmem:[%s52 + $0x7f8] sm:$0xff]
      %565 = vst [vmem:[%s53 + $0x7f8] sm:$0xff] %v564
    $region58: #{fenet_forward.1} parent=52 // loop_footer
      %s51 = sadd.s32 1, %s47
    $region59: #{fenet_forward.1} parent=52 // loop_footer_branch
      %46 = sbr.rel target = $region55
    $region60: #{fenet_forward.1} parent=52 // loop_exit
      _
  $region53: #{fenet_forward.1} parent=0 // pred_fallthru
    _
  // Predicated region
  $region61: #{fenet_forward.1} parent=0 // pred_check
    _
  $region62: #{fenet_forward.1} parent=0 // pred_check_branch
    %567 = sbr.rel target = $region64
  $region63: #{fenet_forward.1} parent=0 // pred_region
    _
  $region64: #{fenet_forward.1} parent=0 // pred_fallthru
    _
  // Predicated region
  $region65: #{fenet_forward.1} parent=0 // pred_check
    _
  $region66: #{fenet_forward.1} parent=0 // pred_check_branch
    %570 = sbr.rel (0) target = $region68
  $region67: #{fenet_forward.1} parent=0 // pred_region
    %571 = vsyncadd [#allocation4], 32768
  $region68: #{fenet_forward.1} parent=0 // pred_fallthru
    _
  %s572 = scalar_lea.sflag [#allocation4], 1
  // Predicated region
  $region69: #{fenet_forward.1} parent=0 // pred_check
    _
  $region70: #{fenet_forward.1} parent=0 // pred_check_branch
    %574 = sbr.rel (0) target = $region72
  $region71: #{fenet_forward.1} parent=0 // pred_region
    loop: start=0, step=1, limit=1
    $region73: #{fenet_forward.1} parent=71 // loop_pre_header
      _
    $region74: #{fenet_forward.1} parent=71 // loop_header
      %s576 = sphi 0, %s580
      %p577 = scmp.ge.s32.totalorder %s576, 1
      %s581 = sphi %s13, %s13
      %s582 = sphi [#allocation3], [#allocation3]
    $region75: #{fenet_forward.1} parent=71 // loop_header_branch
      %579 = sbr.rel (%p577) target = $region79
    $region76: #{fenet_forward.1} parent=71 // loop_body
      %v583 = vld [vmem:[%s581] sm:$0xff]
      %584 = vst [vmem:[%s582] sm:$0xff] %v583
      %v585 = vld [vmem:[%s581 + $0x8] sm:$0xff]
      %586 = vst [vmem:[%s582 + $0x8] sm:$0xff] %v585
      %v587 = vld [vmem:[%s581 + $0x10] sm:$0xff]
      %588 = vst [vmem:[%s582 + $0x10] sm:$0xff] %v587
      %v589 = vld [vmem:[%s581 + $0x18] sm:$0xff]
      %590 = vst [vmem:[%s582 + $0x18] sm:$0xff] %v589
      %v591 = vld [vmem:[%s581 + $0x20] sm:$0xff]
      %592 = vst [vmem:[%s582 + $0x20] sm:$0xff] %v591
      %v593 = vld [vmem:[%s581 + $0x28] sm:$0xff]
      %594 = vst [vmem:[%s582 + $0x28] sm:$0xff] %v593
      %v595 = vld [vmem:[%s581 + $0x30] sm:$0xff]
      %596 = vst [vmem:[%s582 + $0x30] sm:$0xff] %v595
      %v597 = vld [vmem:[%s581 + $0x38] sm:$0xff]
      %598 = vst [vmem:[%s582 + $0x38] sm:$0xff] %v597
      %v599 = vld [vmem:[%s581 + $0x40] sm:$0xff]
      %600 = vst [vmem:[%s582 + $0x40] sm:$0xff] %v599
      %v601 = vld [vmem:[%s581 + $0x48] sm:$0xff]
      %602 = vst [vmem:[%s582 + $0x48] sm:$0xff] %v601
      %v603 = vld [vmem:[%s581 + $0x50] sm:$0xff]
      %604 = vst [vmem:[%s582 + $0x50] sm:$0xff] %v603
      %v605 = vld [vmem:[%s581 + $0x58] sm:$0xff]
      %606 = vst [vmem:[%s582 + $0x58] sm:$0xff] %v605
      %v607 = vld [vmem:[%s581 + $0x60] sm:$0xff]
      %608 = vst [vmem:[%s582 + $0x60] sm:$0xff] %v607
      %v609 = vld [vmem:[%s581 + $0x68] sm:$0xff]
      %610 = vst [vmem:[%s582 + $0x68] sm:$0xff] %v609
      %v611 = vld [vmem:[%s581 + $0x70] sm:$0xff]
      %612 = vst [vmem:[%s582 + $0x70] sm:$0xff] %v611
      %v613 = vld [vmem:[%s581 + $0x78] sm:$0xff]
      %614 = vst [vmem:[%s582 + $0x78] sm:$0xff] %v613
    $region77: #{fenet_forward.1} parent=71 // loop_footer
      %s580 = sadd.s32 1, %s576
    $region78: #{fenet_forward.1} parent=71 // loop_footer_branch
      %575 = sbr.rel target = $region74
    $region79: #{fenet_forward.1} parent=71 // loop_exit
      _
  $region72: #{fenet_forward.1} parent=0 // pred_fallthru
    _
  // Predicated region
  $region80: #{fenet_forward.1} parent=0 // pred_check
    _
  $region81: #{fenet_forward.1} parent=0 // pred_check_branch
    %616 = sbr.rel target = $region83
  $region82: #{fenet_forward.1} parent=0 // pred_region
    _
  $region83: #{fenet_forward.1} parent=0 // pred_fallthru
    _
  // Predicated region
  $region84: #{fenet_forward.1} parent=0 // pred_check
    _
  $region85: #{fenet_forward.1} parent=0 // pred_check_branch
    %619 = sbr.rel (0) target = $region87
  $region86: #{fenet_forward.1} parent=0 // pred_region
    %620 = vsyncadd %s572, 2048
  $region87: #{fenet_forward.1} parent=0 // pred_fallthru
    _
  %v621 = vld [vmem:[%s0] sm:$0xf]
  %v622 = vld [vmem:[%s0 + $0x4] sm:$0xf]
  %v623 = vld [vmem:[%s0 + $0x8] sm:$0xf]
  %v624 = vld [vmem:[%s0 + $0xc] sm:$0xf]
  %v625 = vld [vmem:[%s0 + $0x10] sm:$0xf]
  %v626 = vld [vmem:[%s0 + $0x14] sm:$0xf]
  %v627 = vld [vmem:[%s0 + $0x18] sm:$0xf]
  %v628 = vld [vmem:[%s0 + $0x1c] sm:$0xf]
  %v629 = vld [vmem:[%s0 + $0x20] sm:$0xf]
  %v630 = vld [vmem:[%s0 + $0x24] sm:$0xf]
  %v631 = vld [vmem:[%s0 + $0x28] sm:$0xf]
  %v632 = vld [vmem:[%s0 + $0x2c] sm:$0xf]
  %v633 = vld [vmem:[%s0 + $0x30] sm:$0xf]
  %v634 = vld [vmem:[%s0 + $0x34] sm:$0xf]
  %v635 = vld [vmem:[%s0 + $0x38] sm:$0xf]
  %v636 = vld [vmem:[%s0 + $0x3c] sm:$0xf]
  %v637 = vld [vmem:[%s0 + $0x40] sm:$0xf]
  %v638 = vld [vmem:[%s0 + $0x44] sm:$0xf]
  %v639 = vld [vmem:[%s0 + $0x48] sm:$0xf]
  %v640 = vld [vmem:[%s0 + $0x4c] sm:$0xf]
  %v641 = vld [vmem:[%s0 + $0x50] sm:$0xf]
  %v642 = vld [vmem:[%s0 + $0x54] sm:$0xf]
  %v643 = vld [vmem:[%s0 + $0x58] sm:$0xf]
  %v644 = vld [vmem:[%s0 + $0x5c] sm:$0xf]
  %v645 = vld [vmem:[%s0 + $0x60] sm:$0xf]
  %v646 = vld [vmem:[%s0 + $0x64] sm:$0xf]
  %v647 = vld [vmem:[%s0 + $0x68] sm:$0xf]
  %v648 = vld [vmem:[%s0 + $0x6c] sm:$0xf]
  %v649 = vld [vmem:[%s0 + $0x70] sm:$0xf]
  %v650 = vld [vmem:[%s0 + $0x74] sm:$0xf]
  %v651 = vld [vmem:[%s0 + $0x78] sm:$0xf]
  %v652 = vld [vmem:[%s0 + $0x7c] sm:$0xf]
  %v653 = vld [vmem:[%s0 + $0x80] sm:$0xf]
  %v654 = vld [vmem:[%s0 + $0x84] sm:$0xf]
  %v655 = vld [vmem:[%s0 + $0x88] sm:$0xf]
  %v656 = vld [vmem:[%s0 + $0x8c] sm:$0xf]
  %v657 = vld [vmem:[%s0 + $0x90] sm:$0xf]
  %v658 = vld [vmem:[%s0 + $0x94] sm:$0xf]
  %v659 = vld [vmem:[%s0 + $0x98] sm:$0xf]
  %v660 = vld [vmem:[%s0 + $0x9c] sm:$0xf]
  %v661 = vld [vmem:[%s0 + $0xa0] sm:$0xf]
  %v662 = vld [vmem:[%s0 + $0xa4] sm:$0xf]
  %v663 = vld [vmem:[%s0 + $0xa8] sm:$0xf]
  %v664 = vld [vmem:[%s0 + $0xac] sm:$0xf]
  %v665 = vld [vmem:[%s0 + $0xb0] sm:$0xf]
  %v666 = vld [vmem:[%s0 + $0xb4] sm:$0xf]
  %v667 = vld [vmem:[%s0 + $0xb8] sm:$0xf]
  %v668 = vld [vmem:[%s0 + $0xbc] sm:$0xf]
  %v669 = vld [vmem:[%s0 + $0xc0] sm:$0xf]
  %v670 = vld [vmem:[%s0 + $0xc4] sm:$0xf]
  %v671 = vld [vmem:[%s0 + $0xc8] sm:$0xf]
  %v672 = vld [vmem:[%s0 + $0xcc] sm:$0xf]
  %v673 = vld [vmem:[%s0 + $0xd0] sm:$0xf]
  %v674 = vld [vmem:[%s0 + $0xd4] sm:$0xf]
  %v675 = vld [vmem:[%s0 + $0xd8] sm:$0xf]
  %v676 = vld [vmem:[%s0 + $0xdc] sm:$0xf]
  %v677 = vld [vmem:[%s0 + $0xe0] sm:$0xf]
  %v678 = vld [vmem:[%s0 + $0xe4] sm:$0xf]
  %v679 = vld [vmem:[%s0 + $0xe8] sm:$0xf]
  %v680 = vld [vmem:[%s0 + $0xec] sm:$0xf]
  %v681 = vld [vmem:[%s0 + $0xf0] sm:$0xf]
  %v682 = vld [vmem:[%s0 + $0xf4] sm:$0xf]
  %v683 = vld [vmem:[%s0 + $0xf8] sm:$0xf]
  %v684 = vld [vmem:[%s0 + $0xfc] sm:$0xf]
  %v685 = vld [vmem:[%s4] sm:$0xf]
  %v686 = vld [vmem:[%s4 + $0x4] sm:$0xf]
  %v687 = vld [vmem:[%s4 + $0x8] sm:$0xf]
  %v688 = vld [vmem:[%s4 + $0xc] sm:$0xf]
  %v689 = vld [vmem:[%s3] sm:$0x1]
  %v691 = vperm.slane %v689, 0
  %v757 = vunpack.c.l.b16 %v621
  %v758 = vunpack.c.l.b16 %v622
  %v759 = vunpack.c.l.b16 %v623
  %v760 = vunpack.c.l.b16 %v624
  %v761 = vunpack.c.l.b16 %v625
  %v762 = vunpack.c.l.b16 %v626
  %v763 = vunpack.c.l.b16 %v627
  %v764 = vunpack.c.l.b16 %v628
  %v765 = vunpack.c.l.b16 %v629
  %v766 = vunpack.c.l.b16 %v630
  %v767 = vunpack.c.l.b16 %v631
  %v768 = vunpack.c.l.b16 %v632
  %v769 = vunpack.c.l.b16 %v633
  %v770 = vunpack.c.l.b16 %v634
  %v771 = vunpack.c.l.b16 %v635
  %v772 = vunpack.c.l.b16 %v636
  %v773 = vunpack.c.l.b16 %v637
  %v774 = vunpack.c.l.b16 %v638
  %v775 = vunpack.c.l.b16 %v639
  %v776 = vunpack.c.l.b16 %v640
  %v777 = vunpack.c.l.b16 %v641
  %v778 = vunpack.c.l.b16 %v642
  %v779 = vunpack.c.l.b16 %v643
  %v780 = vunpack.c.l.b16 %v644
  %v781 = vunpack.c.l.b16 %v645
  %v782 = vunpack.c.l.b16 %v646
  %v783 = vunpack.c.l.b16 %v647
  %v784 = vunpack.c.l.b16 %v648
  %v785 = vunpack.c.l.b16 %v649
  %v786 = vunpack.c.l.b16 %v650
  %v787 = vunpack.c.l.b16 %v651
  %v788 = vunpack.c.l.b16 %v652
  %v789 = vunpack.c.l.b16 %v653
  %v790 = vunpack.c.l.b16 %v654
  %v791 = vunpack.c.l.b16 %v655
  %v792 = vunpack.c.l.b16 %v656
  %v793 = vunpack.c.l.b16 %v657
  %v794 = vunpack.c.l.b16 %v658
  %v795 = vunpack.c.l.b16 %v659
  %v796 = vunpack.c.l.b16 %v660
  %v797 = vunpack.c.l.b16 %v661
  %v798 = vunpack.c.l.b16 %v662
  %v799 = vunpack.c.l.b16 %v663
  %v800 = vunpack.c.l.b16 %v664
  %v801 = vunpack.c.l.b16 %v665
  %v802 = vunpack.c.l.b16 %v666
  %v803 = vunpack.c.l.b16 %v667
  %v804 = vunpack.c.l.b16 %v668
  %v805 = vunpack.c.l.b16 %v669
  %v806 = vunpack.c.l.b16 %v670
  %v807 = vunpack.c.l.b16 %v671
  %v808 = vunpack.c.l.b16 %v672
  %v809 = vunpack.c.l.b16 %v673
  %v810 = vunpack.c.l.b16 %v674
  %v811 = vunpack.c.l.b16 %v675
  %v812 = vunpack.c.l.b16 %v676
  %v813 = vunpack.c.l.b16 %v677
  %v814 = vunpack.c.l.b16 %v678
  %v815 = vunpack.c.l.b16 %v679
  %v816 = vunpack.c.l.b16 %v680
  %v817 = vunpack.c.l.b16 %v681
  %v818 = vunpack.c.l.b16 %v682
  %v819 = vunpack.c.l.b16 %v683
  %v820 = vunpack.c.l.b16 %v684
  %v821 = vpack.c.b16 %v758, %v757
  %v822 = vpack.c.b16 %v760, %v759
  %v823 = vpack.c.b16 %v762, %v761
  %v824 = vpack.c.b16 %v764, %v763
  %v825 = vpack.c.b16 %v766, %v765
  %v826 = vpack.c.b16 %v768, %v767
  %v827 = vpack.c.b16 %v770, %v769
  %v828 = vpack.c.b16 %v772, %v771
  %v829 = vpack.c.b16 %v774, %v773
  %v830 = vpack.c.b16 %v776, %v775
  %v831 = vpack.c.b16 %v778, %v777
  %v832 = vpack.c.b16 %v780, %v779
  %v833 = vpack.c.b16 %v782, %v781
  %v834 = vpack.c.b16 %v784, %v783
  %v835 = vpack.c.b16 %v786, %v785
  %v836 = vpack.c.b16 %v788, %v787
  %v837 = vpack.c.b16 %v790, %v789
  %v838 = vpack.c.b16 %v792, %v791
  %v839 = vpack.c.b16 %v794, %v793
  %v840 = vpack.c.b16 %v796, %v795
  %v841 = vpack.c.b16 %v798, %v797
  %v842 = vpack.c.b16 %v800, %v799
  %v843 = vpack.c.b16 %v802, %v801
  %v844 = vpack.c.b16 %v804, %v803
  %v845 = vpack.c.b16 %v806, %v805
  %v846 = vpack.c.b16 %v808, %v807
  %v847 = vpack.c.b16 %v810, %v809
  %v848 = vpack.c.b16 %v812, %v811
  %v849 = vpack.c.b16 %v814, %v813
  %v850 = vpack.c.b16 %v816, %v815
  %v851 = vpack.c.b16 %v818, %v817
  %v852 = vpack.c.b16 %v820, %v819
  %v857 = vunpack.c.l.b16 %v685
  %v858 = vunpack.c.l.b16 %v686
  %v859 = vunpack.c.l.b16 %v687
  %v860 = vunpack.c.l.b16 %v688
  %v861 = vpack.c.b16 %v858, %v857
  %v862 = vpack.c.b16 %v860, %v859
  %vm865 = vcmask 261120
  %v867 = vsel %vm865, %v821, 0
  %v870 = vsel %vm865, %v822, 0
  %v873 = vsel %vm865, %v823, 0
  %v876 = vsel %vm865, %v824, 0
  %v879 = vsel %vm865, %v825, 0
  %v882 = vsel %vm865, %v826, 0
  %v885 = vsel %vm865, %v827, 0
  %v888 = vsel %vm865, %v828, 0
  %v891 = vsel %vm865, %v829, 0
  %v894 = vsel %vm865, %v830, 0
  %v897 = vsel %vm865, %v831, 0
  %v900 = vsel %vm865, %v832, 0
  %v903 = vsel %vm865, %v833, 0
  %v906 = vsel %vm865, %v834, 0
  %v909 = vsel %vm865, %v835, 0
  %v912 = vsel %vm865, %v836, 0
  %v915 = vsel %vm865, %v837, 0
  %v918 = vsel %vm865, %v838, 0
  %v921 = vsel %vm865, %v839, 0
  %v924 = vsel %vm865, %v840, 0
  %v927 = vsel %vm865, %v841, 0
  %v930 = vsel %vm865, %v842, 0
  %v933 = vsel %vm865, %v843, 0
  %v936 = vsel %vm865, %v844, 0
  %v939 = vsel %vm865, %v845, 0
  %v942 = vsel %vm865, %v846, 0
  %v945 = vsel %vm865, %v847, 0
  %v948 = vsel %vm865, %v848, 0
  %v951 = vsel %vm865, %v849, 0
  %v954 = vsel %vm865, %v850, 0
  %v957 = vsel %vm865, %v851, 0
  %v960 = vsel %vm865, %v852, 0
  %962 = vmatpush.bf16.msra.mxu0 0
  %963 = vmatpush.bf16.msra.mxu0 0
  %964 = vmatpush.bf16.msra.mxu0 0
  %965 = vmatpush.bf16.msra.mxu0 0
  %966 = vmatpush.bf16.msra.mxu0 0
  %967 = vmatpush.bf16.msra.mxu0 0
  %968 = vmatpush.bf16.msra.mxu0 %v862
  %969 = vmatpush.bf16.msra.mxu0 %v861
  %970 = vmatmul.bf16.gmra.mxu0 %v867
  %v971 = vpop.f32.mrf.mxu0
  %v972 = vadd.f32 %v691, %v971
  %v973 = vpop.f32.mrf.mxu0
  %v974 = vadd.f32 %v691, %v973
  %975 = vmatmul.bf16.gmra.mxu0 %v870
  %v976 = vpop.f32.mrf.mxu0
  %v977 = vadd.f32 %v691, %v976
  %v978 = vpop.f32.mrf.mxu0
  %v979 = vadd.f32 %v691, %v978
  %980 = vmatmul.bf16.gmra.mxu0 %v873
  %v981 = vpop.f32.mrf.mxu0
  %v982 = vadd.f32 %v691, %v981
  %v983 = vpop.f32.mrf.mxu0
  %v984 = vadd.f32 %v691, %v983
  %985 = vmatmul.bf16.gmra.mxu0 %v876
  %v986 = vpop.f32.mrf.mxu0
  %v987 = vadd.f32 %v691, %v986
  %v988 = vpop.f32.mrf.mxu0
  %v989 = vadd.f32 %v691, %v988
  %990 = vmatmul.bf16.gmra.mxu0 %v879
  %v991 = vpop.f32.mrf.mxu0
  %v992 = vadd.f32 %v691, %v991
  %v993 = vpop.f32.mrf.mxu0
  %v994 = vadd.f32 %v691, %v993
  %995 = vmatmul.bf16.gmra.mxu0 %v882
  %v996 = vpop.f32.mrf.mxu0
  %v997 = vadd.f32 %v691, %v996
  %v998 = vpop.f32.mrf.mxu0
  %v999 = vadd.f32 %v691, %v998
  %1000 = vmatmul.bf16.gmra.mxu0 %v885
  %v1001 = vpop.f32.mrf.mxu0
  %v1002 = vadd.f32 %v691, %v1001
  %v1003 = vpop.f32.mrf.mxu0
  %v1004 = vadd.f32 %v691, %v1003
  %1005 = vmatmul.bf16.gmra.mxu0 %v888
  %v1006 = vpop.f32.mrf.mxu0
  %v1007 = vadd.f32 %v691, %v1006
  %v1008 = vpop.f32.mrf.mxu0
  %v1009 = vadd.f32 %v691, %v1008
  %1010 = vmatmul.bf16.gmra.mxu0 %v891
  %v1011 = vpop.f32.mrf.mxu0
  %v1012 = vadd.f32 %v691, %v1011
  %v1013 = vpop.f32.mrf.mxu0
  %v1014 = vadd.f32 %v691, %v1013
  %1015 = vmatmul.bf16.gmra.mxu0 %v894
  %v1016 = vpop.f32.mrf.mxu0
  %v1017 = vadd.f32 %v691, %v1016
  %v1018 = vpop.f32.mrf.mxu0
  %v1019 = vadd.f32 %v691, %v1018
  %1020 = vmatmul.bf16.gmra.mxu0 %v897
  %v1021 = vpop.f32.mrf.mxu0
  %v1022 = vadd.f32 %v691, %v1021
  %v1023 = vpop.f32.mrf.mxu0
  %v1024 = vadd.f32 %v691, %v1023
  %1025 = vmatmul.bf16.gmra.mxu0 %v900
  %v1026 = vpop.f32.mrf.mxu0
  %v1027 = vadd.f32 %v691, %v1026
  %v1028 = vpop.f32.mrf.mxu0
  %v1029 = vadd.f32 %v691, %v1028
  %1030 = vmatmul.bf16.gmra.mxu0 %v903
  %v1031 = vpop.f32.mrf.mxu0
  %v1032 = vadd.f32 %v691, %v1031
  %v1033 = vpop.f32.mrf.mxu0
  %v1034 = vadd.f32 %v691, %v1033
  %1035 = vmatmul.bf16.gmra.mxu0 %v906
  %v1036 = vpop.f32.mrf.mxu0
  %v1037 = vadd.f32 %v691, %v1036
  %v1038 = vpop.f32.mrf.mxu0
  %v1039 = vadd.f32 %v691, %v1038
  %1040 = vmatmul.bf16.gmra.mxu0 %v909
  %v1041 = vpop.f32.mrf.mxu0
  %v1042 = vadd.f32 %v691, %v1041
  %v1043 = vpop.f32.mrf.mxu0
  %v1044 = vadd.f32 %v691, %v1043
  %1045 = vmatmul.bf16.gmra.mxu0 %v912
  %v1046 = vpop.f32.mrf.mxu0
  %v1047 = vadd.f32 %v691, %v1046
  %v1048 = vpop.f32.mrf.mxu0
  %v1049 = vadd.f32 %v691, %v1048
  %1050 = vmatmul.bf16.gmra.mxu0 %v915
  %v1051 = vpop.f32.mrf.mxu0
  %v1052 = vadd.f32 %v691, %v1051
  %v1053 = vpop.f32.mrf.mxu0
  %v1054 = vadd.f32 %v691, %v1053
  %1055 = vmatmul.bf16.gmra.mxu0 %v918
  %v1056 = vpop.f32.mrf.mxu0
  %v1057 = vadd.f32 %v691, %v1056
  %v1058 = vpop.f32.mrf.mxu0
  %v1059 = vadd.f32 %v691, %v1058
  %1060 = vmatmul.bf16.gmra.mxu0 %v921
  %v1061 = vpop.f32.mrf.mxu0
  %v1062 = vadd.f32 %v691, %v1061
  %v1063 = vpop.f32.mrf.mxu0
  %v1064 = vadd.f32 %v691, %v1063
  %1065 = vmatmul.bf16.gmra.mxu0 %v924
  %v1066 = vpop.f32.mrf.mxu0
  %v1067 = vadd.f32 %v691, %v1066
  %v1068 = vpop.f32.mrf.mxu0
  %v1069 = vadd.f32 %v691, %v1068
  %1070 = vmatmul.bf16.gmra.mxu0 %v927
  %v1071 = vpop.f32.mrf.mxu0
  %v1072 = vadd.f32 %v691, %v1071
  %v1073 = vpop.f32.mrf.mxu0
  %v1074 = vadd.f32 %v691, %v1073
  %1075 = vmatmul.bf16.gmra.mxu0 %v930
  %v1076 = vpop.f32.mrf.mxu0
  %v1077 = vadd.f32 %v691, %v1076
  %v1078 = vpop.f32.mrf.mxu0
  %v1079 = vadd.f32 %v691, %v1078
  %1080 = vmatmul.bf16.gmra.mxu0 %v933
  %v1081 = vpop.f32.mrf.mxu0
  %v1082 = vadd.f32 %v691, %v1081
  %v1083 = vpop.f32.mrf.mxu0
  %v1084 = vadd.f32 %v691, %v1083
  %1085 = vmatmul.bf16.gmra.mxu0 %v936
  %v1086 = vpop.f32.mrf.mxu0
  %v1087 = vadd.f32 %v691, %v1086
  %v1088 = vpop.f32.mrf.mxu0
  %v1089 = vadd.f32 %v691, %v1088
  %1090 = vmatmul.bf16.gmra.mxu0 %v939
  %v1091 = vpop.f32.mrf.mxu0
  %v1092 = vadd.f32 %v691, %v1091
  %v1093 = vpop.f32.mrf.mxu0
  %v1094 = vadd.f32 %v691, %v1093
  %1095 = vmatmul.bf16.gmra.mxu0 %v942
  %v1096 = vpop.f32.mrf.mxu0
  %v1097 = vadd.f32 %v691, %v1096
  %v1098 = vpop.f32.mrf.mxu0
  %v1099 = vadd.f32 %v691, %v1098
  %1100 = vmatmul.bf16.gmra.mxu0 %v945
  %v1101 = vpop.f32.mrf.mxu0
  %v1102 = vadd.f32 %v691, %v1101
  %v1103 = vpop.f32.mrf.mxu0
  %v1104 = vadd.f32 %v691, %v1103
  %1105 = vmatmul.bf16.gmra.mxu0 %v948
  %v1106 = vpop.f32.mrf.mxu0
  %v1107 = vadd.f32 %v691, %v1106
  %v1108 = vpop.f32.mrf.mxu0
  %v1109 = vadd.f32 %v691, %v1108
  %1110 = vmatmul.bf16.gmra.mxu0 %v951
  %v1111 = vpop.f32.mrf.mxu0
  %v1112 = vadd.f32 %v691, %v1111
  %v1113 = vpop.f32.mrf.mxu0
  %v1114 = vadd.f32 %v691, %v1113
  %1115 = vmatmul.bf16.gmra.mxu0 %v954
  %v1116 = vpop.f32.mrf.mxu0
  %v1117 = vadd.f32 %v691, %v1116
  %v1118 = vpop.f32.mrf.mxu0
  %v1119 = vadd.f32 %v691, %v1118
  %1120 = vmatmul.bf16.gmra.mxu0 %v957
  %v1121 = vpop.f32.mrf.mxu0
  %v1122 = vadd.f32 %v691, %v1121
  %v1123 = vpop.f32.mrf.mxu0
  %v1124 = vadd.f32 %v691, %v1123
  %1125 = vmatmul.bf16.gmra.mxu0 %v960
  %v1126 = vpop.f32.mrf.mxu0
  %v1127 = vadd.f32 %v691, %v1126
  %v1128 = vpop.f32.mrf.mxu0
  %v1129 = vadd.f32 %v691, %v1128
  %1130 = vdwg.mxu0
  %v1131 = vpack.c.bf16 %v974, %v972
  %v1132 = vpack.c.bf16 %v979, %v977
  %v1133 = vpack.c.bf16 %v984, %v982
  %v1134 = vpack.c.bf16 %v989, %v987
  %v1135 = vpack.c.bf16 %v994, %v992
  %v1136 = vpack.c.bf16 %v999, %v997
  %v1137 = vpack.c.bf16 %v1004, %v1002
  %v1138 = vpack.c.bf16 %v1009, %v1007
  %v1139 = vpack.c.bf16 %v1014, %v1012
  %v1140 = vpack.c.bf16 %v1019, %v1017
  %v1141 = vpack.c.bf16 %v1024, %v1022
  %v1142 = vpack.c.bf16 %v1029, %v1027
  %v1143 = vpack.c.bf16 %v1034, %v1032
  %v1144 = vpack.c.bf16 %v1039, %v1037
  %v1145 = vpack.c.bf16 %v1044, %v1042
  %v1146 = vpack.c.bf16 %v1049, %v1047
  %v1147 = vpack.c.bf16 %v1054, %v1052
  %v1148 = vpack.c.bf16 %v1059, %v1057
  %v1149 = vpack.c.bf16 %v1064, %v1062
  %v1150 = vpack.c.bf16 %v1069, %v1067
  %v1151 = vpack.c.bf16 %v1074, %v1072
  %v1152 = vpack.c.bf16 %v1079, %v1077
  %v1153 = vpack.c.bf16 %v1084, %v1082
  %v1154 = vpack.c.bf16 %v1089, %v1087
  %v1155 = vpack.c.bf16 %v1094, %v1092
  %v1156 = vpack.c.bf16 %v1099, %v1097
  %v1157 = vpack.c.bf16 %v1104, %v1102
  %v1158 = vpack.c.bf16 %v1109, %v1107
  %v1159 = vpack.c.bf16 %v1114, %v1112
  %v1160 = vpack.c.bf16 %v1119, %v1117
  %v1161 = vpack.c.bf16 %v1124, %v1122
  %v1162 = vpack.c.bf16 %v1129, %v1127
  %v1163 = vld [vmem:[%s1] sm:$0xff]
  %v1164 = vld [vmem:[%s1 + $0x8] sm:$0xff]
  %v1167 = vunpack.c.l.b16 %v1163
  %v1168 = vunpack.c.h.b16 %v1163
  %v1169 = vunpack.c.l.b16 %v1164
  %v1170 = vunpack.c.h.b16 %v1164
  %v1171 = vpack.c.b16 %v1167, %v1167
  %v1172 = vpack.c.b16 %v1168, %v1168
  %v1173 = vpack.c.b16 %v1169, %v1169
  %v1174 = vpack.c.b16 %v1170, %v1170
  %1179 = vmatpush.bf16.msra.mxu0 %v1138
  %1180 = vmatpush.bf16.msra.mxu0 %v1137
  %1181 = vmatpush.bf16.msra.mxu0 %v1136
  %1182 = vmatpush.bf16.msra.mxu0 %v1135
  %1183 = vmatpush.bf16.msra.mxu0 %v1134
  %1184 = vmatpush.bf16.msra.mxu0 %v1133
  %1185 = vmatpush.bf16.msra.mxu0 %v1132
  %1186 = vmatpush.bf16.msra.mxu0 %v1131
  %1187 = vmatmul.bf16.gmra.mxu0 %v1171
  %v1188 = vpop.f32.mrf.mxu0
  %v1189 = vadd.f32 0.0, %v1188
  %v1190 = vpop.f32.mrf.mxu0
  %1191 = vdwg.mxu0
  %1192 = vmatpush.bf16.msra.mxu0 %v1146
  %1193 = vmatpush.bf16.msra.mxu0 %v1145
  %1194 = vmatpush.bf16.msra.mxu0 %v1144
  %1195 = vmatpush.bf16.msra.mxu0 %v1143
  %1196 = vmatpush.bf16.msra.mxu0 %v1142
  %1197 = vmatpush.bf16.msra.mxu0 %v1141
  %1198 = vmatpush.bf16.msra.mxu0 %v1140
  %1199 = vmatpush.bf16.msra.mxu0 %v1139
  %1200 = vmatmul.bf16.gmra.mxu0 %v1172
  %v1201 = vpop.f32.mrf.mxu0
  %v1202 = vadd.f32 %v1189, %v1201
  %v1203 = vpop.f32.mrf.mxu0
  %1204 = vdwg.mxu0
  %1205 = vmatpush.bf16.msra.mxu0 %v1154
  %1206 = vmatpush.bf16.msra.mxu0 %v1153
  %1207 = vmatpush.bf16.msra.mxu0 %v1152
  %1208 = vmatpush.bf16.msra.mxu0 %v1151
  %1209 = vmatpush.bf16.msra.mxu0 %v1150
  %1210 = vmatpush.bf16.msra.mxu0 %v1149
  %1211 = vmatpush.bf16.msra.mxu0 %v1148
  %1212 = vmatpush.bf16.msra.mxu0 %v1147
  %1213 = vmatmul.bf16.gmra.mxu0 %v1173
  %v1214 = vpop.f32.mrf.mxu0
  %v1215 = vadd.f32 %v1202, %v1214
  %v1216 = vpop.f32.mrf.mxu0
  %1217 = vdwg.mxu0
  %1218 = vmatpush.bf16.msra.mxu0 %v1162
  %1219 = vmatpush.bf16.msra.mxu0 %v1161
  %1220 = vmatpush.bf16.msra.mxu0 %v1160
  %1221 = vmatpush.bf16.msra.mxu0 %v1159
  %1222 = vmatpush.bf16.msra.mxu0 %v1158
  %1223 = vmatpush.bf16.msra.mxu0 %v1157
  %1224 = vmatpush.bf16.msra.mxu0 %v1156
  %1225 = vmatpush.bf16.msra.mxu0 %v1155
  %1226 = vmatmul.bf16.gmra.mxu0 %v1174
  %v1227 = vpop.f32.mrf.mxu0
  %v1228 = vadd.f32 %v1215, %v1227
  %v1229 = vpop.f32.mrf.mxu0
  %1230 = vdwg.mxu0
  %v1231 = vpack.c.bf16 %v1228, %v1228
  %v1232 = vld [vmem:[%s5] sm:$0xf]
  %v1233 = vld [vmem:[%s5 + $0x4] sm:$0xf]
  %v1234 = vld [vmem:[%s3 + $0x1] sm:$0x1]
  %v1236 = vperm.slane %v1234, 0
  %v1240 = vunpack.c.l.b16 %v1232
  %v1241 = vunpack.c.l.b16 %v1233
  %v1242 = vpack.c.b16 %v1241, %v1240
  %vm1244 = vcmask 130048
  %v1246 = vsel %vm1244, %v1231, 0
  %1248 = vmatpush.bf16.msra.mxu0 0
  %1249 = vmatpush.bf16.msra.mxu0 0
  %1250 = vmatpush.bf16.msra.mxu0 0
  %1251 = vmatpush.bf16.msra.mxu0 0
  %1252 = vmatpush.bf16.msra.mxu0 0
  %1253 = vmatpush.bf16.msra.mxu0 0
  %1254 = vmatpush.bf16.msra.mxu0 0
  %1255 = vmatpush.bf16.msra.mxu0 %v1242
  %1256 = vmatmul.bf16.gmra.mxu0 %v1246
  %v1257 = vpop.f32.mrf.mxu0
  %v1258 = vadd.f32 %v1236, %v1257
  %v1259 = vpop.f32.mrf.mxu0
  %1260 = vdwg.mxu0
  %v1261 = vmax.f32 %v1258, 0.0
  %v1262 = vpack.c.bf16 %v1261, %v1261
  %v1263 = vld [vmem:[%s6] sm:$0xf]
  %v1264 = vld [vmem:[%s6 + $0x4] sm:$0xf]
  %v1265 = vld [vmem:[%s3 + $0x2] sm:$0x1]
  %v1267 = vperm.slane %v1265, 0
  %v1271 = vunpack.c.l.b16 %v1263
  %v1272 = vunpack.c.l.b16 %v1264
  %v1273 = vpack.c.b16 %v1272, %v1271
  %v1276 = vsel %vm1244, %v1262, 0
  %1278 = vmatpush.bf16.msra.mxu0 0
  %1279 = vmatpush.bf16.msra.mxu0 0
  %1280 = vmatpush.bf16.msra.mxu0 0
  %1281 = vmatpush.bf16.msra.mxu0 0
  %1282 = vmatpush.bf16.msra.mxu0 0
  %1283 = vmatpush.bf16.msra.mxu0 0
  %1284 = vmatpush.bf16.msra.mxu0 0
  %1285 = vmatpush.bf16.msra.mxu0 %v1273
  %1286 = vmatmul.bf16.gmra.mxu0 %v1276
  %v1287 = vpop.f32.mrf.mxu0
  %v1288 = vadd.f32 %v1267, %v1287
  %v1289 = vpop.f32.mrf.mxu0
  %1290 = vdwg.mxu0
  %v1291 = vmax.f32 %v1288, 0.0
  %v1292 = vpack.c.bf16 %v1291, %v1291
  %v1293 = vld [vmem:[%s7] sm:$0xf]
  %v1294 = vld [vmem:[%s7 + $0x4] sm:$0xf]
  %v1295 = vld [vmem:[%s7 + $0x8] sm:$0xf]
  %v1296 = vld [vmem:[%s7 + $0xc] sm:$0xf]
  %v1297 = vld [vmem:[%s3 + $0x3] sm:$0x1]
  %v1299 = vperm.slane %v1297, 0
  %v1305 = vunpack.c.l.b16 %v1293
  %v1306 = vunpack.c.l.b16 %v1294
  %v1307 = vunpack.c.l.b16 %v1295
  %v1308 = vunpack.c.l.b16 %v1296
  %v1309 = vpack.c.b16 %v1306, %v1305
  %v1310 = vpack.c.b16 %v1308, %v1307
  %v1314 = vsel %vm865, %v1292, 0
  %1316 = vmatpush.bf16.msra.mxu0 0
  %1317 = vmatpush.bf16.msra.mxu0 0
  %1318 = vmatpush.bf16.msra.mxu0 0
  %1319 = vmatpush.bf16.msra.mxu0 0
  %1320 = vmatpush.bf16.msra.mxu0 0
  %1321 = vmatpush.bf16.msra.mxu0 0
  %1322 = vmatpush.bf16.msra.mxu0 %v1310
  %1323 = vmatpush.bf16.msra.mxu0 %v1309
  %1324 = vmatmul.bf16.gmra.mxu0 %v1314
  %v1325 = vpop.f32.mrf.mxu0
  %v1326 = vadd.f32 %v1299, %v1325
  %v1327 = vpop.f32.mrf.mxu0
  %1328 = vdwg.mxu0
  %v1329 = vmax.f32 %v1326, 0.0
  %v1330 = vpack.c.bf16 %v1329, %v1329
  %v1331 = vld [vmem:[%s8] sm:$0xf]
  %v1332 = vld [vmem:[%s8 + $0x4] sm:$0xf]
  %v1333 = vld [vmem:[%s8 + $0x8] sm:$0xf]
  %v1334 = vld [vmem:[%s8 + $0xc] sm:$0xf]
  %v1335 = vld [vmem:[%s8 + $0x10] sm:$0xf]
  %v1336 = vld [vmem:[%s8 + $0x14] sm:$0xf]
  %v1337 = vld [vmem:[%s8 + $0x18] sm:$0xf]
  %v1338 = vld [vmem:[%s8 + $0x1c] sm:$0xf]
  %v1339 = vld [vmem:[%s3 + $0x4] sm:$0x1]
  %v1341 = vperm.slane %v1339, 0
  %v1351 = vunpack.c.l.b16 %v1331
  %v1352 = vunpack.c.l.b16 %v1332
  %v1353 = vunpack.c.l.b16 %v1333
  %v1354 = vunpack.c.l.b16 %v1334
  %v1355 = vunpack.c.l.b16 %v1335
  %v1356 = vunpack.c.l.b16 %v1336
  %v1357 = vunpack.c.l.b16 %v1337
  %v1358 = vunpack.c.l.b16 %v1338
  %v1359 = vpack.c.b16 %v1352, %v1351
  %v1360 = vpack.c.b16 %v1354, %v1353
  %v1361 = vpack.c.b16 %v1356, %v1355
  %v1362 = vpack.c.b16 %v1358, %v1357
  %vm1367 = vcmask 523264
  %v1369 = vsel %vm1367, %v1330, 0
  %1371 = vmatpush.bf16.msra.mxu0 0
  %1372 = vmatpush.bf16.msra.mxu0 0
  %1373 = vmatpush.bf16.msra.mxu0 0
  %1374 = vmatpush.bf16.msra.mxu0 0
  %1375 = vmatpush.bf16.msra.mxu0 %v1362
  %1376 = vmatpush.bf16.msra.mxu0 %v1361
  %1377 = vmatpush.bf16.msra.mxu0 %v1360
  %1378 = vmatpush.bf16.msra.mxu0 %v1359
  %1379 = vmatmul.bf16.gmra.mxu0 %v1369
  %v1380 = vpop.f32.mrf.mxu0
  %v1381 = vadd.f32 %v1341, %v1380
  %v1382 = vpop.f32.mrf.mxu0
  %1383 = vdwg.mxu0
  %v1384 = vmax.f32 %v1381, 0.0
  %v1385 = vpack.c.bf16 %v1384, %v1384
  %v1386 = vld [vmem:[%s9] sm:$0xf]
  %v1387 = vld [vmem:[%s9 + $0x4] sm:$0xf]
  %v1388 = vld [vmem:[%s9 + $0x8] sm:$0xf]
  %v1389 = vld [vmem:[%s9 + $0xc] sm:$0xf]
  %v1390 = vld [vmem:[%s9 + $0x10] sm:$0xf]
  %v1391 = vld [vmem:[%s9 + $0x14] sm:$0xf]
  %v1392 = vld [vmem:[%s9 + $0x18] sm:$0xf]
  %v1393 = vld [vmem:[%s9 + $0x1c] sm:$0xf]
  %v1394 = vld [vmem:[%s9 + $0x20] sm:$0xf]
  %v1395 = vld [vmem:[%s9 + $0x24] sm:$0xf]
  %v1396 = vld [vmem:[%s9 + $0x28] sm:$0xf]
  %v1397 = vld [vmem:[%s9 + $0x2c] sm:$0xf]
  %v1398 = vld [vmem:[%s9 + $0x30] sm:$0xf]
  %v1399 = vld [vmem:[%s9 + $0x34] sm:$0xf]
  %v1400 = vld [vmem:[%s9 + $0x38] sm:$0xf]
  %v1401 = vld [vmem:[%s9 + $0x3c] sm:$0xf]
  %v1402 = vld [vmem:[%s3 + $0x5] sm:$0x1]
  %v1404 = vperm.slane %v1402, 0
  %v1422 = vunpack.c.l.b16 %v1386
  %v1423 = vunpack.c.l.b16 %v1387
  %v1424 = vunpack.c.l.b16 %v1388
  %v1425 = vunpack.c.l.b16 %v1389
  %v1426 = vunpack.c.l.b16 %v1390
  %v1427 = vunpack.c.l.b16 %v1391
  %v1428 = vunpack.c.l.b16 %v1392
  %v1429 = vunpack.c.l.b16 %v1393
  %v1430 = vunpack.c.l.b16 %v1394
  %v1431 = vunpack.c.l.b16 %v1395
  %v1432 = vunpack.c.l.b16 %v1396
  %v1433 = vunpack.c.l.b16 %v1397
  %v1434 = vunpack.c.l.b16 %v1398
  %v1435 = vunpack.c.l.b16 %v1399
  %v1436 = vunpack.c.l.b16 %v1400
  %v1437 = vunpack.c.l.b16 %v1401
  %v1438 = vpack.c.b16 %v1423, %v1422
  %v1439 = vpack.c.b16 %v1425, %v1424
  %v1440 = vpack.c.b16 %v1427, %v1426
  %v1441 = vpack.c.b16 %v1429, %v1428
  %v1442 = vpack.c.b16 %v1431, %v1430
  %v1443 = vpack.c.b16 %v1433, %v1432
  %v1444 = vpack.c.b16 %v1435, %v1434
  %v1445 = vpack.c.b16 %v1437, %v1436
  %1454 = vmatpush.bf16.msra.mxu0 %v1445
  %1455 = vmatpush.bf16.msra.mxu0 %v1444
  %1456 = vmatpush.bf16.msra.mxu0 %v1443
  %1457 = vmatpush.bf16.msra.mxu0 %v1442
  %1458 = vmatpush.bf16.msra.mxu0 %v1441
  %1459 = vmatpush.bf16.msra.mxu0 %v1440
  %1460 = vmatpush.bf16.msra.mxu0 %v1439
  %1461 = vmatpush.bf16.msra.mxu0 %v1438
  %1462 = vmatmul.bf16.gmra.mxu0 %v1385
  %v1463 = vpop.f32.mrf.mxu0
  %v1464 = vadd.f32 %v1404, %v1463
  %v1465 = vpop.f32.mrf.mxu0
  %1466 = vdwg.mxu0
  %v1467 = vmax.f32 %v1464, 0.0
  %v1468 = vpack.c.bf16 %v1467, %v1467
  %v1469 = vld [vmem:[%s10] sm:$0xff]
  %v1470 = vld [vmem:[%s10 + $0x8] sm:$0xff]
  %v1471 = vld [vmem:[%s10 + $0x10] sm:$0xff]
  %v1472 = vld [vmem:[%s10 + $0x18] sm:$0xff]
  %v1473 = vld [vmem:[%s10 + $0x20] sm:$0xff]
  %v1474 = vld [vmem:[%s10 + $0x28] sm:$0xff]
  %v1475 = vld [vmem:[%s10 + $0x30] sm:$0xff]
  %v1476 = vld [vmem:[%s10 + $0x38] sm:$0xff]
  %v1477 = vld [vmem:[%s10 + $0x40] sm:$0xff]
  %v1478 = vld [vmem:[%s10 + $0x48] sm:$0xff]
  %v1479 = vld [vmem:[%s10 + $0x50] sm:$0xff]
  %v1480 = vld [vmem:[%s10 + $0x58] sm:$0xff]
  %v1481 = vld [vmem:[%s10 + $0x60] sm:$0xff]
  %v1482 = vld [vmem:[%s10 + $0x68] sm:$0xff]
  %v1483 = vld [vmem:[%s10 + $0x70] sm:$0xff]
  %v1484 = vld [vmem:[%s10 + $0x78] sm:$0xff]
  %v1485 = vld [vmem:[%s3 + $0x6] sm:$0x3]
  %v1487 = vperm.slane %v1485, 0
  %v1488 = vperm.slane %v1485, 1
  %v1507 = vunpack.c.l.b16 %v1469
  %v1508 = vunpack.c.h.b16 %v1469
  %v1509 = vunpack.c.l.b16 %v1470
  %v1510 = vunpack.c.h.b16 %v1470
  %v1511 = vunpack.c.l.b16 %v1471
  %v1512 = vunpack.c.h.b16 %v1471
  %v1513 = vunpack.c.l.b16 %v1472
  %v1514 = vunpack.c.h.b16 %v1472
  %v1515 = vunpack.c.l.b16 %v1473
  %v1516 = vunpack.c.h.b16 %v1473
  %v1517 = vunpack.c.l.b16 %v1474
  %v1518 = vunpack.c.h.b16 %v1474
  %v1519 = vunpack.c.l.b16 %v1475
  %v1520 = vunpack.c.h.b16 %v1475
  %v1521 = vunpack.c.l.b16 %v1476
  %v1522 = vunpack.c.h.b16 %v1476
  %v1523 = vunpack.c.l.b16 %v1477
  %v1524 = vunpack.c.h.b16 %v1477
  %v1525 = vunpack.c.l.b16 %v1478
  %v1526 = vunpack.c.h.b16 %v1478
  %v1527 = vunpack.c.l.b16 %v1479
  %v1528 = vunpack.c.h.b16 %v1479
  %v1529 = vunpack.c.l.b16 %v1480
  %v1530 = vunpack.c.h.b16 %v1480
  %v1531 = vunpack.c.l.b16 %v1481
  %v1532 = vunpack.c.h.b16 %v1481
  %v1533 = vunpack.c.l.b16 %v1482
  %v1534 = vunpack.c.h.b16 %v1482
  %v1535 = vunpack.c.l.b16 %v1483
  %v1536 = vunpack.c.h.b16 %v1483
  %v1537 = vunpack.c.l.b16 %v1484
  %v1538 = vunpack.c.h.b16 %v1484
  %v1539 = vpack.c.b16 %v1509, %v1507
  %v1540 = vpack.c.b16 %v1510, %v1508
  %v1541 = vpack.c.b16 %v1513, %v1511
  %v1542 = vpack.c.b16 %v1514, %v1512
  %v1543 = vpack.c.b16 %v1517, %v1515
  %v1544 = vpack.c.b16 %v1518, %v1516
  %v1545 = vpack.c.b16 %v1521, %v1519
  %v1546 = vpack.c.b16 %v1522, %v1520
  %v1547 = vpack.c.b16 %v1525, %v1523
  %v1548 = vpack.c.b16 %v1526, %v1524
  %v1549 = vpack.c.b16 %v1529, %v1527
  %v1550 = vpack.c.b16 %v1530, %v1528
  %v1551 = vpack.c.b16 %v1533, %v1531
  %v1552 = vpack.c.b16 %v1534, %v1532
  %v1553 = vpack.c.b16 %v1537, %v1535
  %v1554 = vpack.c.b16 %v1538, %v1536
  %1571 = vmatpush.bf16.msra.mxu0 %v1553
  %1572 = vmatpush.bf16.msra.mxu0 %v1551
  %1573 = vmatpush.bf16.msra.mxu0 %v1549
  %1574 = vmatpush.bf16.msra.mxu0 %v1547
  %1575 = vmatpush.bf16.msra.mxu0 %v1545
  %1576 = vmatpush.bf16.msra.mxu0 %v1543
  %1577 = vmatpush.bf16.msra.mxu0 %v1541
  %1578 = vmatpush.bf16.msra.mxu0 %v1539
  %1579 = vmatmul.bf16.gmra.mxu0 %v1468
  %v1580 = vpop.f32.mrf.mxu0
  %v1581 = vadd.f32 %v1487, %v1580
  %v1582 = vpop.f32.mrf.mxu0
  %1583 = vdwg.mxu0
  %1584 = vmatpush.bf16.msra.mxu0 %v1554
  %1585 = vmatpush.bf16.msra.mxu0 %v1552
  %1586 = vmatpush.bf16.msra.mxu0 %v1550
  %1587 = vmatpush.bf16.msra.mxu0 %v1548
  %1588 = vmatpush.bf16.msra.mxu0 %v1546
  %1589 = vmatpush.bf16.msra.mxu0 %v1544
  %1590 = vmatpush.bf16.msra.mxu0 %v1542
  %1591 = vmatpush.bf16.msra.mxu0 %v1540
  %1592 = vmatmul.bf16.gmra.mxu0 %v1468
  %v1593 = vpop.f32.mrf.mxu0
  %v1594 = vadd.f32 %v1488, %v1593
  %v1595 = vpop.f32.mrf.mxu0
  %1596 = vdwg.mxu0
  %v1597 = vmax.f32 %v1581, 0.0
  %v1598 = vmax.f32 %v1594, 0.0
  %v1599 = vpack.c.bf16 %v1597, %v1597
  %v1600 = vpack.c.bf16 %v1598, %v1598
  %v1601 = vld [vmem:[%s11] sm:$0xff]
  %v1602 = vld [vmem:[%s11 + $0x8] sm:$0xff]
  %v1603 = vld [vmem:[%s11 + $0x10] sm:$0xff]
  %v1604 = vld [vmem:[%s11 + $0x18] sm:$0xff]
  %v1605 = vld [vmem:[%s11 + $0x20] sm:$0xff]
  %v1606 = vld [vmem:[%s11 + $0x28] sm:$0xff]
  %v1607 = vld [vmem:[%s11 + $0x30] sm:$0xff]
  %v1608 = vld [vmem:[%s11 + $0x38] sm:$0xff]
  %v1609 = vld [vmem:[%s11 + $0x40] sm:$0xff]
  %v1610 = vld [vmem:[%s11 + $0x48] sm:$0xff]
  %v1611 = vld [vmem:[%s11 + $0x50] sm:$0xff]
  %v1612 = vld [vmem:[%s11 + $0x58] sm:$0xff]
  %v1613 = vld [vmem:[%s11 + $0x60] sm:$0xff]
  %v1614 = vld [vmem:[%s11 + $0x68] sm:$0xff]
  %v1615 = vld [vmem:[%s11 + $0x70] sm:$0xff]
  %v1616 = vld [vmem:[%s11 + $0x78] sm:$0xff]
  %v1617 = vld [vmem:[%s11 + $0x80] sm:$0xff]
  %v1618 = vld [vmem:[%s11 + $0x88] sm:$0xff]
  %v1619 = vld [vmem:[%s11 + $0x90] sm:$0xff]
  %v1620 = vld [vmem:[%s11 + $0x98] sm:$0xff]
  %v1621 = vld [vmem:[%s11 + $0xa0] sm:$0xff]
  %v1622 = vld [vmem:[%s11 + $0xa8] sm:$0xff]
  %v1623 = vld [vmem:[%s11 + $0xb0] sm:$0xff]
  %v1624 = vld [vmem:[%s11 + $0xb8] sm:$0xff]
  %v1625 = vld [vmem:[%s11 + $0xc0] sm:$0xff]
  %v1626 = vld [vmem:[%s11 + $0xc8] sm:$0xff]
  %v1627 = vld [vmem:[%s11 + $0xd0] sm:$0xff]
  %v1628 = vld [vmem:[%s11 + $0xd8] sm:$0xff]
  %v1629 = vld [vmem:[%s11 + $0xe0] sm:$0xff]
  %v1630 = vld [vmem:[%s11 + $0xe8] sm:$0xff]
  %v1631 = vld [vmem:[%s11 + $0xf0] sm:$0xff]
  %v1632 = vld [vmem:[%s11 + $0xf8] sm:$0xff]
  %v1633 = vld [vmem:[%s3 + $0x8] sm:$0x3]
  %v1635 = vperm.slane %v1633, 0
  %v1636 = vperm.slane %v1633, 1
  %v1671 = vunpack.c.l.b16 %v1601
  %v1672 = vunpack.c.h.b16 %v1601
  %v1673 = vunpack.c.l.b16 %v1602
  %v1674 = vunpack.c.h.b16 %v1602
  %v1675 = vunpack.c.l.b16 %v1603
  %v1676 = vunpack.c.h.b16 %v1603
  %v1677 = vunpack.c.l.b16 %v1604
  %v1678 = vunpack.c.h.b16 %v1604
  %v1679 = vunpack.c.l.b16 %v1605
  %v1680 = vunpack.c.h.b16 %v1605
  %v1681 = vunpack.c.l.b16 %v1606
  %v1682 = vunpack.c.h.b16 %v1606
  %v1683 = vunpack.c.l.b16 %v1607
  %v1684 = vunpack.c.h.b16 %v1607
  %v1685 = vunpack.c.l.b16 %v1608
  %v1686 = vunpack.c.h.b16 %v1608
  %v1687 = vunpack.c.l.b16 %v1609
  %v1688 = vunpack.c.h.b16 %v1609
  %v1689 = vunpack.c.l.b16 %v1610
  %v1690 = vunpack.c.h.b16 %v1610
  %v1691 = vunpack.c.l.b16 %v1611
  %v1692 = vunpack.c.h.b16 %v1611
  %v1693 = vunpack.c.l.b16 %v1612
  %v1694 = vunpack.c.h.b16 %v1612
  %v1695 = vunpack.c.l.b16 %v1613
  %v1696 = vunpack.c.h.b16 %v1613
  %v1697 = vunpack.c.l.b16 %v1614
  %v1698 = vunpack.c.h.b16 %v1614
  %v1699 = vunpack.c.l.b16 %v1615
  %v1700 = vunpack.c.h.b16 %v1615
  %v1701 = vunpack.c.l.b16 %v1616
  %v1702 = vunpack.c.h.b16 %v1616
  %v1703 = vunpack.c.l.b16 %v1617
  %v1704 = vunpack.c.h.b16 %v1617
  %v1705 = vunpack.c.l.b16 %v1618
  %v1706 = vunpack.c.h.b16 %v1618
  %v1707 = vunpack.c.l.b16 %v1619
  %v1708 = vunpack.c.h.b16 %v1619
  %v1709 = vunpack.c.l.b16 %v1620
  %v1710 = vunpack.c.h.b16 %v1620
  %v1711 = vunpack.c.l.b16 %v1621
  %v1712 = vunpack.c.h.b16 %v1621
  %v1713 = vunpack.c.l.b16 %v1622
  %v1714 = vunpack.c.h.b16 %v1622
  %v1715 = vunpack.c.l.b16 %v1623
  %v1716 = vunpack.c.h.b16 %v1623
  %v1717 = vunpack.c.l.b16 %v1624
  %v1718 = vunpack.c.h.b16 %v1624
  %v1719 = vunpack.c.l.b16 %v1625
  %v1720 = vunpack.c.h.b16 %v1625
  %v1721 = vunpack.c.l.b16 %v1626
  %v1722 = vunpack.c.h.b16 %v1626
  %v1723 = vunpack.c.l.b16 %v1627
  %v1724 = vunpack.c.h.b16 %v1627
  %v1725 = vunpack.c.l.b16 %v1628
  %v1726 = vunpack.c.h.b16 %v1628
  %v1727 = vunpack.c.l.b16 %v1629
  %v1728 = vunpack.c.h.b16 %v1629
  %v1729 = vunpack.c.l.b16 %v1630
  %v1730 = vunpack.c.h.b16 %v1630
  %v1731 = vunpack.c.l.b16 %v1631
  %v1732 = vunpack.c.h.b16 %v1631
  %v1733 = vunpack.c.l.b16 %v1632
  %v1734 = vunpack.c.h.b16 %v1632
  %v1735 = vpack.c.b16 %v1673, %v1671
  %v1736 = vpack.c.b16 %v1674, %v1672
  %v1737 = vpack.c.b16 %v1677, %v1675
  %v1738 = vpack.c.b16 %v1678, %v1676
  %v1739 = vpack.c.b16 %v1681, %v1679
  %v1740 = vpack.c.b16 %v1682, %v1680
  %v1741 = vpack.c.b16 %v1685, %v1683
  %v1742 = vpack.c.b16 %v1686, %v1684
  %v1743 = vpack.c.b16 %v1689, %v1687
  %v1744 = vpack.c.b16 %v1690, %v1688
  %v1745 = vpack.c.b16 %v1693, %v1691
  %v1746 = vpack.c.b16 %v1694, %v1692
  %v1747 = vpack.c.b16 %v1697, %v1695
  %v1748 = vpack.c.b16 %v1698, %v1696
  %v1749 = vpack.c.b16 %v1701, %v1699
  %v1750 = vpack.c.b16 %v1702, %v1700
  %v1751 = vpack.c.b16 %v1705, %v1703
  %v1752 = vpack.c.b16 %v1706, %v1704
  %v1753 = vpack.c.b16 %v1709, %v1707
  %v1754 = vpack.c.b16 %v1710, %v1708
  %v1755 = vpack.c.b16 %v1713, %v1711
  %v1756 = vpack.c.b16 %v1714, %v1712
  %v1757 = vpack.c.b16 %v1717, %v1715
  %v1758 = vpack.c.b16 %v1718, %v1716
  %v1759 = vpack.c.b16 %v1721, %v1719
  %v1760 = vpack.c.b16 %v1722, %v1720
  %v1761 = vpack.c.b16 %v1725, %v1723
  %v1762 = vpack.c.b16 %v1726, %v1724
  %v1763 = vpack.c.b16 %v1729, %v1727
  %v1764 = vpack.c.b16 %v1730, %v1728
  %v1765 = vpack.c.b16 %v1733, %v1731
  %v1766 = vpack.c.b16 %v1734, %v1732
  %1799 = vmatpush.bf16.msra.mxu0 %v1749
  %1800 = vmatpush.bf16.msra.mxu0 %v1747
  %1801 = vmatpush.bf16.msra.mxu0 %v1745
  %1802 = vmatpush.bf16.msra.mxu0 %v1743
  %1803 = vmatpush.bf16.msra.mxu0 %v1741
  %1804 = vmatpush.bf16.msra.mxu0 %v1739
  %1805 = vmatpush.bf16.msra.mxu0 %v1737
  %1806 = vmatpush.bf16.msra.mxu0 %v1735
  %1807 = vmatmul.bf16.gmra.mxu0 %v1599
  %v1808 = vpop.f32.mrf.mxu0
  %v1809 = vadd.f32 %v1635, %v1808
  %v1810 = vpop.f32.mrf.mxu0
  %1811 = vdwg.mxu0
  %1812 = vmatpush.bf16.msra.mxu0 %v1765
  %1813 = vmatpush.bf16.msra.mxu0 %v1763
  %1814 = vmatpush.bf16.msra.mxu0 %v1761
  %1815 = vmatpush.bf16.msra.mxu0 %v1759
  %1816 = vmatpush.bf16.msra.mxu0 %v1757
  %1817 = vmatpush.bf16.msra.mxu0 %v1755
  %1818 = vmatpush.bf16.msra.mxu0 %v1753
  %1819 = vmatpush.bf16.msra.mxu0 %v1751
  %1820 = vmatmul.bf16.gmra.mxu0 %v1600
  %v1821 = vpop.f32.mrf.mxu0
  %v1822 = vadd.f32 %v1809, %v1821
  %v1823 = vpop.f32.mrf.mxu0
  %1824 = vdwg.mxu0
  %1825 = vmatpush.bf16.msra.mxu0 %v1750
  %1826 = vmatpush.bf16.msra.mxu0 %v1748
  %1827 = vmatpush.bf16.msra.mxu0 %v1746
  %1828 = vmatpush.bf16.msra.mxu0 %v1744
  %1829 = vmatpush.bf16.msra.mxu0 %v1742
  %1830 = vmatpush.bf16.msra.mxu0 %v1740
  %1831 = vmatpush.bf16.msra.mxu0 %v1738
  %1832 = vmatpush.bf16.msra.mxu0 %v1736
  %1833 = vmatmul.bf16.gmra.mxu0 %v1599
  %v1834 = vpop.f32.mrf.mxu0
  %v1835 = vadd.f32 %v1636, %v1834
  %v1836 = vpop.f32.mrf.mxu0
  %1837 = vdwg.mxu0
  %1838 = vmatpush.bf16.msra.mxu0 %v1766
  %1839 = vmatpush.bf16.msra.mxu0 %v1764
  %1840 = vmatpush.bf16.msra.mxu0 %v1762
  %1841 = vmatpush.bf16.msra.mxu0 %v1760
  %1842 = vmatpush.bf16.msra.mxu0 %v1758
  %1843 = vmatpush.bf16.msra.mxu0 %v1756
  %1844 = vmatpush.bf16.msra.mxu0 %v1754
  %1845 = vmatpush.bf16.msra.mxu0 %v1752
  %1846 = vmatmul.bf16.gmra.mxu0 %v1600
  %v1847 = vpop.f32.mrf.mxu0
  %v1848 = vadd.f32 %v1835, %v1847
  %v1849 = vpop.f32.mrf.mxu0
  %1850 = vdwg.mxu0
  %v1851 = vmax.f32 %v1822, 0.0
  %v1852 = vmax.f32 %v1848, 0.0
  %v1853 = vpack.c.bf16 %v1851, %v1851
  %v1854 = vpack.c.bf16 %v1852, %v1852
  %s1855 = smul.u32 4, 32
  %s1856 = smul.u32 %s1855, 16
  %s1857 = sshll.u32 %s1856, 4
  %1858 = dma.done [#allocation4], %s1857
  %v1859 = vld [vmem:[#allocation2] sm:$0xff]
  %v1860 = vld [vmem:[#allocation2 + $0x8] sm:$0xff]
  %v1861 = vld [vmem:[#allocation2 + $0x10] sm:$0xff]
  %v1862 = vld [vmem:[#allocation2 + $0x18] sm:$0xff]
  %v1863 = vld [vmem:[#allocation2 + $0x20] sm:$0xff]
  %v1864 = vld [vmem:[#allocation2 + $0x28] sm:$0xff]
  %v1865 = vld [vmem:[#allocation2 + $0x30] sm:$0xff]
  %v1866 = vld [vmem:[#allocation2 + $0x38] sm:$0xff]
  %v1867 = vld [vmem:[#allocation2 + $0x40] sm:$0xff]
  %v1868 = vld [vmem:[#allocation2 + $0x48] sm:$0xff]
  %v1869 = vld [vmem:[#allocation2 + $0x50] sm:$0xff]
  %v1870 = vld [vmem:[#allocation2 + $0x58] sm:$0xff]
  %v1871 = vld [vmem:[#allocation2 + $0x60] sm:$0xff]
  %v1872 = vld [vmem:[#allocation2 + $0x68] sm:$0xff]
  %v1873 = vld [vmem:[#allocation2 + $0x70] sm:$0xff]
  %v1874 = vld [vmem:[#allocation2 + $0x78] sm:$0xff]
  %v1875 = vld [vmem:[#allocation2 + $0x80] sm:$0xff]
  %v1876 = vld [vmem:[#allocation2 + $0x88] sm:$0xff]
  %v1877 = vld [vmem:[#allocation2 + $0x90] sm:$0xff]
  %v1878 = vld [vmem:[#allocation2 + $0x98] sm:$0xff]
  %v1879 = vld [vmem:[#allocation2 + $0xa0] sm:$0xff]
  %v1880 = vld [vmem:[#allocation2 + $0xa8] sm:$0xff]
  %v1881 = vld [vmem:[#allocation2 + $0xb0] sm:$0xff]
  %v1882 = vld [vmem:[#allocation2 + $0xb8] sm:$0xff]
  %v1883 = vld [vmem:[#allocation2 + $0xc0] sm:$0xff]
  %v1884 = vld [vmem:[#allocation2 + $0xc8] sm:$0xff]
  %v1885 = vld [vmem:[#allocation2 + $0xd0] sm:$0xff]
  %v1886 = vld [vmem:[#allocation2 + $0xd8] sm:$0xff]
  %v1887 = vld [vmem:[#allocation2 + $0xe0] sm:$0xff]
  %v1888 = vld [vmem:[#allocation2 + $0xe8] sm:$0xff]
  %v1889 = vld [vmem:[#allocation2 + $0xf0] sm:$0xff]
  %v1890 = vld [vmem:[#allocation2 + $0xf8] sm:$0xff]
  %v1891 = vld [vmem:[#allocation2 + $0x100] sm:$0xff]
  %v1892 = vld [vmem:[#allocation2 + $0x108] sm:$0xff]
  %v1893 = vld [vmem:[#allocation2 + $0x110] sm:$0xff]
  %v1894 = vld [vmem:[#allocation2 + $0x118] sm:$0xff]
  %v1895 = vld [vmem:[#allocation2 + $0x120] sm:$0xff]
  %v1896 = vld [vmem:[#allocation2 + $0x128] sm:$0xff]
  %v1897 = vld [vmem:[#allocation2 + $0x130] sm:$0xff]
  %v1898 = vld [vmem:[#allocation2 + $0x138] sm:$0xff]
  %v1899 = vld [vmem:[#allocation2 + $0x140] sm:$0xff]
  %v1900 = vld [vmem:[#allocation2 + $0x148] sm:$0xff]
  %v1901 = vld [vmem:[#allocation2 + $0x150] sm:$0xff]
  %v1902 = vld [vmem:[#allocation2 + $0x158] sm:$0xff]
  %v1903 = vld [vmem:[#allocation2 + $0x160] sm:$0xff]
  %v1904 = vld [vmem:[#allocation2 + $0x168] sm:$0xff]
  %v1905 = vld [vmem:[#allocation2 + $0x170] sm:$0xff]
  %v1906 = vld [vmem:[#allocation2 + $0x178] sm:$0xff]
  %v1907 = vld [vmem:[#allocation2 + $0x180] sm:$0xff]
  %v1908 = vld [vmem:[#allocation2 + $0x188] sm:$0xff]
  %v1909 = vld [vmem:[#allocation2 + $0x190] sm:$0xff]
  %v1910 = vld [vmem:[#allocation2 + $0x198] sm:$0xff]
  %v1911 = vld [vmem:[#allocation2 + $0x1a0] sm:$0xff]
  %v1912 = vld [vmem:[#allocation2 + $0x1a8] sm:$0xff]
  %v1913 = vld [vmem:[#allocation2 + $0x1b0] sm:$0xff]
  %v1914 = vld [vmem:[#allocation2 + $0x1b8] sm:$0xff]
  %v1915 = vld [vmem:[#allocation2 + $0x1c0] sm:$0xff]
  %v1916 = vld [vmem:[#allocation2 + $0x1c8] sm:$0xff]
  %v1917 = vld [vmem:[#allocation2 + $0x1d0] sm:$0xff]
  %v1918 = vld [vmem:[#allocation2 + $0x1d8] sm:$0xff]
  %v1919 = vld [vmem:[#allocation2 + $0x1e0] sm:$0xff]
  %v1920 = vld [vmem:[#allocation2 + $0x1e8] sm:$0xff]
  %v1921 = vld [vmem:[#allocation2 + $0x1f0] sm:$0xff]
  %v1922 = vld [vmem:[#allocation2 + $0x1f8] sm:$0xff]
  %v1923 = vld [vmem:[#allocation2 + $0x200] sm:$0xff]
  %v1924 = vld [vmem:[#allocation2 + $0x208] sm:$0xff]
  %v1925 = vld [vmem:[#allocation2 + $0x210] sm:$0xff]
  %v1926 = vld [vmem:[#allocation2 + $0x218] sm:$0xff]
  %v1927 = vld [vmem:[#allocation2 + $0x220] sm:$0xff]
  %v1928 = vld [vmem:[#allocation2 + $0x228] sm:$0xff]
  %v1929 = vld [vmem:[#allocation2 + $0x230] sm:$0xff]
  %v1930 = vld [vmem:[#allocation2 + $0x238] sm:$0xff]
  %v1931 = vld [vmem:[#allocation2 + $0x240] sm:$0xff]
  %v1932 = vld [vmem:[#allocation2 + $0x248] sm:$0xff]
  %v1933 = vld [vmem:[#allocation2 + $0x250] sm:$0xff]
  %v1934 = vld [vmem:[#allocation2 + $0x258] sm:$0xff]
  %v1935 = vld [vmem:[#allocation2 + $0x260] sm:$0xff]
  %v1936 = vld [vmem:[#allocation2 + $0x268] sm:$0xff]
  %v1937 = vld [vmem:[#allocation2 + $0x270] sm:$0xff]
  %v1938 = vld [vmem:[#allocation2 + $0x278] sm:$0xff]
  %v1939 = vld [vmem:[#allocation2 + $0x280] sm:$0xff]
  %v1940 = vld [vmem:[#allocation2 + $0x288] sm:$0xff]
  %v1941 = vld [vmem:[#allocation2 + $0x290] sm:$0xff]
  %v1942 = vld [vmem:[#allocation2 + $0x298] sm:$0xff]
  %v1943 = vld [vmem:[#allocation2 + $0x2a0] sm:$0xff]
  %v1944 = vld [vmem:[#allocation2 + $0x2a8] sm:$0xff]
  %v1945 = vld [vmem:[#allocation2 + $0x2b0] sm:$0xff]
  %v1946 = vld [vmem:[#allocation2 + $0x2b8] sm:$0xff]
  %v1947 = vld [vmem:[#allocation2 + $0x2c0] sm:$0xff]
  %v1948 = vld [vmem:[#allocation2 + $0x2c8] sm:$0xff]
  %v1949 = vld [vmem:[#allocation2 + $0x2d0] sm:$0xff]
  %v1950 = vld [vmem:[#allocation2 + $0x2d8] sm:$0xff]
  %v1951 = vld [vmem:[#allocation2 + $0x2e0] sm:$0xff]
  %v1952 = vld [vmem:[#allocation2 + $0x2e8] sm:$0xff]
  %v1953 = vld [vmem:[#allocation2 + $0x2f0] sm:$0xff]
  %v1954 = vld [vmem:[#allocation2 + $0x2f8] sm:$0xff]
  %v1955 = vld [vmem:[#allocation2 + $0x300] sm:$0xff]
  %v1956 = vld [vmem:[#allocation2 + $0x308] sm:$0xff]
  %v1957 = vld [vmem:[#allocation2 + $0x310] sm:$0xff]
  %v1958 = vld [vmem:[#allocation2 + $0x318] sm:$0xff]
  %v1959 = vld [vmem:[#allocation2 + $0x320] sm:$0xff]
  %v1960 = vld [vmem:[#allocation2 + $0x328] sm:$0xff]
  %v1961 = vld [vmem:[#allocation2 + $0x330] sm:$0xff]
  %v1962 = vld [vmem:[#allocation2 + $0x338] sm:$0xff]
  %v1963 = vld [vmem:[#allocation2 + $0x340] sm:$0xff]
  %v1964 = vld [vmem:[#allocation2 + $0x348] sm:$0xff]
  %v1965 = vld [vmem:[#allocation2 + $0x350] sm:$0xff]
  %v1966 = vld [vmem:[#allocation2 + $0x358] sm:$0xff]
  %v1967 = vld [vmem:[#allocation2 + $0x360] sm:$0xff]
  %v1968 = vld [vmem:[#allocation2 + $0x368] sm:$0xff]
  %v1969 = vld [vmem:[#allocation2 + $0x370] sm:$0xff]
  %v1970 = vld [vmem:[#allocation2 + $0x378] sm:$0xff]
  %v1971 = vld [vmem:[#allocation2 + $0x380] sm:$0xff]
  %v1972 = vld [vmem:[#allocation2 + $0x388] sm:$0xff]
  %v1973 = vld [vmem:[#allocation2 + $0x390] sm:$0xff]
  %v1974 = vld [vmem:[#allocation2 + $0x398] sm:$0xff]
  %v1975 = vld [vmem:[#allocation2 + $0x3a0] sm:$0xff]
  %v1976 = vld [vmem:[#allocation2 + $0x3a8] sm:$0xff]
  %v1977 = vld [vmem:[#allocation2 + $0x3b0] sm:$0xff]
  %v1978 = vld [vmem:[#allocation2 + $0x3b8] sm:$0xff]
  %v1979 = vld [vmem:[#allocation2 + $0x3c0] sm:$0xff]
  %v1980 = vld [vmem:[#allocation2 + $0x3c8] sm:$0xff]
  %v1981 = vld [vmem:[#allocation2 + $0x3d0] sm:$0xff]
  %v1982 = vld [vmem:[#allocation2 + $0x3d8] sm:$0xff]
  %v1983 = vld [vmem:[#allocation2 + $0x3e0] sm:$0xff]
  %v1984 = vld [vmem:[#allocation2 + $0x3e8] sm:$0xff]
  %v1985 = vld [vmem:[#allocation2 + $0x3f0] sm:$0xff]
  %v1986 = vld [vmem:[#allocation2 + $0x3f8] sm:$0xff]
  %v1987 = vld [vmem:[#allocation2 + $0x400] sm:$0xff]
  %v1988 = vld [vmem:[#allocation2 + $0x408] sm:$0xff]
  %v1989 = vld [vmem:[#allocation2 + $0x410] sm:$0xff]
  %v1990 = vld [vmem:[#allocation2 + $0x418] sm:$0xff]
  %v1991 = vld [vmem:[#allocation2 + $0x420] sm:$0xff]
  %v1992 = vld [vmem:[#allocation2 + $0x428] sm:$0xff]
  %v1993 = vld [vmem:[#allocation2 + $0x430] sm:$0xff]
  %v1994 = vld [vmem:[#allocation2 + $0x438] sm:$0xff]
  %v1995 = vld [vmem:[#allocation2 + $0x440] sm:$0xff]
  %v1996 = vld [vmem:[#allocation2 + $0x448] sm:$0xff]
  %v1997 = vld [vmem:[#allocation2 + $0x450] sm:$0xff]
  %v1998 = vld [vmem:[#allocation2 + $0x458] sm:$0xff]
  %v1999 = vld [vmem:[#allocation2 + $0x460] sm:$0xff]
  %v2000 = vld [vmem:[#allocation2 + $0x468] sm:$0xff]
  %v2001 = vld [vmem:[#allocation2 + $0x470] sm:$0xff]
  %v2002 = vld [vmem:[#allocation2 + $0x478] sm:$0xff]
  %v2003 = vld [vmem:[#allocation2 + $0x480] sm:$0xff]
  %v2004 = vld [vmem:[#allocation2 + $0x488] sm:$0xff]
  %v2005 = vld [vmem:[#allocation2 + $0x490] sm:$0xff]
  %v2006 = vld [vmem:[#allocation2 + $0x498] sm:$0xff]
  %v2007 = vld [vmem:[#allocation2 + $0x4a0] sm:$0xff]
  %v2008 = vld [vmem:[#allocation2 + $0x4a8] sm:$0xff]
  %v2009 = vld [vmem:[#allocation2 + $0x4b0] sm:$0xff]
  %v2010 = vld [vmem:[#allocation2 + $0x4b8] sm:$0xff]
  %v2011 = vld [vmem:[#allocation2 + $0x4c0] sm:$0xff]
  %v2012 = vld [vmem:[#allocation2 + $0x4c8] sm:$0xff]
  %v2013 = vld [vmem:[#allocation2 + $0x4d0] sm:$0xff]
  %v2014 = vld [vmem:[#allocation2 + $0x4d8] sm:$0xff]
  %v2015 = vld [vmem:[#allocation2 + $0x4e0] sm:$0xff]
  %v2016 = vld [vmem:[#allocation2 + $0x4e8] sm:$0xff]
  %v2017 = vld [vmem:[#allocation2 + $0x4f0] sm:$0xff]
  %v2018 = vld [vmem:[#allocation2 + $0x4f8] sm:$0xff]
  %v2019 = vld [vmem:[#allocation2 + $0x500] sm:$0xff]
  %v2020 = vld [vmem:[#allocation2 + $0x508] sm:$0xff]
  %v2021 = vld [vmem:[#allocation2 + $0x510] sm:$0xff]
  %v2022 = vld [vmem:[#allocation2 + $0x518] sm:$0xff]
  %v2023 = vld [vmem:[#allocation2 + $0x520] sm:$0xff]
  %v2024 = vld [vmem:[#allocation2 + $0x528] sm:$0xff]
  %v2025 = vld [vmem:[#allocation2 + $0x530] sm:$0xff]
  %v2026 = vld [vmem:[#allocation2 + $0x538] sm:$0xff]
  %v2027 = vld [vmem:[#allocation2 + $0x540] sm:$0xff]
  %v2028 = vld [vmem:[#allocation2 + $0x548] sm:$0xff]
  %v2029 = vld [vmem:[#allocation2 + $0x550] sm:$0xff]
  %v2030 = vld [vmem:[#allocation2 + $0x558] sm:$0xff]
  %v2031 = vld [vmem:[#allocation2 + $0x560] sm:$0xff]
  %v2032 = vld [vmem:[#allocation2 + $0x568] sm:$0xff]
  %v2033 = vld [vmem:[#allocation2 + $0x570] sm:$0xff]
  %v2034 = vld [vmem:[#allocation2 + $0x578] sm:$0xff]
  %v2035 = vld [vmem:[#allocation2 + $0x580] sm:$0xff]
  %v2036 = vld [vmem:[#allocation2 + $0x588] sm:$0xff]
  %v2037 = vld [vmem:[#allocation2 + $0x590] sm:$0xff]
  %v2038 = vld [vmem:[#allocation2 + $0x598] sm:$0xff]
  %v2039 = vld [vmem:[#allocation2 + $0x5a0] sm:$0xff]
  %v2040 = vld [vmem:[#allocation2 + $0x5a8] sm:$0xff]
  %v2041 = vld [vmem:[#allocation2 + $0x5b0] sm:$0xff]
  %v2042 = vld [vmem:[#allocation2 + $0x5b8] sm:$0xff]
  %v2043 = vld [vmem:[#allocation2 + $0x5c0] sm:$0xff]
  %v2044 = vld [vmem:[#allocation2 + $0x5c8] sm:$0xff]
  %v2045 = vld [vmem:[#allocation2 + $0x5d0] sm:$0xff]
  %v2046 = vld [vmem:[#allocation2 + $0x5d8] sm:$0xff]
  %v2047 = vld [vmem:[#allocation2 + $0x5e0] sm:$0xff]
  %v2048 = vld [vmem:[#allocation2 + $0x5e8] sm:$0xff]
  %v2049 = vld [vmem:[#allocation2 + $0x5f0] sm:$0xff]
  %v2050 = vld [vmem:[#allocation2 + $0x5f8] sm:$0xff]
  %v2051 = vld [vmem:[#allocation2 + $0x600] sm:$0xff]
  %v2052 = vld [vmem:[#allocation2 + $0x608] sm:$0xff]
  %v2053 = vld [vmem:[#allocation2 + $0x610] sm:$0xff]
  %v2054 = vld [vmem:[#allocation2 + $0x618] sm:$0xff]
  %v2055 = vld [vmem:[#allocation2 + $0x620] sm:$0xff]
  %v2056 = vld [vmem:[#allocation2 + $0x628] sm:$0xff]
  %v2057 = vld [vmem:[#allocation2 + $0x630] sm:$0xff]
  %v2058 = vld [vmem:[#allocation2 + $0x638] sm:$0xff]
  %v2059 = vld [vmem:[#allocation2 + $0x640] sm:$0xff]
  %v2060 = vld [vmem:[#allocation2 + $0x648] sm:$0xff]
  %v2061 = vld [vmem:[#allocation2 + $0x650] sm:$0xff]
  %v2062 = vld [vmem:[#allocation2 + $0x658] sm:$0xff]
  %v2063 = vld [vmem:[#allocation2 + $0x660] sm:$0xff]
  %v2064 = vld [vmem:[#allocation2 + $0x668] sm:$0xff]
  %v2065 = vld [vmem:[#allocation2 + $0x670] sm:$0xff]
  %v2066 = vld [vmem:[#allocation2 + $0x678] sm:$0xff]
  %v2067 = vld [vmem:[#allocation2 + $0x680] sm:$0xff]
  %v2068 = vld [vmem:[#allocation2 + $0x688] sm:$0xff]
  %v2069 = vld [vmem:[#allocation2 + $0x690] sm:$0xff]
  %v2070 = vld [vmem:[#allocation2 + $0x698] sm:$0xff]
  %v2071 = vld [vmem:[#allocation2 + $0x6a0] sm:$0xff]
  %v2072 = vld [vmem:[#allocation2 + $0x6a8] sm:$0xff]
  %v2073 = vld [vmem:[#allocation2 + $0x6b0] sm:$0xff]
  %v2074 = vld [vmem:[#allocation2 + $0x6b8] sm:$0xff]
  %v2075 = vld [vmem:[#allocation2 + $0x6c0] sm:$0xff]
  %v2076 = vld [vmem:[#allocation2 + $0x6c8] sm:$0xff]
  %v2077 = vld [vmem:[#allocation2 + $0x6d0] sm:$0xff]
  %v2078 = vld [vmem:[#allocation2 + $0x6d8] sm:$0xff]
  %v2079 = vld [vmem:[#allocation2 + $0x6e0] sm:$0xff]
  %v2080 = vld [vmem:[#allocation2 + $0x6e8] sm:$0xff]
  %v2081 = vld [vmem:[#allocation2 + $0x6f0] sm:$0xff]
  %v2082 = vld [vmem:[#allocation2 + $0x6f8] sm:$0xff]
  %v2083 = vld [vmem:[#allocation2 + $0x700] sm:$0xff]
  %v2084 = vld [vmem:[#allocation2 + $0x708] sm:$0xff]
  %v2085 = vld [vmem:[#allocation2 + $0x710] sm:$0xff]
  %v2086 = vld [vmem:[#allocation2 + $0x718] sm:$0xff]
  %v2087 = vld [vmem:[#allocation2 + $0x720] sm:$0xff]
  %v2088 = vld [vmem:[#allocation2 + $0x728] sm:$0xff]
  %v2089 = vld [vmem:[#allocation2 + $0x730] sm:$0xff]
  %v2090 = vld [vmem:[#allocation2 + $0x738] sm:$0xff]
  %v2091 = vld [vmem:[#allocation2 + $0x740] sm:$0xff]
  %v2092 = vld [vmem:[#allocation2 + $0x748] sm:$0xff]
  %v2093 = vld [vmem:[#allocation2 + $0x750] sm:$0xff]
  %v2094 = vld [vmem:[#allocation2 + $0x758] sm:$0xff]
  %v2095 = vld [vmem:[#allocation2 + $0x760] sm:$0xff]
  %v2096 = vld [vmem:[#allocation2 + $0x768] sm:$0xff]
  %v2097 = vld [vmem:[#allocation2 + $0x770] sm:$0xff]
  %v2098 = vld [vmem:[#allocation2 + $0x778] sm:$0xff]
  %v2099 = vld [vmem:[#allocation2 + $0x780] sm:$0xff]
  %v2100 = vld [vmem:[#allocation2 + $0x788] sm:$0xff]
  %v2101 = vld [vmem:[#allocation2 + $0x790] sm:$0xff]
  %v2102 = vld [vmem:[#allocation2 + $0x798] sm:$0xff]
  %v2103 = vld [vmem:[#allocation2 + $0x7a0] sm:$0xff]
  %v2104 = vld [vmem:[#allocation2 + $0x7a8] sm:$0xff]
  %v2105 = vld [vmem:[#allocation2 + $0x7b0] sm:$0xff]
  %v2106 = vld [vmem:[#allocation2 + $0x7b8] sm:$0xff]
  %v2107 = vld [vmem:[#allocation2 + $0x7c0] sm:$0xff]
  %v2108 = vld [vmem:[#allocation2 + $0x7c8] sm:$0xff]
  %v2109 = vld [vmem:[#allocation2 + $0x7d0] sm:$0xff]
  %v2110 = vld [vmem:[#allocation2 + $0x7d8] sm:$0xff]
  %v2111 = vld [vmem:[#allocation2 + $0x7e0] sm:$0xff]
  %v2112 = vld [vmem:[#allocation2 + $0x7e8] sm:$0xff]
  %v2113 = vld [vmem:[#allocation2 + $0x7f0] sm:$0xff]
  %v2114 = vld [vmem:[#allocation2 + $0x7f8] sm:$0xff]
  %v2115 = vld [vmem:[%s3 + $0xa] sm:$0xff]
  %v2116 = vld [vmem:[%s3 + $0x12] sm:$0xff]
  %v2119 = vperm.slane %v2115, 0
  %v2120 = vperm.slane %v2115, 1
  %v2121 = vperm.slane %v2115, 2
  %v2122 = vperm.slane %v2115, 3
  %v2123 = vperm.slane %v2115, 4
  %v2124 = vperm.slane %v2115, 5
  %v2125 = vperm.slane %v2115, 6
  %v2126 = vperm.slane %v2115, 7
  %v2127 = vperm.slane %v2116, 0
  %v2128 = vperm.slane %v2116, 1
  %v2129 = vperm.slane %v2116, 2
  %v2130 = vperm.slane %v2116, 3
  %v2131 = vperm.slane %v2116, 4
  %v2132 = vperm.slane %v2116, 5
  %v2133 = vperm.slane %v2116, 6
  %v2134 = vperm.slane %v2116, 7
  %v2407 = vunpack.c.l.b16 %v1859
  %v2408 = vunpack.c.h.b16 %v1859
  %v2409 = vunpack.c.l.b16 %v1860
  %v2410 = vunpack.c.h.b16 %v1860
  %v2411 = vunpack.c.l.b16 %v1861
  %v2412 = vunpack.c.h.b16 %v1861
  %v2413 = vunpack.c.l.b16 %v1862
  %v2414 = vunpack.c.h.b16 %v1862
  %v2415 = vunpack.c.l.b16 %v1863
  %v2416 = vunpack.c.h.b16 %v1863
  %v2417 = vunpack.c.l.b16 %v1864
  %v2418 = vunpack.c.h.b16 %v1864
  %v2419 = vunpack.c.l.b16 %v1865
  %v2420 = vunpack.c.h.b16 %v1865
  %v2421 = vunpack.c.l.b16 %v1866
  %v2422 = vunpack.c.h.b16 %v1866
  %v2423 = vunpack.c.l.b16 %v1867
  %v2424 = vunpack.c.h.b16 %v1867
  %v2425 = vunpack.c.l.b16 %v1868
  %v2426 = vunpack.c.h.b16 %v1868
  %v2427 = vunpack.c.l.b16 %v1869
  %v2428 = vunpack.c.h.b16 %v1869
  %v2429 = vunpack.c.l.b16 %v1870
  %v2430 = vunpack.c.h.b16 %v1870
  %v2431 = vunpack.c.l.b16 %v1871
  %v2432 = vunpack.c.h.b16 %v1871
  %v2433 = vunpack.c.l.b16 %v1872
  %v2434 = vunpack.c.h.b16 %v1872
  %v2435 = vunpack.c.l.b16 %v1873
  %v2436 = vunpack.c.h.b16 %v1873
  %v2437 = vunpack.c.l.b16 %v1874
  %v2438 = vunpack.c.h.b16 %v1874
  %v2439 = vunpack.c.l.b16 %v1875
  %v2440 = vunpack.c.h.b16 %v1875
  %v2441 = vunpack.c.l.b16 %v1876
  %v2442 = vunpack.c.h.b16 %v1876
  %v2443 = vunpack.c.l.b16 %v1877
  %v2444 = vunpack.c.h.b16 %v1877
  %v2445 = vunpack.c.l.b16 %v1878
  %v2446 = vunpack.c.h.b16 %v1878
  %v2447 = vunpack.c.l.b16 %v1879
  %v2448 = vunpack.c.h.b16 %v1879
  %v2449 = vunpack.c.l.b16 %v1880
  %v2450 = vunpack.c.h.b16 %v1880
  %v2451 = vunpack.c.l.b16 %v1881
  %v2452 = vunpack.c.h.b16 %v1881
  %v2453 = vunpack.c.l.b16 %v1882
  %v2454 = vunpack.c.h.b16 %v1882
  %v2455 = vunpack.c.l.b16 %v1883
  %v2456 = vunpack.c.h.b16 %v1883
  %v2457 = vunpack.c.l.b16 %v1884
  %v2458 = vunpack.c.h.b16 %v1884
  %v2459 = vunpack.c.l.b16 %v1885
  %v2460 = vunpack.c.h.b16 %v1885
  %v2461 = vunpack.c.l.b16 %v1886
  %v2462 = vunpack.c.h.b16 %v1886
  %v2463 = vunpack.c.l.b16 %v1887
  %v2464 = vunpack.c.h.b16 %v1887
  %v2465 = vunpack.c.l.b16 %v1888
  %v2466 = vunpack.c.h.b16 %v1888
  %v2467 = vunpack.c.l.b16 %v1889
  %v2468 = vunpack.c.h.b16 %v1889
  %v2469 = vunpack.c.l.b16 %v1890
  %v2470 = vunpack.c.h.b16 %v1890
  %v2471 = vunpack.c.l.b16 %v1891
  %v2472 = vunpack.c.h.b16 %v1891
  %v2473 = vunpack.c.l.b16 %v1892
  %v2474 = vunpack.c.h.b16 %v1892
  %v2475 = vunpack.c.l.b16 %v1893
  %v2476 = vunpack.c.h.b16 %v1893
  %v2477 = vunpack.c.l.b16 %v1894
  %v2478 = vunpack.c.h.b16 %v1894
  %v2479 = vunpack.c.l.b16 %v1895
  %v2480 = vunpack.c.h.b16 %v1895
  %v2481 = vunpack.c.l.b16 %v1896
  %v2482 = vunpack.c.h.b16 %v1896
  %v2483 = vunpack.c.l.b16 %v1897
  %v2484 = vunpack.c.h.b16 %v1897
  %v2485 = vunpack.c.l.b16 %v1898
  %v2486 = vunpack.c.h.b16 %v1898
  %v2487 = vunpack.c.l.b16 %v1899
  %v2488 = vunpack.c.h.b16 %v1899
  %v2489 = vunpack.c.l.b16 %v1900
  %v2490 = vunpack.c.h.b16 %v1900
  %v2491 = vunpack.c.l.b16 %v1901
  %v2492 = vunpack.c.h.b16 %v1901
  %v2493 = vunpack.c.l.b16 %v1902
  %v2494 = vunpack.c.h.b16 %v1902
  %v2495 = vunpack.c.l.b16 %v1903
  %v2496 = vunpack.c.h.b16 %v1903
  %v2497 = vunpack.c.l.b16 %v1904
  %v2498 = vunpack.c.h.b16 %v1904
  %v2499 = vunpack.c.l.b16 %v1905
  %v2500 = vunpack.c.h.b16 %v1905
  %v2501 = vunpack.c.l.b16 %v1906
  %v2502 = vunpack.c.h.b16 %v1906
  %v2503 = vunpack.c.l.b16 %v1907
  %v2504 = vunpack.c.h.b16 %v1907
  %v2505 = vunpack.c.l.b16 %v1908
  %v2506 = vunpack.c.h.b16 %v1908
  %v2507 = vunpack.c.l.b16 %v1909
  %v2508 = vunpack.c.h.b16 %v1909
  %v2509 = vunpack.c.l.b16 %v1910
  %v2510 = vunpack.c.h.b16 %v1910
  %v2511 = vunpack.c.l.b16 %v1911
  %v2512 = vunpack.c.h.b16 %v1911
  %v2513 = vunpack.c.l.b16 %v1912
  %v2514 = vunpack.c.h.b16 %v1912
  %v2515 = vunpack.c.l.b16 %v1913
  %v2516 = vunpack.c.h.b16 %v1913
  %v2517 = vunpack.c.l.b16 %v1914
  %v2518 = vunpack.c.h.b16 %v1914
  %v2519 = vunpack.c.l.b16 %v1915
  %v2520 = vunpack.c.h.b16 %v1915
  %v2521 = vunpack.c.l.b16 %v1916
  %v2522 = vunpack.c.h.b16 %v1916
  %v2523 = vunpack.c.l.b16 %v1917
  %v2524 = vunpack.c.h.b16 %v1917
  %v2525 = vunpack.c.l.b16 %v1918
  %v2526 = vunpack.c.h.b16 %v1918
  %v2527 = vunpack.c.l.b16 %v1919
  %v2528 = vunpack.c.h.b16 %v1919
  %v2529 = vunpack.c.l.b16 %v1920
  %v2530 = vunpack.c.h.b16 %v1920
  %v2531 = vunpack.c.l.b16 %v1921
  %v2532 = vunpack.c.h.b16 %v1921
  %v2533 = vunpack.c.l.b16 %v1922
  %v2534 = vunpack.c.h.b16 %v1922
  %v2535 = vunpack.c.l.b16 %v1923
  %v2536 = vunpack.c.h.b16 %v1923
  %v2537 = vunpack.c.l.b16 %v1924
  %v2538 = vunpack.c.h.b16 %v1924
  %v2539 = vunpack.c.l.b16 %v1925
  %v2540 = vunpack.c.h.b16 %v1925
  %v2541 = vunpack.c.l.b16 %v1926
  %v2542 = vunpack.c.h.b16 %v1926
  %v2543 = vunpack.c.l.b16 %v1927
  %v2544 = vunpack.c.h.b16 %v1927
  %v2545 = vunpack.c.l.b16 %v1928
  %v2546 = vunpack.c.h.b16 %v1928
  %v2547 = vunpack.c.l.b16 %v1929
  %v2548 = vunpack.c.h.b16 %v1929
  %v2549 = vunpack.c.l.b16 %v1930
  %v2550 = vunpack.c.h.b16 %v1930
  %v2551 = vunpack.c.l.b16 %v1931
  %v2552 = vunpack.c.h.b16 %v1931
  %v2553 = vunpack.c.l.b16 %v1932
  %v2554 = vunpack.c.h.b16 %v1932
  %v2555 = vunpack.c.l.b16 %v1933
  %v2556 = vunpack.c.h.b16 %v1933
  %v2557 = vunpack.c.l.b16 %v1934
  %v2558 = vunpack.c.h.b16 %v1934
  %v2559 = vunpack.c.l.b16 %v1935
  %v2560 = vunpack.c.h.b16 %v1935
  %v2561 = vunpack.c.l.b16 %v1936
  %v2562 = vunpack.c.h.b16 %v1936
  %v2563 = vunpack.c.l.b16 %v1937
  %v2564 = vunpack.c.h.b16 %v1937
  %v2565 = vunpack.c.l.b16 %v1938
  %v2566 = vunpack.c.h.b16 %v1938
  %v2567 = vunpack.c.l.b16 %v1939
  %v2568 = vunpack.c.h.b16 %v1939
  %v2569 = vunpack.c.l.b16 %v1940
  %v2570 = vunpack.c.h.b16 %v1940
  %v2571 = vunpack.c.l.b16 %v1941
  %v2572 = vunpack.c.h.b16 %v1941
  %v2573 = vunpack.c.l.b16 %v1942
  %v2574 = vunpack.c.h.b16 %v1942
  %v2575 = vunpack.c.l.b16 %v1943
  %v2576 = vunpack.c.h.b16 %v1943
  %v2577 = vunpack.c.l.b16 %v1944
  %v2578 = vunpack.c.h.b16 %v1944
  %v2579 = vunpack.c.l.b16 %v1945
  %v2580 = vunpack.c.h.b16 %v1945
  %v2581 = vunpack.c.l.b16 %v1946
  %v2582 = vunpack.c.h.b16 %v1946
  %v2583 = vunpack.c.l.b16 %v1947
  %v2584 = vunpack.c.h.b16 %v1947
  %v2585 = vunpack.c.l.b16 %v1948
  %v2586 = vunpack.c.h.b16 %v1948
  %v2587 = vunpack.c.l.b16 %v1949
  %v2588 = vunpack.c.h.b16 %v1949
  %v2589 = vunpack.c.l.b16 %v1950
  %v2590 = vunpack.c.h.b16 %v1950
  %v2591 = vunpack.c.l.b16 %v1951
  %v2592 = vunpack.c.h.b16 %v1951
  %v2593 = vunpack.c.l.b16 %v1952
  %v2594 = vunpack.c.h.b16 %v1952
  %v2595 = vunpack.c.l.b16 %v1953
  %v2596 = vunpack.c.h.b16 %v1953
  %v2597 = vunpack.c.l.b16 %v1954
  %v2598 = vunpack.c.h.b16 %v1954
  %v2599 = vunpack.c.l.b16 %v1955
  %v2600 = vunpack.c.h.b16 %v1955
  %v2601 = vunpack.c.l.b16 %v1956
  %v2602 = vunpack.c.h.b16 %v1956
  %v2603 = vunpack.c.l.b16 %v1957
  %v2604 = vunpack.c.h.b16 %v1957
  %v2605 = vunpack.c.l.b16 %v1958
  %v2606 = vunpack.c.h.b16 %v1958
  %v2607 = vunpack.c.l.b16 %v1959
  %v2608 = vunpack.c.h.b16 %v1959
  %v2609 = vunpack.c.l.b16 %v1960
  %v2610 = vunpack.c.h.b16 %v1960
  %v2611 = vunpack.c.l.b16 %v1961
  %v2612 = vunpack.c.h.b16 %v1961
  %v2613 = vunpack.c.l.b16 %v1962
  %v2614 = vunpack.c.h.b16 %v1962
  %v2615 = vunpack.c.l.b16 %v1963
  %v2616 = vunpack.c.h.b16 %v1963
  %v2617 = vunpack.c.l.b16 %v1964
  %v2618 = vunpack.c.h.b16 %v1964
  %v2619 = vunpack.c.l.b16 %v1965
  %v2620 = vunpack.c.h.b16 %v1965
  %v2621 = vunpack.c.l.b16 %v1966
  %v2622 = vunpack.c.h.b16 %v1966
  %v2623 = vunpack.c.l.b16 %v1967
  %v2624 = vunpack.c.h.b16 %v1967
  %v2625 = vunpack.c.l.b16 %v1968
  %v2626 = vunpack.c.h.b16 %v1968
  %v2627 = vunpack.c.l.b16 %v1969
  %v2628 = vunpack.c.h.b16 %v1969
  %v2629 = vunpack.c.l.b16 %v1970
  %v2630 = vunpack.c.h.b16 %v1970
  %v2631 = vunpack.c.l.b16 %v1971
  %v2632 = vunpack.c.h.b16 %v1971
  %v2633 = vunpack.c.l.b16 %v1972
  %v2634 = vunpack.c.h.b16 %v1972
  %v2635 = vunpack.c.l.b16 %v1973
  %v2636 = vunpack.c.h.b16 %v1973
  %v2637 = vunpack.c.l.b16 %v1974
  %v2638 = vunpack.c.h.b16 %v1974
  %v2639 = vunpack.c.l.b16 %v1975
  %v2640 = vunpack.c.h.b16 %v1975
  %v2641 = vunpack.c.l.b16 %v1976
  %v2642 = vunpack.c.h.b16 %v1976
  %v2643 = vunpack.c.l.b16 %v1977
  %v2644 = vunpack.c.h.b16 %v1977
  %v2645 = vunpack.c.l.b16 %v1978
  %v2646 = vunpack.c.h.b16 %v1978
  %v2647 = vunpack.c.l.b16 %v1979
  %v2648 = vunpack.c.h.b16 %v1979
  %v2649 = vunpack.c.l.b16 %v1980
  %v2650 = vunpack.c.h.b16 %v1980
  %v2651 = vunpack.c.l.b16 %v1981
  %v2652 = vunpack.c.h.b16 %v1981
  %v2653 = vunpack.c.l.b16 %v1982
  %v2654 = vunpack.c.h.b16 %v1982
  %v2655 = vunpack.c.l.b16 %v1983
  %v2656 = vunpack.c.h.b16 %v1983
  %v2657 = vunpack.c.l.b16 %v1984
  %v2658 = vunpack.c.h.b16 %v1984
  %v2659 = vunpack.c.l.b16 %v1985
  %v2660 = vunpack.c.h.b16 %v1985
  %v2661 = vunpack.c.l.b16 %v1986
  %v2662 = vunpack.c.h.b16 %v1986
  %v2663 = vunpack.c.l.b16 %v1987
  %v2664 = vunpack.c.h.b16 %v1987
  %v2665 = vunpack.c.l.b16 %v1988
  %v2666 = vunpack.c.h.b16 %v1988
  %v2667 = vunpack.c.l.b16 %v1989
  %v2668 = vunpack.c.h.b16 %v1989
  %v2669 = vunpack.c.l.b16 %v1990
  %v2670 = vunpack.c.h.b16 %v1990
  %v2671 = vunpack.c.l.b16 %v1991
  %v2672 = vunpack.c.h.b16 %v1991
  %v2673 = vunpack.c.l.b16 %v1992
  %v2674 = vunpack.c.h.b16 %v1992
  %v2675 = vunpack.c.l.b16 %v1993
  %v2676 = vunpack.c.h.b16 %v1993
  %v2677 = vunpack.c.l.b16 %v1994
  %v2678 = vunpack.c.h.b16 %v1994
  %v2679 = vunpack.c.l.b16 %v1995
  %v2680 = vunpack.c.h.b16 %v1995
  %v2681 = vunpack.c.l.b16 %v1996
  %v2682 = vunpack.c.h.b16 %v1996
  %v2683 = vunpack.c.l.b16 %v1997
  %v2684 = vunpack.c.h.b16 %v1997
  %v2685 = vunpack.c.l.b16 %v1998
  %v2686 = vunpack.c.h.b16 %v1998
  %v2687 = vunpack.c.l.b16 %v1999
  %v2688 = vunpack.c.h.b16 %v1999
  %v2689 = vunpack.c.l.b16 %v2000
  %v2690 = vunpack.c.h.b16 %v2000
  %v2691 = vunpack.c.l.b16 %v2001
  %v2692 = vunpack.c.h.b16 %v2001
  %v2693 = vunpack.c.l.b16 %v2002
  %v2694 = vunpack.c.h.b16 %v2002
  %v2695 = vunpack.c.l.b16 %v2003
  %v2696 = vunpack.c.h.b16 %v2003
  %v2697 = vunpack.c.l.b16 %v2004
  %v2698 = vunpack.c.h.b16 %v2004
  %v2699 = vunpack.c.l.b16 %v2005
  %v2700 = vunpack.c.h.b16 %v2005
  %v2701 = vunpack.c.l.b16 %v2006
  %v2702 = vunpack.c.h.b16 %v2006
  %v2703 = vunpack.c.l.b16 %v2007
  %v2704 = vunpack.c.h.b16 %v2007
  %v2705 = vunpack.c.l.b16 %v2008
  %v2706 = vunpack.c.h.b16 %v2008
  %v2707 = vunpack.c.l.b16 %v2009
  %v2708 = vunpack.c.h.b16 %v2009
  %v2709 = vunpack.c.l.b16 %v2010
  %v2710 = vunpack.c.h.b16 %v2010
  %v2711 = vunpack.c.l.b16 %v2011
  %v2712 = vunpack.c.h.b16 %v2011
  %v2713 = vunpack.c.l.b16 %v2012
  %v2714 = vunpack.c.h.b16 %v2012
  %v2715 = vunpack.c.l.b16 %v2013
  %v2716 = vunpack.c.h.b16 %v2013
  %v2717 = vunpack.c.l.b16 %v2014
  %v2718 = vunpack.c.h.b16 %v2014
  %v2719 = vunpack.c.l.b16 %v2015
  %v2720 = vunpack.c.h.b16 %v2015
  %v2721 = vunpack.c.l.b16 %v2016
  %v2722 = vunpack.c.h.b16 %v2016
  %v2723 = vunpack.c.l.b16 %v2017
  %v2724 = vunpack.c.h.b16 %v2017
  %v2725 = vunpack.c.l.b16 %v2018
  %v2726 = vunpack.c.h.b16 %v2018
  %v2727 = vunpack.c.l.b16 %v2019
  %v2728 = vunpack.c.h.b16 %v2019
  %v2729 = vunpack.c.l.b16 %v2020
  %v2730 = vunpack.c.h.b16 %v2020
  %v2731 = vunpack.c.l.b16 %v2021
  %v2732 = vunpack.c.h.b16 %v2021
  %v2733 = vunpack.c.l.b16 %v2022
  %v2734 = vunpack.c.h.b16 %v2022
  %v2735 = vunpack.c.l.b16 %v2023
  %v2736 = vunpack.c.h.b16 %v2023
  %v2737 = vunpack.c.l.b16 %v2024
  %v2738 = vunpack.c.h.b16 %v2024
  %v2739 = vunpack.c.l.b16 %v2025
  %v2740 = vunpack.c.h.b16 %v2025
  %v2741 = vunpack.c.l.b16 %v2026
  %v2742 = vunpack.c.h.b16 %v2026
  %v2743 = vunpack.c.l.b16 %v2027
  %v2744 = vunpack.c.h.b16 %v2027
  %v2745 = vunpack.c.l.b16 %v2028
  %v2746 = vunpack.c.h.b16 %v2028
  %v2747 = vunpack.c.l.b16 %v2029
  %v2748 = vunpack.c.h.b16 %v2029
  %v2749 = vunpack.c.l.b16 %v2030
  %v2750 = vunpack.c.h.b16 %v2030
  %v2751 = vunpack.c.l.b16 %v2031
  %v2752 = vunpack.c.h.b16 %v2031
  %v2753 = vunpack.c.l.b16 %v2032
  %v2754 = vunpack.c.h.b16 %v2032
  %v2755 = vunpack.c.l.b16 %v2033
  %v2756 = vunpack.c.h.b16 %v2033
  %v2757 = vunpack.c.l.b16 %v2034
  %v2758 = vunpack.c.h.b16 %v2034
  %v2759 = vunpack.c.l.b16 %v2035
  %v2760 = vunpack.c.h.b16 %v2035
  %v2761 = vunpack.c.l.b16 %v2036
  %v2762 = vunpack.c.h.b16 %v2036
  %v2763 = vunpack.c.l.b16 %v2037
  %v2764 = vunpack.c.h.b16 %v2037
  %v2765 = vunpack.c.l.b16 %v2038
  %v2766 = vunpack.c.h.b16 %v2038
  %v2767 = vunpack.c.l.b16 %v2039
  %v2768 = vunpack.c.h.b16 %v2039
  %v2769 = vunpack.c.l.b16 %v2040
  %v2770 = vunpack.c.h.b16 %v2040
  %v2771 = vunpack.c.l.b16 %v2041
  %v2772 = vunpack.c.h.b16 %v2041
  %v2773 = vunpack.c.l.b16 %v2042
  %v2774 = vunpack.c.h.b16 %v2042
  %v2775 = vunpack.c.l.b16 %v2043
  %v2776 = vunpack.c.h.b16 %v2043
  %v2777 = vunpack.c.l.b16 %v2044
  %v2778 = vunpack.c.h.b16 %v2044
  %v2779 = vunpack.c.l.b16 %v2045
  %v2780 = vunpack.c.h.b16 %v2045
  %v2781 = vunpack.c.l.b16 %v2046
  %v2782 = vunpack.c.h.b16 %v2046
  %v2783 = vunpack.c.l.b16 %v2047
  %v2784 = vunpack.c.h.b16 %v2047
  %v2785 = vunpack.c.l.b16 %v2048
  %v2786 = vunpack.c.h.b16 %v2048
  %v2787 = vunpack.c.l.b16 %v2049
  %v2788 = vunpack.c.h.b16 %v2049
  %v2789 = vunpack.c.l.b16 %v2050
  %v2790 = vunpack.c.h.b16 %v2050
  %v2791 = vunpack.c.l.b16 %v2051
  %v2792 = vunpack.c.h.b16 %v2051
  %v2793 = vunpack.c.l.b16 %v2052
  %v2794 = vunpack.c.h.b16 %v2052
  %v2795 = vunpack.c.l.b16 %v2053
  %v2796 = vunpack.c.h.b16 %v2053
  %v2797 = vunpack.c.l.b16 %v2054
  %v2798 = vunpack.c.h.b16 %v2054
  %v2799 = vunpack.c.l.b16 %v2055
  %v2800 = vunpack.c.h.b16 %v2055
  %v2801 = vunpack.c.l.b16 %v2056
  %v2802 = vunpack.c.h.b16 %v2056
  %v2803 = vunpack.c.l.b16 %v2057
  %v2804 = vunpack.c.h.b16 %v2057
  %v2805 = vunpack.c.l.b16 %v2058
  %v2806 = vunpack.c.h.b16 %v2058
  %v2807 = vunpack.c.l.b16 %v2059
  %v2808 = vunpack.c.h.b16 %v2059
  %v2809 = vunpack.c.l.b16 %v2060
  %v2810 = vunpack.c.h.b16 %v2060
  %v2811 = vunpack.c.l.b16 %v2061
  %v2812 = vunpack.c.h.b16 %v2061
  %v2813 = vunpack.c.l.b16 %v2062
  %v2814 = vunpack.c.h.b16 %v2062
  %v2815 = vunpack.c.l.b16 %v2063
  %v2816 = vunpack.c.h.b16 %v2063
  %v2817 = vunpack.c.l.b16 %v2064
  %v2818 = vunpack.c.h.b16 %v2064
  %v2819 = vunpack.c.l.b16 %v2065
  %v2820 = vunpack.c.h.b16 %v2065
  %v2821 = vunpack.c.l.b16 %v2066
  %v2822 = vunpack.c.h.b16 %v2066
  %v2823 = vunpack.c.l.b16 %v2067
  %v2824 = vunpack.c.h.b16 %v2067
  %v2825 = vunpack.c.l.b16 %v2068
  %v2826 = vunpack.c.h.b16 %v2068
  %v2827 = vunpack.c.l.b16 %v2069
  %v2828 = vunpack.c.h.b16 %v2069
  %v2829 = vunpack.c.l.b16 %v2070
  %v2830 = vunpack.c.h.b16 %v2070
  %v2831 = vunpack.c.l.b16 %v2071
  %v2832 = vunpack.c.h.b16 %v2071
  %v2833 = vunpack.c.l.b16 %v2072
  %v2834 = vunpack.c.h.b16 %v2072
  %v2835 = vunpack.c.l.b16 %v2073
  %v2836 = vunpack.c.h.b16 %v2073
  %v2837 = vunpack.c.l.b16 %v2074
  %v2838 = vunpack.c.h.b16 %v2074
  %v2839 = vunpack.c.l.b16 %v2075
  %v2840 = vunpack.c.h.b16 %v2075
  %v2841 = vunpack.c.l.b16 %v2076
  %v2842 = vunpack.c.h.b16 %v2076
  %v2843 = vunpack.c.l.b16 %v2077
  %v2844 = vunpack.c.h.b16 %v2077
  %v2845 = vunpack.c.l.b16 %v2078
  %v2846 = vunpack.c.h.b16 %v2078
  %v2847 = vunpack.c.l.b16 %v2079
  %v2848 = vunpack.c.h.b16 %v2079
  %v2849 = vunpack.c.l.b16 %v2080
  %v2850 = vunpack.c.h.b16 %v2080
  %v2851 = vunpack.c.l.b16 %v2081
  %v2852 = vunpack.c.h.b16 %v2081
  %v2853 = vunpack.c.l.b16 %v2082
  %v2854 = vunpack.c.h.b16 %v2082
  %v2855 = vunpack.c.l.b16 %v2083
  %v2856 = vunpack.c.h.b16 %v2083
  %v2857 = vunpack.c.l.b16 %v2084
  %v2858 = vunpack.c.h.b16 %v2084
  %v2859 = vunpack.c.l.b16 %v2085
  %v2860 = vunpack.c.h.b16 %v2085
  %v2861 = vunpack.c.l.b16 %v2086
  %v2862 = vunpack.c.h.b16 %v2086
  %v2863 = vunpack.c.l.b16 %v2087
  %v2864 = vunpack.c.h.b16 %v2087
  %v2865 = vunpack.c.l.b16 %v2088
  %v2866 = vunpack.c.h.b16 %v2088
  %v2867 = vunpack.c.l.b16 %v2089
  %v2868 = vunpack.c.h.b16 %v2089
  %v2869 = vunpack.c.l.b16 %v2090
  %v2870 = vunpack.c.h.b16 %v2090
  %v2871 = vunpack.c.l.b16 %v2091
  %v2872 = vunpack.c.h.b16 %v2091
  %v2873 = vunpack.c.l.b16 %v2092
  %v2874 = vunpack.c.h.b16 %v2092
  %v2875 = vunpack.c.l.b16 %v2093
  %v2876 = vunpack.c.h.b16 %v2093
  %v2877 = vunpack.c.l.b16 %v2094
  %v2878 = vunpack.c.h.b16 %v2094
  %v2879 = vunpack.c.l.b16 %v2095
  %v2880 = vunpack.c.h.b16 %v2095
  %v2881 = vunpack.c.l.b16 %v2096
  %v2882 = vunpack.c.h.b16 %v2096
  %v2883 = vunpack.c.l.b16 %v2097
  %v2884 = vunpack.c.h.b16 %v2097
  %v2885 = vunpack.c.l.b16 %v2098
  %v2886 = vunpack.c.h.b16 %v2098
  %v2887 = vunpack.c.l.b16 %v2099
  %v2888 = vunpack.c.h.b16 %v2099
  %v2889 = vunpack.c.l.b16 %v2100
  %v2890 = vunpack.c.h.b16 %v2100
  %v2891 = vunpack.c.l.b16 %v2101
  %v2892 = vunpack.c.h.b16 %v2101
  %v2893 = vunpack.c.l.b16 %v2102
  %v2894 = vunpack.c.h.b16 %v2102
  %v2895 = vunpack.c.l.b16 %v2103
  %v2896 = vunpack.c.h.b16 %v2103
  %v2897 = vunpack.c.l.b16 %v2104
  %v2898 = vunpack.c.h.b16 %v2104
  %v2899 = vunpack.c.l.b16 %v2105
  %v2900 = vunpack.c.h.b16 %v2105
  %v2901 = vunpack.c.l.b16 %v2106
  %v2902 = vunpack.c.h.b16 %v2106
  %v2903 = vunpack.c.l.b16 %v2107
  %v2904 = vunpack.c.h.b16 %v2107
  %v2905 = vunpack.c.l.b16 %v2108
  %v2906 = vunpack.c.h.b16 %v2108
  %v2907 = vunpack.c.l.b16 %v2109
  %v2908 = vunpack.c.h.b16 %v2109
  %v2909 = vunpack.c.l.b16 %v2110
  %v2910 = vunpack.c.h.b16 %v2110
  %v2911 = vunpack.c.l.b16 %v2111
  %v2912 = vunpack.c.h.b16 %v2111
  %v2913 = vunpack.c.l.b16 %v2112
  %v2914 = vunpack.c.h.b16 %v2112
  %v2915 = vunpack.c.l.b16 %v2113
  %v2916 = vunpack.c.h.b16 %v2113
  %v2917 = vunpack.c.l.b16 %v2114
  %v2918 = vunpack.c.h.b16 %v2114
  %v2919 = vpack.c.b16 %v2423, %v2407
  %v2920 = vpack.c.b16 %v2424, %v2408
  %v2921 = vpack.c.b16 %v2425, %v2409
  %v2922 = vpack.c.b16 %v2426, %v2410
  %v2923 = vpack.c.b16 %v2427, %v2411
  %v2924 = vpack.c.b16 %v2428, %v2412
  %v2925 = vpack.c.b16 %v2429, %v2413
  %v2926 = vpack.c.b16 %v2430, %v2414
  %v2927 = vpack.c.b16 %v2431, %v2415
  %v2928 = vpack.c.b16 %v2432, %v2416
  %v2929 = vpack.c.b16 %v2433, %v2417
  %v2930 = vpack.c.b16 %v2434, %v2418
  %v2931 = vpack.c.b16 %v2435, %v2419
  %v2932 = vpack.c.b16 %v2436, %v2420
  %v2933 = vpack.c.b16 %v2437, %v2421
  %v2934 = vpack.c.b16 %v2438, %v2422
  %v2935 = vpack.c.b16 %v2455, %v2439
  %v2936 = vpack.c.b16 %v2456, %v2440
  %v2937 = vpack.c.b16 %v2457, %v2441
  %v2938 = vpack.c.b16 %v2458, %v2442
  %v2939 = vpack.c.b16 %v2459, %v2443
  %v2940 = vpack.c.b16 %v2460, %v2444
  %v2941 = vpack.c.b16 %v2461, %v2445
  %v2942 = vpack.c.b16 %v2462, %v2446
  %v2943 = vpack.c.b16 %v2463, %v2447
  %v2944 = vpack.c.b16 %v2464, %v2448
  %v2945 = vpack.c.b16 %v2465, %v2449
  %v2946 = vpack.c.b16 %v2466, %v2450
  %v2947 = vpack.c.b16 %v2467, %v2451
  %v2948 = vpack.c.b16 %v2468, %v2452
  %v2949 = vpack.c.b16 %v2469, %v2453
  %v2950 = vpack.c.b16 %v2470, %v2454
  %v2951 = vpack.c.b16 %v2487, %v2471
  %v2952 = vpack.c.b16 %v2488, %v2472
  %v2953 = vpack.c.b16 %v2489, %v2473
  %v2954 = vpack.c.b16 %v2490, %v2474
  %v2955 = vpack.c.b16 %v2491, %v2475
  %v2956 = vpack.c.b16 %v2492, %v2476
  %v2957 = vpack.c.b16 %v2493, %v2477
  %v2958 = vpack.c.b16 %v2494, %v2478
  %v2959 = vpack.c.b16 %v2495, %v2479
  %v2960 = vpack.c.b16 %v2496, %v2480
  %v2961 = vpack.c.b16 %v2497, %v2481
  %v2962 = vpack.c.b16 %v2498, %v2482
  %v2963 = vpack.c.b16 %v2499, %v2483
  %v2964 = vpack.c.b16 %v2500, %v2484
  %v2965 = vpack.c.b16 %v2501, %v2485
  %v2966 = vpack.c.b16 %v2502, %v2486
  %v2967 = vpack.c.b16 %v2519, %v2503
  %v2968 = vpack.c.b16 %v2520, %v2504
  %v2969 = vpack.c.b16 %v2521, %v2505
  %v2970 = vpack.c.b16 %v2522, %v2506
  %v2971 = vpack.c.b16 %v2523, %v2507
  %v2972 = vpack.c.b16 %v2524, %v2508
  %v2973 = vpack.c.b16 %v2525, %v2509
  %v2974 = vpack.c.b16 %v2526, %v2510
  %v2975 = vpack.c.b16 %v2527, %v2511
  %v2976 = vpack.c.b16 %v2528, %v2512
  %v2977 = vpack.c.b16 %v2529, %v2513
  %v2978 = vpack.c.b16 %v2530, %v2514
  %v2979 = vpack.c.b16 %v2531, %v2515
  %v2980 = vpack.c.b16 %v2532, %v2516
  %v2981 = vpack.c.b16 %v2533, %v2517
  %v2982 = vpack.c.b16 %v2534, %v2518
  %v2983 = vpack.c.b16 %v2551, %v2535
  %v2984 = vpack.c.b16 %v2552, %v2536
  %v2985 = vpack.c.b16 %v2553, %v2537
  %v2986 = vpack.c.b16 %v2554, %v2538
  %v2987 = vpack.c.b16 %v2555, %v2539
  %v2988 = vpack.c.b16 %v2556, %v2540
  %v2989 = vpack.c.b16 %v2557, %v2541
  %v2990 = vpack.c.b16 %v2558, %v2542
  %v2991 = vpack.c.b16 %v2559, %v2543
  %v2992 = vpack.c.b16 %v2560, %v2544
  %v2993 = vpack.c.b16 %v2561, %v2545
  %v2994 = vpack.c.b16 %v2562, %v2546
  %v2995 = vpack.c.b16 %v2563, %v2547
  %v2996 = vpack.c.b16 %v2564, %v2548
  %v2997 = vpack.c.b16 %v2565, %v2549
  %v2998 = vpack.c.b16 %v2566, %v2550
  %v2999 = vpack.c.b16 %v2583, %v2567
  %v3000 = vpack.c.b16 %v2584, %v2568
  %v3001 = vpack.c.b16 %v2585, %v2569
  %v3002 = vpack.c.b16 %v2586, %v2570
  %v3003 = vpack.c.b16 %v2587, %v2571
  %v3004 = vpack.c.b16 %v2588, %v2572
  %v3005 = vpack.c.b16 %v2589, %v2573
  %v3006 = vpack.c.b16 %v2590, %v2574
  %v3007 = vpack.c.b16 %v2591, %v2575
  %v3008 = vpack.c.b16 %v2592, %v2576
  %v3009 = vpack.c.b16 %v2593, %v2577
  %v3010 = vpack.c.b16 %v2594, %v2578
  %v3011 = vpack.c.b16 %v2595, %v2579
  %v3012 = vpack.c.b16 %v2596, %v2580
  %v3013 = vpack.c.b16 %v2597, %v2581
  %v3014 = vpack.c.b16 %v2598, %v2582
  %v3015 = vpack.c.b16 %v2615, %v2599
  %v3016 = vpack.c.b16 %v2616, %v2600
  %v3017 = vpack.c.b16 %v2617, %v2601
  %v3018 = vpack.c.b16 %v2618, %v2602
  %v3019 = vpack.c.b16 %v2619, %v2603
  %v3020 = vpack.c.b16 %v2620, %v2604
  %v3021 = vpack.c.b16 %v2621, %v2605
  %v3022 = vpack.c.b16 %v2622, %v2606
  %v3023 = vpack.c.b16 %v2623, %v2607
  %v3024 = vpack.c.b16 %v2624, %v2608
  %v3025 = vpack.c.b16 %v2625, %v2609
  %v3026 = vpack.c.b16 %v2626, %v2610
  %v3027 = vpack.c.b16 %v2627, %v2611
  %v3028 = vpack.c.b16 %v2628, %v2612
  %v3029 = vpack.c.b16 %v2629, %v2613
  %v3030 = vpack.c.b16 %v2630, %v2614
  %v3031 = vpack.c.b16 %v2647, %v2631
  %v3032 = vpack.c.b16 %v2648, %v2632
  %v3033 = vpack.c.b16 %v2649, %v2633
  %v3034 = vpack.c.b16 %v2650, %v2634
  %v3035 = vpack.c.b16 %v2651, %v2635
  %v3036 = vpack.c.b16 %v2652, %v2636
  %v3037 = vpack.c.b16 %v2653, %v2637
  %v3038 = vpack.c.b16 %v2654, %v2638
  %v3039 = vpack.c.b16 %v2655, %v2639
  %v3040 = vpack.c.b16 %v2656, %v2640
  %v3041 = vpack.c.b16 %v2657, %v2641
  %v3042 = vpack.c.b16 %v2658, %v2642
  %v3043 = vpack.c.b16 %v2659, %v2643
  %v3044 = vpack.c.b16 %v2660, %v2644
  %v3045 = vpack.c.b16 %v2661, %v2645
  %v3046 = vpack.c.b16 %v2662, %v2646
  %v3047 = vpack.c.b16 %v2679, %v2663
  %v3048 = vpack.c.b16 %v2680, %v2664
  %v3049 = vpack.c.b16 %v2681, %v2665
  %v3050 = vpack.c.b16 %v2682, %v2666
  %v3051 = vpack.c.b16 %v2683, %v2667
  %v3052 = vpack.c.b16 %v2684, %v2668
  %v3053 = vpack.c.b16 %v2685, %v2669
  %v3054 = vpack.c.b16 %v2686, %v2670
  %v3055 = vpack.c.b16 %v2687, %v2671
  %v3056 = vpack.c.b16 %v2688, %v2672
  %v3057 = vpack.c.b16 %v2689, %v2673
  %v3058 = vpack.c.b16 %v2690, %v2674
  %v3059 = vpack.c.b16 %v2691, %v2675
  %v3060 = vpack.c.b16 %v2692, %v2676
  %v3061 = vpack.c.b16 %v2693, %v2677
  %v3062 = vpack.c.b16 %v2694, %v2678
  %v3063 = vpack.c.b16 %v2711, %v2695
  %v3064 = vpack.c.b16 %v2712, %v2696
  %v3065 = vpack.c.b16 %v2713, %v2697
  %v3066 = vpack.c.b16 %v2714, %v2698
  %v3067 = vpack.c.b16 %v2715, %v2699
  %v3068 = vpack.c.b16 %v2716, %v2700
  %v3069 = vpack.c.b16 %v2717, %v2701
  %v3070 = vpack.c.b16 %v2718, %v2702
  %v3071 = vpack.c.b16 %v2719, %v2703
  %v3072 = vpack.c.b16 %v2720, %v2704
  %v3073 = vpack.c.b16 %v2721, %v2705
  %v3074 = vpack.c.b16 %v2722, %v2706
  %v3075 = vpack.c.b16 %v2723, %v2707
  %v3076 = vpack.c.b16 %v2724, %v2708
  %v3077 = vpack.c.b16 %v2725, %v2709
  %v3078 = vpack.c.b16 %v2726, %v2710
  %v3079 = vpack.c.b16 %v2743, %v2727
  %v3080 = vpack.c.b16 %v2744, %v2728
  %v3081 = vpack.c.b16 %v2745, %v2729
  %v3082 = vpack.c.b16 %v2746, %v2730
  %v3083 = vpack.c.b16 %v2747, %v2731
  %v3084 = vpack.c.b16 %v2748, %v2732
  %v3085 = vpack.c.b16 %v2749, %v2733
  %v3086 = vpack.c.b16 %v2750, %v2734
  %v3087 = vpack.c.b16 %v2751, %v2735
  %v3088 = vpack.c.b16 %v2752, %v2736
  %v3089 = vpack.c.b16 %v2753, %v2737
  %v3090 = vpack.c.b16 %v2754, %v2738
  %v3091 = vpack.c.b16 %v2755, %v2739
  %v3092 = vpack.c.b16 %v2756, %v2740
  %v3093 = vpack.c.b16 %v2757, %v2741
  %v3094 = vpack.c.b16 %v2758, %v2742
  %v3095 = vpack.c.b16 %v2775, %v2759
  %v3096 = vpack.c.b16 %v2776, %v2760
  %v3097 = vpack.c.b16 %v2777, %v2761
  %v3098 = vpack.c.b16 %v2778, %v2762
  %v3099 = vpack.c.b16 %v2779, %v2763
  %v3100 = vpack.c.b16 %v2780, %v2764
  %v3101 = vpack.c.b16 %v2781, %v2765
  %v3102 = vpack.c.b16 %v2782, %v2766
  %v3103 = vpack.c.b16 %v2783, %v2767
  %v3104 = vpack.c.b16 %v2784, %v2768
  %v3105 = vpack.c.b16 %v2785, %v2769
  %v3106 = vpack.c.b16 %v2786, %v2770
  %v3107 = vpack.c.b16 %v2787, %v2771
  %v3108 = vpack.c.b16 %v2788, %v2772
  %v3109 = vpack.c.b16 %v2789, %v2773
  %v3110 = vpack.c.b16 %v2790, %v2774
  %v3111 = vpack.c.b16 %v2807, %v2791
  %v3112 = vpack.c.b16 %v2808, %v2792
  %v3113 = vpack.c.b16 %v2809, %v2793
  %v3114 = vpack.c.b16 %v2810, %v2794
  %v3115 = vpack.c.b16 %v2811, %v2795
  %v3116 = vpack.c.b16 %v2812, %v2796
  %v3117 = vpack.c.b16 %v2813, %v2797
  %v3118 = vpack.c.b16 %v2814, %v2798
  %v3119 = vpack.c.b16 %v2815, %v2799
  %v3120 = vpack.c.b16 %v2816, %v2800
  %v3121 = vpack.c.b16 %v2817, %v2801
  %v3122 = vpack.c.b16 %v2818, %v2802
  %v3123 = vpack.c.b16 %v2819, %v2803
  %v3124 = vpack.c.b16 %v2820, %v2804
  %v3125 = vpack.c.b16 %v2821, %v2805
  %v3126 = vpack.c.b16 %v2822, %v2806
  %v3127 = vpack.c.b16 %v2839, %v2823
  %v3128 = vpack.c.b16 %v2840, %v2824
  %v3129 = vpack.c.b16 %v2841, %v2825
  %v3130 = vpack.c.b16 %v2842, %v2826
  %v3131 = vpack.c.b16 %v2843, %v2827
  %v3132 = vpack.c.b16 %v2844, %v2828
  %v3133 = vpack.c.b16 %v2845, %v2829
  %v3134 = vpack.c.b16 %v2846, %v2830
  %v3135 = vpack.c.b16 %v2847, %v2831
  %v3136 = vpack.c.b16 %v2848, %v2832
  %v3137 = vpack.c.b16 %v2849, %v2833
  %v3138 = vpack.c.b16 %v2850, %v2834
  %v3139 = vpack.c.b16 %v2851, %v2835
  %v3140 = vpack.c.b16 %v2852, %v2836
  %v3141 = vpack.c.b16 %v2853, %v2837
  %v3142 = vpack.c.b16 %v2854, %v2838
  %v3143 = vpack.c.b16 %v2871, %v2855
  %v3144 = vpack.c.b16 %v2872, %v2856
  %v3145 = vpack.c.b16 %v2873, %v2857
  %v3146 = vpack.c.b16 %v2874, %v2858
  %v3147 = vpack.c.b16 %v2875, %v2859
  %v3148 = vpack.c.b16 %v2876, %v2860
  %v3149 = vpack.c.b16 %v2877, %v2861
  %v3150 = vpack.c.b16 %v2878, %v2862
  %v3151 = vpack.c.b16 %v2879, %v2863
  %v3152 = vpack.c.b16 %v2880, %v2864
  %v3153 = vpack.c.b16 %v2881, %v2865
  %v3154 = vpack.c.b16 %v2882, %v2866
  %v3155 = vpack.c.b16 %v2883, %v2867
  %v3156 = vpack.c.b16 %v2884, %v2868
  %v3157 = vpack.c.b16 %v2885, %v2869
  %v3158 = vpack.c.b16 %v2886, %v2870
  %v3159 = vpack.c.b16 %v2903, %v2887
  %v3160 = vpack.c.b16 %v2904, %v2888
  %v3161 = vpack.c.b16 %v2905, %v2889
  %v3162 = vpack.c.b16 %v2906, %v2890
  %v3163 = vpack.c.b16 %v2907, %v2891
  %v3164 = vpack.c.b16 %v2908, %v2892
  %v3165 = vpack.c.b16 %v2909, %v2893
  %v3166 = vpack.c.b16 %v2910, %v2894
  %v3167 = vpack.c.b16 %v2911, %v2895
  %v3168 = vpack.c.b16 %v2912, %v2896
  %v3169 = vpack.c.b16 %v2913, %v2897
  %v3170 = vpack.c.b16 %v2914, %v2898
  %v3171 = vpack.c.b16 %v2915, %v2899
  %v3172 = vpack.c.b16 %v2916, %v2900
  %v3173 = vpack.c.b16 %v2917, %v2901
  %v3174 = vpack.c.b16 %v2918, %v2902
  %3431 = vmatpush.bf16.msra.mxu0 %v3031
  %3432 = vmatpush.bf16.msra.mxu0 %v3015
  %3433 = vmatpush.bf16.msra.mxu0 %v2999
  %3434 = vmatpush.bf16.msra.mxu0 %v2983
  %3435 = vmatpush.bf16.msra.mxu0 %v2967
  %3436 = vmatpush.bf16.msra.mxu0 %v2951
  %3437 = vmatpush.bf16.msra.mxu0 %v2935
  %3438 = vmatpush.bf16.msra.mxu0 %v2919
  %3439 = vmatmul.bf16.gmra.mxu0 %v1853
  %v3440 = vpop.f32.mrf.mxu0
  %v3441 = vadd.f32 %v2119, %v3440
  %v3442 = vpop.f32.mrf.mxu0
  %3443 = vdwg.mxu0
  %3444 = vmatpush.bf16.msra.mxu0 %v3159
  %3445 = vmatpush.bf16.msra.mxu0 %v3143
  %3446 = vmatpush.bf16.msra.mxu0 %v3127
  %3447 = vmatpush.bf16.msra.mxu0 %v3111
  %3448 = vmatpush.bf16.msra.mxu0 %v3095
  %3449 = vmatpush.bf16.msra.mxu0 %v3079
  %3450 = vmatpush.bf16.msra.mxu0 %v3063
  %3451 = vmatpush.bf16.msra.mxu0 %v3047
  %3452 = vmatmul.bf16.gmra.mxu0 %v1854
  %v3453 = vpop.f32.mrf.mxu0
  %v3454 = vadd.f32 %v3441, %v3453
  %v3455 = vpop.f32.mrf.mxu0
  %3456 = vdwg.mxu0
  %3457 = vmatpush.bf16.msra.mxu0 %v3032
  %3458 = vmatpush.bf16.msra.mxu0 %v3016
  %3459 = vmatpush.bf16.msra.mxu0 %v3000
  %3460 = vmatpush.bf16.msra.mxu0 %v2984
  %3461 = vmatpush.bf16.msra.mxu0 %v2968
  %3462 = vmatpush.bf16.msra.mxu0 %v2952
  %3463 = vmatpush.bf16.msra.mxu0 %v2936
  %3464 = vmatpush.bf16.msra.mxu0 %v2920
  %3465 = vmatmul.bf16.gmra.mxu0 %v1853
  %v3466 = vpop.f32.mrf.mxu0
  %v3467 = vadd.f32 %v2120, %v3466
  %v3468 = vpop.f32.mrf.mxu0
  %3469 = vdwg.mxu0
  %3470 = vmatpush.bf16.msra.mxu0 %v3160
  %3471 = vmatpush.bf16.msra.mxu0 %v3144
  %3472 = vmatpush.bf16.msra.mxu0 %v3128
  %3473 = vmatpush.bf16.msra.mxu0 %v3112
  %3474 = vmatpush.bf16.msra.mxu0 %v3096
  %3475 = vmatpush.bf16.msra.mxu0 %v3080
  %3476 = vmatpush.bf16.msra.mxu0 %v3064
  %3477 = vmatpush.bf16.msra.mxu0 %v3048
  %3478 = vmatmul.bf16.gmra.mxu0 %v1854
  %v3479 = vpop.f32.mrf.mxu0
  %v3480 = vadd.f32 %v3467, %v3479
  %v3481 = vpop.f32.mrf.mxu0
  %3482 = vdwg.mxu0
  %3483 = vmatpush.bf16.msra.mxu0 %v3033
  %3484 = vmatpush.bf16.msra.mxu0 %v3017
  %3485 = vmatpush.bf16.msra.mxu0 %v3001
  %3486 = vmatpush.bf16.msra.mxu0 %v2985
  %3487 = vmatpush.bf16.msra.mxu0 %v2969
  %3488 = vmatpush.bf16.msra.mxu0 %v2953
  %3489 = vmatpush.bf16.msra.mxu0 %v2937
  %3490 = vmatpush.bf16.msra.mxu0 %v2921
  %3491 = vmatmul.bf16.gmra.mxu0 %v1853
  %v3492 = vpop.f32.mrf.mxu0
  %v3493 = vadd.f32 %v2121, %v3492
  %v3494 = vpop.f32.mrf.mxu0
  %3495 = vdwg.mxu0
  %3496 = vmatpush.bf16.msra.mxu0 %v3161
  %3497 = vmatpush.bf16.msra.mxu0 %v3145
  %3498 = vmatpush.bf16.msra.mxu0 %v3129
  %3499 = vmatpush.bf16.msra.mxu0 %v3113
  %3500 = vmatpush.bf16.msra.mxu0 %v3097
  %3501 = vmatpush.bf16.msra.mxu0 %v3081
  %3502 = vmatpush.bf16.msra.mxu0 %v3065
  %3503 = vmatpush.bf16.msra.mxu0 %v3049
  %3504 = vmatmul.bf16.gmra.mxu0 %v1854
  %v3505 = vpop.f32.mrf.mxu0
  %v3506 = vadd.f32 %v3493, %v3505
  %v3507 = vpop.f32.mrf.mxu0
  %3508 = vdwg.mxu0
  %3509 = vmatpush.bf16.msra.mxu0 %v3034
  %3510 = vmatpush.bf16.msra.mxu0 %v3018
  %3511 = vmatpush.bf16.msra.mxu0 %v3002
  %3512 = vmatpush.bf16.msra.mxu0 %v2986
  %3513 = vmatpush.bf16.msra.mxu0 %v2970
  %3514 = vmatpush.bf16.msra.mxu0 %v2954
  %3515 = vmatpush.bf16.msra.mxu0 %v2938
  %3516 = vmatpush.bf16.msra.mxu0 %v2922
  %3517 = vmatmul.bf16.gmra.mxu0 %v1853
  %v3518 = vpop.f32.mrf.mxu0
  %v3519 = vadd.f32 %v2122, %v3518
  %v3520 = vpop.f32.mrf.mxu0
  %3521 = vdwg.mxu0
  %3522 = vmatpush.bf16.msra.mxu0 %v3162
  %3523 = vmatpush.bf16.msra.mxu0 %v3146
  %3524 = vmatpush.bf16.msra.mxu0 %v3130
  %3525 = vmatpush.bf16.msra.mxu0 %v3114
  %3526 = vmatpush.bf16.msra.mxu0 %v3098
  %3527 = vmatpush.bf16.msra.mxu0 %v3082
  %3528 = vmatpush.bf16.msra.mxu0 %v3066
  %3529 = vmatpush.bf16.msra.mxu0 %v3050
  %3530 = vmatmul.bf16.gmra.mxu0 %v1854
  %v3531 = vpop.f32.mrf.mxu0
  %v3532 = vadd.f32 %v3519, %v3531
  %v3533 = vpop.f32.mrf.mxu0
  %3534 = vdwg.mxu0
  %3535 = vmatpush.bf16.msra.mxu0 %v3035
  %3536 = vmatpush.bf16.msra.mxu0 %v3019
  %3537 = vmatpush.bf16.msra.mxu0 %v3003
  %3538 = vmatpush.bf16.msra.mxu0 %v2987
  %3539 = vmatpush.bf16.msra.mxu0 %v2971
  %3540 = vmatpush.bf16.msra.mxu0 %v2955
  %3541 = vmatpush.bf16.msra.mxu0 %v2939
  %3542 = vmatpush.bf16.msra.mxu0 %v2923
  %3543 = vmatmul.bf16.gmra.mxu0 %v1853
  %v3544 = vpop.f32.mrf.mxu0
  %v3545 = vadd.f32 %v2123, %v3544
  %v3546 = vpop.f32.mrf.mxu0
  %3547 = vdwg.mxu0
  %3548 = vmatpush.bf16.msra.mxu0 %v3163
  %3549 = vmatpush.bf16.msra.mxu0 %v3147
  %3550 = vmatpush.bf16.msra.mxu0 %v3131
  %3551 = vmatpush.bf16.msra.mxu0 %v3115
  %3552 = vmatpush.bf16.msra.mxu0 %v3099
  %3553 = vmatpush.bf16.msra.mxu0 %v3083
  %3554 = vmatpush.bf16.msra.mxu0 %v3067
  %3555 = vmatpush.bf16.msra.mxu0 %v3051
  %3556 = vmatmul.bf16.gmra.mxu0 %v1854
  %v3557 = vpop.f32.mrf.mxu0
  %v3558 = vadd.f32 %v3545, %v3557
  %v3559 = vpop.f32.mrf.mxu0
  %3560 = vdwg.mxu0
  %3561 = vmatpush.bf16.msra.mxu0 %v3036
  %3562 = vmatpush.bf16.msra.mxu0 %v3020
  %3563 = vmatpush.bf16.msra.mxu0 %v3004
  %3564 = vmatpush.bf16.msra.mxu0 %v2988
  %3565 = vmatpush.bf16.msra.mxu0 %v2972
  %3566 = vmatpush.bf16.msra.mxu0 %v2956
  %3567 = vmatpush.bf16.msra.mxu0 %v2940
  %3568 = vmatpush.bf16.msra.mxu0 %v2924
  %3569 = vmatmul.bf16.gmra.mxu0 %v1853
  %v3570 = vpop.f32.mrf.mxu0
  %v3571 = vadd.f32 %v2124, %v3570
  %v3572 = vpop.f32.mrf.mxu0
  %3573 = vdwg.mxu0
  %3574 = vmatpush.bf16.msra.mxu0 %v3164
  %3575 = vmatpush.bf16.msra.mxu0 %v3148
  %3576 = vmatpush.bf16.msra.mxu0 %v3132
  %3577 = vmatpush.bf16.msra.mxu0 %v3116
  %3578 = vmatpush.bf16.msra.mxu0 %v3100
  %3579 = vmatpush.bf16.msra.mxu0 %v3084
  %3580 = vmatpush.bf16.msra.mxu0 %v3068
  %3581 = vmatpush.bf16.msra.mxu0 %v3052
  %3582 = vmatmul.bf16.gmra.mxu0 %v1854
  %v3583 = vpop.f32.mrf.mxu0
  %v3584 = vadd.f32 %v3571, %v3583
  %v3585 = vpop.f32.mrf.mxu0
  %3586 = vdwg.mxu0
  %3587 = vmatpush.bf16.msra.mxu0 %v3037
  %3588 = vmatpush.bf16.msra.mxu0 %v3021
  %3589 = vmatpush.bf16.msra.mxu0 %v3005
  %3590 = vmatpush.bf16.msra.mxu0 %v2989
  %3591 = vmatpush.bf16.msra.mxu0 %v2973
  %3592 = vmatpush.bf16.msra.mxu0 %v2957
  %3593 = vmatpush.bf16.msra.mxu0 %v2941
  %3594 = vmatpush.bf16.msra.mxu0 %v2925
  %3595 = vmatmul.bf16.gmra.mxu0 %v1853
  %v3596 = vpop.f32.mrf.mxu0
  %v3597 = vadd.f32 %v2125, %v3596
  %v3598 = vpop.f32.mrf.mxu0
  %3599 = vdwg.mxu0
  %3600 = vmatpush.bf16.msra.mxu0 %v3165
  %3601 = vmatpush.bf16.msra.mxu0 %v3149
  %3602 = vmatpush.bf16.msra.mxu0 %v3133
  %3603 = vmatpush.bf16.msra.mxu0 %v3117
  %3604 = vmatpush.bf16.msra.mxu0 %v3101
  %3605 = vmatpush.bf16.msra.mxu0 %v3085
  %3606 = vmatpush.bf16.msra.mxu0 %v3069
  %3607 = vmatpush.bf16.msra.mxu0 %v3053
  %3608 = vmatmul.bf16.gmra.mxu0 %v1854
  %v3609 = vpop.f32.mrf.mxu0
  %v3610 = vadd.f32 %v3597, %v3609
  %v3611 = vpop.f32.mrf.mxu0
  %3612 = vdwg.mxu0
  %3613 = vmatpush.bf16.msra.mxu0 %v3038
  %3614 = vmatpush.bf16.msra.mxu0 %v3022
  %3615 = vmatpush.bf16.msra.mxu0 %v3006
  %3616 = vmatpush.bf16.msra.mxu0 %v2990
  %3617 = vmatpush.bf16.msra.mxu0 %v2974
  %3618 = vmatpush.bf16.msra.mxu0 %v2958
  %3619 = vmatpush.bf16.msra.mxu0 %v2942
  %3620 = vmatpush.bf16.msra.mxu0 %v2926
  %3621 = vmatmul.bf16.gmra.mxu0 %v1853
  %v3622 = vpop.f32.mrf.mxu0
  %v3623 = vadd.f32 %v2126, %v3622
  %v3624 = vpop.f32.mrf.mxu0
  %3625 = vdwg.mxu0
  %3626 = vmatpush.bf16.msra.mxu0 %v3166
  %3627 = vmatpush.bf16.msra.mxu0 %v3150
  %3628 = vmatpush.bf16.msra.mxu0 %v3134
  %3629 = vmatpush.bf16.msra.mxu0 %v3118
  %3630 = vmatpush.bf16.msra.mxu0 %v3102
  %3631 = vmatpush.bf16.msra.mxu0 %v3086
  %3632 = vmatpush.bf16.msra.mxu0 %v3070
  %3633 = vmatpush.bf16.msra.mxu0 %v3054
  %3634 = vmatmul.bf16.gmra.mxu0 %v1854
  %v3635 = vpop.f32.mrf.mxu0
  %v3636 = vadd.f32 %v3623, %v3635
  %v3637 = vpop.f32.mrf.mxu0
  %3638 = vdwg.mxu0
  %3639 = vmatpush.bf16.msra.mxu0 %v3039
  %3640 = vmatpush.bf16.msra.mxu0 %v3023
  %3641 = vmatpush.bf16.msra.mxu0 %v3007
  %3642 = vmatpush.bf16.msra.mxu0 %v2991
  %3643 = vmatpush.bf16.msra.mxu0 %v2975
  %3644 = vmatpush.bf16.msra.mxu0 %v2959
  %3645 = vmatpush.bf16.msra.mxu0 %v2943
  %3646 = vmatpush.bf16.msra.mxu0 %v2927
  %3647 = vmatmul.bf16.gmra.mxu0 %v1853
  %v3648 = vpop.f32.mrf.mxu0
  %v3649 = vadd.f32 %v2127, %v3648
  %v3650 = vpop.f32.mrf.mxu0
  %3651 = vdwg.mxu0
  %3652 = vmatpush.bf16.msra.mxu0 %v3167
  %3653 = vmatpush.bf16.msra.mxu0 %v3151
  %3654 = vmatpush.bf16.msra.mxu0 %v3135
  %3655 = vmatpush.bf16.msra.mxu0 %v3119
  %3656 = vmatpush.bf16.msra.mxu0 %v3103
  %3657 = vmatpush.bf16.msra.mxu0 %v3087
  %3658 = vmatpush.bf16.msra.mxu0 %v3071
  %3659 = vmatpush.bf16.msra.mxu0 %v3055
  %3660 = vmatmul.bf16.gmra.mxu0 %v1854
  %v3661 = vpop.f32.mrf.mxu0
  %v3662 = vadd.f32 %v3649, %v3661
  %v3663 = vpop.f32.mrf.mxu0
  %3664 = vdwg.mxu0
  %3665 = vmatpush.bf16.msra.mxu0 %v3040
  %3666 = vmatpush.bf16.msra.mxu0 %v3024
  %3667 = vmatpush.bf16.msra.mxu0 %v3008
  %3668 = vmatpush.bf16.msra.mxu0 %v2992
  %3669 = vmatpush.bf16.msra.mxu0 %v2976
  %3670 = vmatpush.bf16.msra.mxu0 %v2960
  %3671 = vmatpush.bf16.msra.mxu0 %v2944
  %3672 = vmatpush.bf16.msra.mxu0 %v2928
  %3673 = vmatmul.bf16.gmra.mxu0 %v1853
  %v3674 = vpop.f32.mrf.mxu0
  %v3675 = vadd.f32 %v2128, %v3674
  %v3676 = vpop.f32.mrf.mxu0
  %3677 = vdwg.mxu0
  %3678 = vmatpush.bf16.msra.mxu0 %v3168
  %3679 = vmatpush.bf16.msra.mxu0 %v3152
  %3680 = vmatpush.bf16.msra.mxu0 %v3136
  %3681 = vmatpush.bf16.msra.mxu0 %v3120
  %3682 = vmatpush.bf16.msra.mxu0 %v3104
  %3683 = vmatpush.bf16.msra.mxu0 %v3088
  %3684 = vmatpush.bf16.msra.mxu0 %v3072
  %3685 = vmatpush.bf16.msra.mxu0 %v3056
  %3686 = vmatmul.bf16.gmra.mxu0 %v1854
  %v3687 = vpop.f32.mrf.mxu0
  %v3688 = vadd.f32 %v3675, %v3687
  %v3689 = vpop.f32.mrf.mxu0
  %3690 = vdwg.mxu0
  %3691 = vmatpush.bf16.msra.mxu0 %v3041
  %3692 = vmatpush.bf16.msra.mxu0 %v3025
  %3693 = vmatpush.bf16.msra.mxu0 %v3009
  %3694 = vmatpush.bf16.msra.mxu0 %v2993
  %3695 = vmatpush.bf16.msra.mxu0 %v2977
  %3696 = vmatpush.bf16.msra.mxu0 %v2961
  %3697 = vmatpush.bf16.msra.mxu0 %v2945
  %3698 = vmatpush.bf16.msra.mxu0 %v2929
  %3699 = vmatmul.bf16.gmra.mxu0 %v1853
  %v3700 = vpop.f32.mrf.mxu0
  %v3701 = vadd.f32 %v2129, %v3700
  %v3702 = vpop.f32.mrf.mxu0
  %3703 = vdwg.mxu0
  %3704 = vmatpush.bf16.msra.mxu0 %v3169
  %3705 = vmatpush.bf16.msra.mxu0 %v3153
  %3706 = vmatpush.bf16.msra.mxu0 %v3137
  %3707 = vmatpush.bf16.msra.mxu0 %v3121
  %3708 = vmatpush.bf16.msra.mxu0 %v3105
  %3709 = vmatpush.bf16.msra.mxu0 %v3089
  %3710 = vmatpush.bf16.msra.mxu0 %v3073
  %3711 = vmatpush.bf16.msra.mxu0 %v3057
  %3712 = vmatmul.bf16.gmra.mxu0 %v1854
  %v3713 = vpop.f32.mrf.mxu0
  %v3714 = vadd.f32 %v3701, %v3713
  %v3715 = vpop.f32.mrf.mxu0
  %3716 = vdwg.mxu0
  %3717 = vmatpush.bf16.msra.mxu0 %v3042
  %3718 = vmatpush.bf16.msra.mxu0 %v3026
  %3719 = vmatpush.bf16.msra.mxu0 %v3010
  %3720 = vmatpush.bf16.msra.mxu0 %v2994
  %3721 = vmatpush.bf16.msra.mxu0 %v2978
  %3722 = vmatpush.bf16.msra.mxu0 %v2962
  %3723 = vmatpush.bf16.msra.mxu0 %v2946
  %3724 = vmatpush.bf16.msra.mxu0 %v2930
  %3725 = vmatmul.bf16.gmra.mxu0 %v1853
  %v3726 = vpop.f32.mrf.mxu0
  %v3727 = vadd.f32 %v2130, %v3726
  %v3728 = vpop.f32.mrf.mxu0
  %3729 = vdwg.mxu0
  %3730 = vmatpush.bf16.msra.mxu0 %v3170
  %3731 = vmatpush.bf16.msra.mxu0 %v3154
  %3732 = vmatpush.bf16.msra.mxu0 %v3138
  %3733 = vmatpush.bf16.msra.mxu0 %v3122
  %3734 = vmatpush.bf16.msra.mxu0 %v3106
  %3735 = vmatpush.bf16.msra.mxu0 %v3090
  %3736 = vmatpush.bf16.msra.mxu0 %v3074
  %3737 = vmatpush.bf16.msra.mxu0 %v3058
  %3738 = vmatmul.bf16.gmra.mxu0 %v1854
  %v3739 = vpop.f32.mrf.mxu0
  %v3740 = vadd.f32 %v3727, %v3739
  %v3741 = vpop.f32.mrf.mxu0
  %3742 = vdwg.mxu0
  %3743 = vmatpush.bf16.msra.mxu0 %v3043
  %3744 = vmatpush.bf16.msra.mxu0 %v3027
  %3745 = vmatpush.bf16.msra.mxu0 %v3011
  %3746 = vmatpush.bf16.msra.mxu0 %v2995
  %3747 = vmatpush.bf16.msra.mxu0 %v2979
  %3748 = vmatpush.bf16.msra.mxu0 %v2963
  %3749 = vmatpush.bf16.msra.mxu0 %v2947
  %3750 = vmatpush.bf16.msra.mxu0 %v2931
  %3751 = vmatmul.bf16.gmra.mxu0 %v1853
  %v3752 = vpop.f32.mrf.mxu0
  %v3753 = vadd.f32 %v2131, %v3752
  %v3754 = vpop.f32.mrf.mxu0
  %3755 = vdwg.mxu0
  %3756 = vmatpush.bf16.msra.mxu0 %v3171
  %3757 = vmatpush.bf16.msra.mxu0 %v3155
  %3758 = vmatpush.bf16.msra.mxu0 %v3139
  %3759 = vmatpush.bf16.msra.mxu0 %v3123
  %3760 = vmatpush.bf16.msra.mxu0 %v3107
  %3761 = vmatpush.bf16.msra.mxu0 %v3091
  %3762 = vmatpush.bf16.msra.mxu0 %v3075
  %3763 = vmatpush.bf16.msra.mxu0 %v3059
  %3764 = vmatmul.bf16.gmra.mxu0 %v1854
  %v3765 = vpop.f32.mrf.mxu0
  %v3766 = vadd.f32 %v3753, %v3765
  %v3767 = vpop.f32.mrf.mxu0
  %3768 = vdwg.mxu0
  %3769 = vmatpush.bf16.msra.mxu0 %v3044
  %3770 = vmatpush.bf16.msra.mxu0 %v3028
  %3771 = vmatpush.bf16.msra.mxu0 %v3012
  %3772 = vmatpush.bf16.msra.mxu0 %v2996
  %3773 = vmatpush.bf16.msra.mxu0 %v2980
  %3774 = vmatpush.bf16.msra.mxu0 %v2964
  %3775 = vmatpush.bf16.msra.mxu0 %v2948
  %3776 = vmatpush.bf16.msra.mxu0 %v2932
  %3777 = vmatmul.bf16.gmra.mxu0 %v1853
  %v3778 = vpop.f32.mrf.mxu0
  %v3779 = vadd.f32 %v2132, %v3778
  %v3780 = vpop.f32.mrf.mxu0
  %3781 = vdwg.mxu0
  %3782 = vmatpush.bf16.msra.mxu0 %v3172
  %3783 = vmatpush.bf16.msra.mxu0 %v3156
  %3784 = vmatpush.bf16.msra.mxu0 %v3140
  %3785 = vmatpush.bf16.msra.mxu0 %v3124
  %3786 = vmatpush.bf16.msra.mxu0 %v3108
  %3787 = vmatpush.bf16.msra.mxu0 %v3092
  %3788 = vmatpush.bf16.msra.mxu0 %v3076
  %3789 = vmatpush.bf16.msra.mxu0 %v3060
  %3790 = vmatmul.bf16.gmra.mxu0 %v1854
  %v3791 = vpop.f32.mrf.mxu0
  %v3792 = vadd.f32 %v3779, %v3791
  %v3793 = vpop.f32.mrf.mxu0
  %3794 = vdwg.mxu0
  %3795 = vmatpush.bf16.msra.mxu0 %v3045
  %3796 = vmatpush.bf16.msra.mxu0 %v3029
  %3797 = vmatpush.bf16.msra.mxu0 %v3013
  %3798 = vmatpush.bf16.msra.mxu0 %v2997
  %3799 = vmatpush.bf16.msra.mxu0 %v2981
  %3800 = vmatpush.bf16.msra.mxu0 %v2965
  %3801 = vmatpush.bf16.msra.mxu0 %v2949
  %3802 = vmatpush.bf16.msra.mxu0 %v2933
  %3803 = vmatmul.bf16.gmra.mxu0 %v1853
  %v3804 = vpop.f32.mrf.mxu0
  %v3805 = vadd.f32 %v2133, %v3804
  %v3806 = vpop.f32.mrf.mxu0
  %3807 = vdwg.mxu0
  %3808 = vmatpush.bf16.msra.mxu0 %v3173
  %3809 = vmatpush.bf16.msra.mxu0 %v3157
  %3810 = vmatpush.bf16.msra.mxu0 %v3141
  %3811 = vmatpush.bf16.msra.mxu0 %v3125
  %3812 = vmatpush.bf16.msra.mxu0 %v3109
  %3813 = vmatpush.bf16.msra.mxu0 %v3093
  %3814 = vmatpush.bf16.msra.mxu0 %v3077
  %3815 = vmatpush.bf16.msra.mxu0 %v3061
  %3816 = vmatmul.bf16.gmra.mxu0 %v1854
  %v3817 = vpop.f32.mrf.mxu0
  %v3818 = vadd.f32 %v3805, %v3817
  %v3819 = vpop.f32.mrf.mxu0
  %3820 = vdwg.mxu0
  %3821 = vmatpush.bf16.msra.mxu0 %v3046
  %3822 = vmatpush.bf16.msra.mxu0 %v3030
  %3823 = vmatpush.bf16.msra.mxu0 %v3014
  %3824 = vmatpush.bf16.msra.mxu0 %v2998
  %3825 = vmatpush.bf16.msra.mxu0 %v2982
  %3826 = vmatpush.bf16.msra.mxu0 %v2966
  %3827 = vmatpush.bf16.msra.mxu0 %v2950
  %3828 = vmatpush.bf16.msra.mxu0 %v2934
  %3829 = vmatmul.bf16.gmra.mxu0 %v1853
  %v3830 = vpop.f32.mrf.mxu0
  %v3831 = vadd.f32 %v2134, %v3830
  %v3832 = vpop.f32.mrf.mxu0
  %3833 = vdwg.mxu0
  %3834 = vmatpush.bf16.msra.mxu0 %v3174
  %3835 = vmatpush.bf16.msra.mxu0 %v3158
  %3836 = vmatpush.bf16.msra.mxu0 %v3142
  %3837 = vmatpush.bf16.msra.mxu0 %v3126
  %3838 = vmatpush.bf16.msra.mxu0 %v3110
  %3839 = vmatpush.bf16.msra.mxu0 %v3094
  %3840 = vmatpush.bf16.msra.mxu0 %v3078
  %3841 = vmatpush.bf16.msra.mxu0 %v3062
  %3842 = vmatmul.bf16.gmra.mxu0 %v1854
  %v3843 = vpop.f32.mrf.mxu0
  %v3844 = vadd.f32 %v3831, %v3843
  %v3845 = vpop.f32.mrf.mxu0
  %3846 = vdwg.mxu0
  %v3847 = vmax.f32 %v3454, 0.0
  %v3848 = vmax.f32 %v3480, 0.0
  %v3849 = vmax.f32 %v3506, 0.0
  %v3850 = vmax.f32 %v3532, 0.0
  %v3851 = vmax.f32 %v3558, 0.0
  %v3852 = vmax.f32 %v3584, 0.0
  %v3853 = vmax.f32 %v3610, 0.0
  %v3854 = vmax.f32 %v3636, 0.0
  %v3855 = vmax.f32 %v3662, 0.0
  %v3856 = vmax.f32 %v3688, 0.0
  %v3857 = vmax.f32 %v3714, 0.0
  %v3858 = vmax.f32 %v3740, 0.0
  %v3859 = vmax.f32 %v3766, 0.0
  %v3860 = vmax.f32 %v3792, 0.0
  %v3861 = vmax.f32 %v3818, 0.0
  %v3862 = vmax.f32 %v3844, 0.0
  %v3863 = vpack.c.bf16 %v3847, %v3847
  %v3864 = vpack.c.bf16 %v3848, %v3848
  %v3865 = vpack.c.bf16 %v3849, %v3849
  %v3866 = vpack.c.bf16 %v3850, %v3850
  %v3867 = vpack.c.bf16 %v3851, %v3851
  %v3868 = vpack.c.bf16 %v3852, %v3852
  %v3869 = vpack.c.bf16 %v3853, %v3853
  %v3870 = vpack.c.bf16 %v3854, %v3854
  %v3871 = vpack.c.bf16 %v3855, %v3855
  %v3872 = vpack.c.bf16 %v3856, %v3856
  %v3873 = vpack.c.bf16 %v3857, %v3857
  %v3874 = vpack.c.bf16 %v3858, %v3858
  %v3875 = vpack.c.bf16 %v3859, %v3859
  %v3876 = vpack.c.bf16 %v3860, %v3860
  %v3877 = vpack.c.bf16 %v3861, %v3861
  %v3878 = vpack.c.bf16 %v3862, %v3862
  %v3879 = vld [vmem:[%s2] sm:$0xf]
  %vm3880 = vcmask 64512
  %v3882 = vsel %vm3880, %v3879, 0
  %vm3884 = vcmask 1043456
  %v3886 = vsel %vm3884, %v3863, 0
  %v3889 = vsel %vm3884, %v3864, 0
  %v3892 = vsel %vm3884, %v3865, 0
  %v3895 = vsel %vm3884, %v3866, 0
  %v3898 = vsel %vm3884, %v3867, 0
  %v3901 = vsel %vm3884, %v3868, 0
  %v3904 = vsel %vm3884, %v3869, 0
  %v3907 = vsel %vm3884, %v3870, 0
  %v3910 = vsel %vm3884, %v3871, 0
  %v3913 = vsel %vm3884, %v3872, 0
  %v3916 = vsel %vm3884, %v3873, 0
  %v3919 = vsel %vm3884, %v3874, 0
  %v3922 = vsel %vm3884, %v3875, 0
  %v3925 = vsel %vm3884, %v3876, 0
  %v3928 = vsel %vm3884, %v3877, 0
  %v3931 = vsel %vm3884, %v3878, 0
  %3933 = vmatpush.bf16.msra.mxu0 0
  %3934 = vmatpush.bf16.msra.mxu0 0
  %3935 = vmatpush.bf16.msra.mxu0 0
  %3936 = vmatpush.bf16.msra.mxu0 0
  %3937 = vmatpush.bf16.msra.mxu0 0
  %3938 = vmatpush.bf16.msra.mxu0 0
  %3939 = vmatpush.bf16.msra.mxu0 0
  %3940 = vmatpush.bf16.msra.mxu0 %v3886
  %3941 = vmatmul.bf16.gmra.mxu0 %v3882
  %v3942 = vpop.f32.mrf.mxu0
  %v3943 = vadd.f32 0.0, %v3942
  %v3944 = vpop.f32.mrf.mxu0
  %3945 = vdwg.mxu0
  %3946 = vmatpush.bf16.msra.mxu0 0
  %3947 = vmatpush.bf16.msra.mxu0 0
  %3948 = vmatpush.bf16.msra.mxu0 0
  %3949 = vmatpush.bf16.msra.mxu0 0
  %3950 = vmatpush.bf16.msra.mxu0 0
  %3951 = vmatpush.bf16.msra.mxu0 0
  %3952 = vmatpush.bf16.msra.mxu0 0
  %3953 = vmatpush.bf16.msra.mxu0 %v3889
  %3954 = vmatmul.bf16.gmra.mxu0 %v3882
  %v3955 = vpop.f32.mrf.mxu0
  %v3956 = vadd.f32 0.0, %v3955
  %v3957 = vpop.f32.mrf.mxu0
  %3958 = vdwg.mxu0
  %3959 = vmatpush.bf16.msra.mxu0 0
  %3960 = vmatpush.bf16.msra.mxu0 0
  %3961 = vmatpush.bf16.msra.mxu0 0
  %3962 = vmatpush.bf16.msra.mxu0 0
  %3963 = vmatpush.bf16.msra.mxu0 0
  %3964 = vmatpush.bf16.msra.mxu0 0
  %3965 = vmatpush.bf16.msra.mxu0 0
  %3966 = vmatpush.bf16.msra.mxu0 %v3892
  %3967 = vmatmul.bf16.gmra.mxu0 %v3882
  %v3968 = vpop.f32.mrf.mxu0
  %v3969 = vadd.f32 0.0, %v3968
  %v3970 = vpop.f32.mrf.mxu0
  %3971 = vdwg.mxu0
  %3972 = vmatpush.bf16.msra.mxu0 0
  %3973 = vmatpush.bf16.msra.mxu0 0
  %3974 = vmatpush.bf16.msra.mxu0 0
  %3975 = vmatpush.bf16.msra.mxu0 0
  %3976 = vmatpush.bf16.msra.mxu0 0
  %3977 = vmatpush.bf16.msra.mxu0 0
  %3978 = vmatpush.bf16.msra.mxu0 0
  %3979 = vmatpush.bf16.msra.mxu0 %v3895
  %3980 = vmatmul.bf16.gmra.mxu0 %v3882
  %v3981 = vpop.f32.mrf.mxu0
  %v3982 = vadd.f32 0.0, %v3981
  %v3983 = vpop.f32.mrf.mxu0
  %3984 = vdwg.mxu0
  %3985 = vmatpush.bf16.msra.mxu0 0
  %3986 = vmatpush.bf16.msra.mxu0 0
  %3987 = vmatpush.bf16.msra.mxu0 0
  %3988 = vmatpush.bf16.msra.mxu0 0
  %3989 = vmatpush.bf16.msra.mxu0 0
  %3990 = vmatpush.bf16.msra.mxu0 0
  %3991 = vmatpush.bf16.msra.mxu0 0
  %3992 = vmatpush.bf16.msra.mxu0 %v3898
  %3993 = vmatmul.bf16.gmra.mxu0 %v3882
  %v3994 = vpop.f32.mrf.mxu0
  %v3995 = vadd.f32 0.0, %v3994
  %v3996 = vpop.f32.mrf.mxu0
  %3997 = vdwg.mxu0
  %3998 = vmatpush.bf16.msra.mxu0 0
  %3999 = vmatpush.bf16.msra.mxu0 0
  %4000 = vmatpush.bf16.msra.mxu0 0
  %4001 = vmatpush.bf16.msra.mxu0 0
  %4002 = vmatpush.bf16.msra.mxu0 0
  %4003 = vmatpush.bf16.msra.mxu0 0
  %4004 = vmatpush.bf16.msra.mxu0 0
  %4005 = vmatpush.bf16.msra.mxu0 %v3901
  %4006 = vmatmul.bf16.gmra.mxu0 %v3882
  %v4007 = vpop.f32.mrf.mxu0
  %v4008 = vadd.f32 0.0, %v4007
  %v4009 = vpop.f32.mrf.mxu0
  %4010 = vdwg.mxu0
  %4011 = vmatpush.bf16.msra.mxu0 0
  %4012 = vmatpush.bf16.msra.mxu0 0
  %4013 = vmatpush.bf16.msra.mxu0 0
  %4014 = vmatpush.bf16.msra.mxu0 0
  %4015 = vmatpush.bf16.msra.mxu0 0
  %4016 = vmatpush.bf16.msra.mxu0 0
  %4017 = vmatpush.bf16.msra.mxu0 0
  %4018 = vmatpush.bf16.msra.mxu0 %v3904
  %4019 = vmatmul.bf16.gmra.mxu0 %v3882
  %v4020 = vpop.f32.mrf.mxu0
  %v4021 = vadd.f32 0.0, %v4020
  %v4022 = vpop.f32.mrf.mxu0
  %4023 = vdwg.mxu0
  %4024 = vmatpush.bf16.msra.mxu0 0
  %4025 = vmatpush.bf16.msra.mxu0 0
  %4026 = vmatpush.bf16.msra.mxu0 0
  %4027 = vmatpush.bf16.msra.mxu0 0
  %4028 = vmatpush.bf16.msra.mxu0 0
  %4029 = vmatpush.bf16.msra.mxu0 0
  %4030 = vmatpush.bf16.msra.mxu0 0
  %4031 = vmatpush.bf16.msra.mxu0 %v3907
  %4032 = vmatmul.bf16.gmra.mxu0 %v3882
  %v4033 = vpop.f32.mrf.mxu0
  %v4034 = vadd.f32 0.0, %v4033
  %v4035 = vpop.f32.mrf.mxu0
  %4036 = vdwg.mxu0
  %4037 = vmatpush.bf16.msra.mxu0 0
  %4038 = vmatpush.bf16.msra.mxu0 0
  %4039 = vmatpush.bf16.msra.mxu0 0
  %4040 = vmatpush.bf16.msra.mxu0 0
  %4041 = vmatpush.bf16.msra.mxu0 0
  %4042 = vmatpush.bf16.msra.mxu0 0
  %4043 = vmatpush.bf16.msra.mxu0 0
  %4044 = vmatpush.bf16.msra.mxu0 %v3910
  %4045 = vmatmul.bf16.gmra.mxu0 %v3882
  %v4046 = vpop.f32.mrf.mxu0
  %v4047 = vadd.f32 0.0, %v4046
  %v4048 = vpop.f32.mrf.mxu0
  %4049 = vdwg.mxu0
  %4050 = vmatpush.bf16.msra.mxu0 0
  %4051 = vmatpush.bf16.msra.mxu0 0
  %4052 = vmatpush.bf16.msra.mxu0 0
  %4053 = vmatpush.bf16.msra.mxu0 0
  %4054 = vmatpush.bf16.msra.mxu0 0
  %4055 = vmatpush.bf16.msra.mxu0 0
  %4056 = vmatpush.bf16.msra.mxu0 0
  %4057 = vmatpush.bf16.msra.mxu0 %v3913
  %4058 = vmatmul.bf16.gmra.mxu0 %v3882
  %v4059 = vpop.f32.mrf.mxu0
  %v4060 = vadd.f32 0.0, %v4059
  %v4061 = vpop.f32.mrf.mxu0
  %4062 = vdwg.mxu0
  %4063 = vmatpush.bf16.msra.mxu0 0
  %4064 = vmatpush.bf16.msra.mxu0 0
  %4065 = vmatpush.bf16.msra.mxu0 0
  %4066 = vmatpush.bf16.msra.mxu0 0
  %4067 = vmatpush.bf16.msra.mxu0 0
  %4068 = vmatpush.bf16.msra.mxu0 0
  %4069 = vmatpush.bf16.msra.mxu0 0
  %4070 = vmatpush.bf16.msra.mxu0 %v3916
  %4071 = vmatmul.bf16.gmra.mxu0 %v3882
  %v4072 = vpop.f32.mrf.mxu0
  %v4073 = vadd.f32 0.0, %v4072
  %v4074 = vpop.f32.mrf.mxu0
  %4075 = vdwg.mxu0
  %4076 = vmatpush.bf16.msra.mxu0 0
  %4077 = vmatpush.bf16.msra.mxu0 0
  %4078 = vmatpush.bf16.msra.mxu0 0
  %4079 = vmatpush.bf16.msra.mxu0 0
  %4080 = vmatpush.bf16.msra.mxu0 0
  %4081 = vmatpush.bf16.msra.mxu0 0
  %4082 = vmatpush.bf16.msra.mxu0 0
  %4083 = vmatpush.bf16.msra.mxu0 %v3919
  %4084 = vmatmul.bf16.gmra.mxu0 %v3882
  %v4085 = vpop.f32.mrf.mxu0
  %v4086 = vadd.f32 0.0, %v4085
  %v4087 = vpop.f32.mrf.mxu0
  %4088 = vdwg.mxu0
  %4089 = vmatpush.bf16.msra.mxu0 0
  %4090 = vmatpush.bf16.msra.mxu0 0
  %4091 = vmatpush.bf16.msra.mxu0 0
  %4092 = vmatpush.bf16.msra.mxu0 0
  %4093 = vmatpush.bf16.msra.mxu0 0
  %4094 = vmatpush.bf16.msra.mxu0 0
  %4095 = vmatpush.bf16.msra.mxu0 0
  %4096 = vmatpush.bf16.msra.mxu0 %v3922
  %4097 = vmatmul.bf16.gmra.mxu0 %v3882
  %v4098 = vpop.f32.mrf.mxu0
  %v4099 = vadd.f32 0.0, %v4098
  %v4100 = vpop.f32.mrf.mxu0
  %4101 = vdwg.mxu0
  %4102 = vmatpush.bf16.msra.mxu0 0
  %4103 = vmatpush.bf16.msra.mxu0 0
  %4104 = vmatpush.bf16.msra.mxu0 0
  %4105 = vmatpush.bf16.msra.mxu0 0
  %4106 = vmatpush.bf16.msra.mxu0 0
  %4107 = vmatpush.bf16.msra.mxu0 0
  %4108 = vmatpush.bf16.msra.mxu0 0
  %4109 = vmatpush.bf16.msra.mxu0 %v3925
  %4110 = vmatmul.bf16.gmra.mxu0 %v3882
  %v4111 = vpop.f32.mrf.mxu0
  %v4112 = vadd.f32 0.0, %v4111
  %v4113 = vpop.f32.mrf.mxu0
  %4114 = vdwg.mxu0
  %4115 = vmatpush.bf16.msra.mxu0 0
  %4116 = vmatpush.bf16.msra.mxu0 0
  %4117 = vmatpush.bf16.msra.mxu0 0
  %4118 = vmatpush.bf16.msra.mxu0 0
  %4119 = vmatpush.bf16.msra.mxu0 0
  %4120 = vmatpush.bf16.msra.mxu0 0
  %4121 = vmatpush.bf16.msra.mxu0 0
  %4122 = vmatpush.bf16.msra.mxu0 %v3928
  %4123 = vmatmul.bf16.gmra.mxu0 %v3882
  %v4124 = vpop.f32.mrf.mxu0
  %v4125 = vadd.f32 0.0, %v4124
  %v4126 = vpop.f32.mrf.mxu0
  %4127 = vdwg.mxu0
  %4128 = vmatpush.bf16.msra.mxu0 0
  %4129 = vmatpush.bf16.msra.mxu0 0
  %4130 = vmatpush.bf16.msra.mxu0 0
  %4131 = vmatpush.bf16.msra.mxu0 0
  %4132 = vmatpush.bf16.msra.mxu0 0
  %4133 = vmatpush.bf16.msra.mxu0 0
  %4134 = vmatpush.bf16.msra.mxu0 0
  %4135 = vmatpush.bf16.msra.mxu0 %v3931
  %4136 = vmatmul.bf16.gmra.mxu0 %v3882
  %v4137 = vpop.f32.mrf.mxu0
  %v4138 = vadd.f32 0.0, %v4137
  %v4139 = vpop.f32.mrf.mxu0
  %4140 = vdwg.mxu0
  %v4141 = vpack.c.bf16 %v3943, %v3943
  %v4142 = vpack.c.bf16 %v3956, %v3956
  %v4143 = vpack.c.bf16 %v3969, %v3969
  %v4144 = vpack.c.bf16 %v3982, %v3982
  %v4145 = vpack.c.bf16 %v3995, %v3995
  %v4146 = vpack.c.bf16 %v4008, %v4008
  %v4147 = vpack.c.bf16 %v4021, %v4021
  %v4148 = vpack.c.bf16 %v4034, %v4034
  %v4149 = vpack.c.bf16 %v4047, %v4047
  %v4150 = vpack.c.bf16 %v4060, %v4060
  %v4151 = vpack.c.bf16 %v4073, %v4073
  %v4152 = vpack.c.bf16 %v4086, %v4086
  %v4153 = vpack.c.bf16 %v4099, %v4099
  %v4154 = vpack.c.bf16 %v4112, %v4112
  %v4155 = vpack.c.bf16 %v4125, %v4125
  %v4156 = vpack.c.bf16 %v4138, %v4138
  %s4157 = smul.u32 4, 2
  %s4158 = smul.u32 %s4157, 16
  %s4159 = sshll.u32 %s4158, 4
  %4160 = dma.done %s572, %s4159
  %v4161 = vld [vmem:[#allocation3] sm:$0xff]
  %v4162 = vld [vmem:[#allocation3 + $0x8] sm:$0xff]
  %v4163 = vld [vmem:[#allocation3 + $0x10] sm:$0xff]
  %v4164 = vld [vmem:[#allocation3 + $0x18] sm:$0xff]
  %v4165 = vld [vmem:[#allocation3 + $0x20] sm:$0xff]
  %v4166 = vld [vmem:[#allocation3 + $0x28] sm:$0xff]
  %v4167 = vld [vmem:[#allocation3 + $0x30] sm:$0xff]
  %v4168 = vld [vmem:[#allocation3 + $0x38] sm:$0xff]
  %v4169 = vld [vmem:[#allocation3 + $0x40] sm:$0xff]
  %v4170 = vld [vmem:[#allocation3 + $0x48] sm:$0xff]
  %v4171 = vld [vmem:[#allocation3 + $0x50] sm:$0xff]
  %v4172 = vld [vmem:[#allocation3 + $0x58] sm:$0xff]
  %v4173 = vld [vmem:[#allocation3 + $0x60] sm:$0xff]
  %v4174 = vld [vmem:[#allocation3 + $0x68] sm:$0xff]
  %v4175 = vld [vmem:[#allocation3 + $0x70] sm:$0xff]
  %v4176 = vld [vmem:[#allocation3 + $0x78] sm:$0xff]
  %v4177 = vld [vmem:[%s3 + $0x1a] sm:$0x1]
  %v4179 = vperm.slane %v4177, 0
  %v4197 = vunpack.c.l.b16 %v4161
  %v4198 = vunpack.c.h.b16 %v4161
  %v4199 = vunpack.c.l.b16 %v4162
  %v4200 = vunpack.c.h.b16 %v4162
  %v4201 = vunpack.c.l.b16 %v4163
  %v4202 = vunpack.c.h.b16 %v4163
  %v4203 = vunpack.c.l.b16 %v4164
  %v4204 = vunpack.c.h.b16 %v4164
  %v4205 = vunpack.c.l.b16 %v4165
  %v4206 = vunpack.c.h.b16 %v4165
  %v4207 = vunpack.c.l.b16 %v4166
  %v4208 = vunpack.c.h.b16 %v4166
  %v4209 = vunpack.c.l.b16 %v4167
  %v4210 = vunpack.c.h.b16 %v4167
  %v4211 = vunpack.c.l.b16 %v4168
  %v4212 = vunpack.c.h.b16 %v4168
  %v4213 = vunpack.c.l.b16 %v4169
  %v4214 = vunpack.c.h.b16 %v4169
  %v4215 = vunpack.c.l.b16 %v4170
  %v4216 = vunpack.c.h.b16 %v4170
  %v4217 = vunpack.c.l.b16 %v4171
  %v4218 = vunpack.c.h.b16 %v4171
  %v4219 = vunpack.c.l.b16 %v4172
  %v4220 = vunpack.c.h.b16 %v4172
  %v4221 = vunpack.c.l.b16 %v4173
  %v4222 = vunpack.c.h.b16 %v4173
  %v4223 = vunpack.c.l.b16 %v4174
  %v4224 = vunpack.c.h.b16 %v4174
  %v4225 = vunpack.c.l.b16 %v4175
  %v4226 = vunpack.c.h.b16 %v4175
  %v4227 = vunpack.c.l.b16 %v4176
  %v4228 = vunpack.c.h.b16 %v4176
  %v4229 = vpack.c.b16 %v4213, %v4197
  %v4230 = vpack.c.b16 %v4214, %v4198
  %v4231 = vpack.c.b16 %v4215, %v4199
  %v4232 = vpack.c.b16 %v4216, %v4200
  %v4233 = vpack.c.b16 %v4217, %v4201
  %v4234 = vpack.c.b16 %v4218, %v4202
  %v4235 = vpack.c.b16 %v4219, %v4203
  %v4236 = vpack.c.b16 %v4220, %v4204
  %v4237 = vpack.c.b16 %v4221, %v4205
  %v4238 = vpack.c.b16 %v4222, %v4206
  %v4239 = vpack.c.b16 %v4223, %v4207
  %v4240 = vpack.c.b16 %v4224, %v4208
  %v4241 = vpack.c.b16 %v4225, %v4209
  %v4242 = vpack.c.b16 %v4226, %v4210
  %v4243 = vpack.c.b16 %v4227, %v4211
  %v4244 = vpack.c.b16 %v4228, %v4212
  %4261 = vmatpush.bf16.xpose.msra.mxu0 0
  %4262 = vmatpush.bf16.xpose.msra.mxu0 0
  %4263 = vmatpush.bf16.xpose.msra.mxu0 0
  %4264 = vmatpush.bf16.xpose.msra.mxu0 0
  %4265 = vmatpush.bf16.xpose.msra.mxu0 0
  %4266 = vmatpush.bf16.xpose.msra.mxu0 0
  %4267 = vmatpush.bf16.xpose.msra.mxu0 0
  %4268 = vmatpush.bf16.xpose.msra.mxu0 %v4229
  %4269 = vmatmul.bf16.gmra.mxu0 %v4141
  %v4270 = vpop.f32.mrf.mxu0
  %v4271 = vadd.f32 %v4179, %v4270
  %v4272 = vpop.f32.mrf.mxu0
  %4273 = vdwg.mxu0
  %4274 = vmatpush.bf16.xpose.msra.mxu0 0
  %4275 = vmatpush.bf16.xpose.msra.mxu0 0
  %4276 = vmatpush.bf16.xpose.msra.mxu0 0
  %4277 = vmatpush.bf16.xpose.msra.mxu0 0
  %4278 = vmatpush.bf16.xpose.msra.mxu0 0
  %4279 = vmatpush.bf16.xpose.msra.mxu0 0
  %4280 = vmatpush.bf16.xpose.msra.mxu0 0
  %4281 = vmatpush.bf16.xpose.msra.mxu0 %v4230
  %4282 = vmatmul.bf16.gmra.mxu0 %v4142
  %v4283 = vpop.f32.mrf.mxu0
  %v4284 = vadd.f32 %v4271, %v4283
  %v4285 = vpop.f32.mrf.mxu0
  %4286 = vdwg.mxu0
  %4287 = vmatpush.bf16.xpose.msra.mxu0 0
  %4288 = vmatpush.bf16.xpose.msra.mxu0 0
  %4289 = vmatpush.bf16.xpose.msra.mxu0 0
  %4290 = vmatpush.bf16.xpose.msra.mxu0 0
  %4291 = vmatpush.bf16.xpose.msra.mxu0 0
  %4292 = vmatpush.bf16.xpose.msra.mxu0 0
  %4293 = vmatpush.bf16.xpose.msra.mxu0 0
  %4294 = vmatpush.bf16.xpose.msra.mxu0 %v4231
  %4295 = vmatmul.bf16.gmra.mxu0 %v4143
  %v4296 = vpop.f32.mrf.mxu0
  %v4297 = vadd.f32 %v4284, %v4296
  %v4298 = vpop.f32.mrf.mxu0
  %4299 = vdwg.mxu0
  %4300 = vmatpush.bf16.xpose.msra.mxu0 0
  %4301 = vmatpush.bf16.xpose.msra.mxu0 0
  %4302 = vmatpush.bf16.xpose.msra.mxu0 0
  %4303 = vmatpush.bf16.xpose.msra.mxu0 0
  %4304 = vmatpush.bf16.xpose.msra.mxu0 0
  %4305 = vmatpush.bf16.xpose.msra.mxu0 0
  %4306 = vmatpush.bf16.xpose.msra.mxu0 0
  %4307 = vmatpush.bf16.xpose.msra.mxu0 %v4232
  %4308 = vmatmul.bf16.gmra.mxu0 %v4144
  %v4309 = vpop.f32.mrf.mxu0
  %v4310 = vadd.f32 %v4297, %v4309
  %v4311 = vpop.f32.mrf.mxu0
  %4312 = vdwg.mxu0
  %4313 = vmatpush.bf16.xpose.msra.mxu0 0
  %4314 = vmatpush.bf16.xpose.msra.mxu0 0
  %4315 = vmatpush.bf16.xpose.msra.mxu0 0
  %4316 = vmatpush.bf16.xpose.msra.mxu0 0
  %4317 = vmatpush.bf16.xpose.msra.mxu0 0
  %4318 = vmatpush.bf16.xpose.msra.mxu0 0
  %4319 = vmatpush.bf16.xpose.msra.mxu0 0
  %4320 = vmatpush.bf16.xpose.msra.mxu0 %v4233
  %4321 = vmatmul.bf16.gmra.mxu0 %v4145
  %v4322 = vpop.f32.mrf.mxu0
  %v4323 = vadd.f32 %v4310, %v4322
  %v4324 = vpop.f32.mrf.mxu0
  %4325 = vdwg.mxu0
  %4326 = vmatpush.bf16.xpose.msra.mxu0 0
  %4327 = vmatpush.bf16.xpose.msra.mxu0 0
  %4328 = vmatpush.bf16.xpose.msra.mxu0 0
  %4329 = vmatpush.bf16.xpose.msra.mxu0 0
  %4330 = vmatpush.bf16.xpose.msra.mxu0 0
  %4331 = vmatpush.bf16.xpose.msra.mxu0 0
  %4332 = vmatpush.bf16.xpose.msra.mxu0 0
  %4333 = vmatpush.bf16.xpose.msra.mxu0 %v4234
  %4334 = vmatmul.bf16.gmra.mxu0 %v4146
  %v4335 = vpop.f32.mrf.mxu0
  %v4336 = vadd.f32 %v4323, %v4335
  %v4337 = vpop.f32.mrf.mxu0
  %4338 = vdwg.mxu0
  %4339 = vmatpush.bf16.xpose.msra.mxu0 0
  %4340 = vmatpush.bf16.xpose.msra.mxu0 0
  %4341 = vmatpush.bf16.xpose.msra.mxu0 0
  %4342 = vmatpush.bf16.xpose.msra.mxu0 0
  %4343 = vmatpush.bf16.xpose.msra.mxu0 0
  %4344 = vmatpush.bf16.xpose.msra.mxu0 0
  %4345 = vmatpush.bf16.xpose.msra.mxu0 0
  %4346 = vmatpush.bf16.xpose.msra.mxu0 %v4235
  %4347 = vmatmul.bf16.gmra.mxu0 %v4147
  %v4348 = vpop.f32.mrf.mxu0
  %v4349 = vadd.f32 %v4336, %v4348
  %v4350 = vpop.f32.mrf.mxu0
  %4351 = vdwg.mxu0
  %4352 = vmatpush.bf16.xpose.msra.mxu0 0
  %4353 = vmatpush.bf16.xpose.msra.mxu0 0
  %4354 = vmatpush.bf16.xpose.msra.mxu0 0
  %4355 = vmatpush.bf16.xpose.msra.mxu0 0
  %4356 = vmatpush.bf16.xpose.msra.mxu0 0
  %4357 = vmatpush.bf16.xpose.msra.mxu0 0
  %4358 = vmatpush.bf16.xpose.msra.mxu0 0
  %4359 = vmatpush.bf16.xpose.msra.mxu0 %v4236
  %4360 = vmatmul.bf16.gmra.mxu0 %v4148
  %v4361 = vpop.f32.mrf.mxu0
  %v4362 = vadd.f32 %v4349, %v4361
  %v4363 = vpop.f32.mrf.mxu0
  %4364 = vdwg.mxu0
  %4365 = vmatpush.bf16.xpose.msra.mxu0 0
  %4366 = vmatpush.bf16.xpose.msra.mxu0 0
  %4367 = vmatpush.bf16.xpose.msra.mxu0 0
  %4368 = vmatpush.bf16.xpose.msra.mxu0 0
  %4369 = vmatpush.bf16.xpose.msra.mxu0 0
  %4370 = vmatpush.bf16.xpose.msra.mxu0 0
  %4371 = vmatpush.bf16.xpose.msra.mxu0 0
  %4372 = vmatpush.bf16.xpose.msra.mxu0 %v4237
  %4373 = vmatmul.bf16.gmra.mxu0 %v4149
  %v4374 = vpop.f32.mrf.mxu0
  %v4375 = vadd.f32 %v4362, %v4374
  %v4376 = vpop.f32.mrf.mxu0
  %4377 = vdwg.mxu0
  %4378 = vmatpush.bf16.xpose.msra.mxu0 0
  %4379 = vmatpush.bf16.xpose.msra.mxu0 0
  %4380 = vmatpush.bf16.xpose.msra.mxu0 0
  %4381 = vmatpush.bf16.xpose.msra.mxu0 0
  %4382 = vmatpush.bf16.xpose.msra.mxu0 0
  %4383 = vmatpush.bf16.xpose.msra.mxu0 0
  %4384 = vmatpush.bf16.xpose.msra.mxu0 0
  %4385 = vmatpush.bf16.xpose.msra.mxu0 %v4238
  %4386 = vmatmul.bf16.gmra.mxu0 %v4150
  %v4387 = vpop.f32.mrf.mxu0
  %v4388 = vadd.f32 %v4375, %v4387
  %v4389 = vpop.f32.mrf.mxu0
  %4390 = vdwg.mxu0
  %4391 = vmatpush.bf16.xpose.msra.mxu0 0
  %4392 = vmatpush.bf16.xpose.msra.mxu0 0
  %4393 = vmatpush.bf16.xpose.msra.mxu0 0
  %4394 = vmatpush.bf16.xpose.msra.mxu0 0
  %4395 = vmatpush.bf16.xpose.msra.mxu0 0
  %4396 = vmatpush.bf16.xpose.msra.mxu0 0
  %4397 = vmatpush.bf16.xpose.msra.mxu0 0
  %4398 = vmatpush.bf16.xpose.msra.mxu0 %v4239
  %4399 = vmatmul.bf16.gmra.mxu0 %v4151
  %v4400 = vpop.f32.mrf.mxu0
  %v4401 = vadd.f32 %v4388, %v4400
  %v4402 = vpop.f32.mrf.mxu0
  %4403 = vdwg.mxu0
  %4404 = vmatpush.bf16.xpose.msra.mxu0 0
  %4405 = vmatpush.bf16.xpose.msra.mxu0 0
  %4406 = vmatpush.bf16.xpose.msra.mxu0 0
  %4407 = vmatpush.bf16.xpose.msra.mxu0 0
  %4408 = vmatpush.bf16.xpose.msra.mxu0 0
  %4409 = vmatpush.bf16.xpose.msra.mxu0 0
  %4410 = vmatpush.bf16.xpose.msra.mxu0 0
  %4411 = vmatpush.bf16.xpose.msra.mxu0 %v4240
  %4412 = vmatmul.bf16.gmra.mxu0 %v4152
  %v4413 = vpop.f32.mrf.mxu0
  %v4414 = vadd.f32 %v4401, %v4413
  %v4415 = vpop.f32.mrf.mxu0
  %4416 = vdwg.mxu0
  %4417 = vmatpush.bf16.xpose.msra.mxu0 0
  %4418 = vmatpush.bf16.xpose.msra.mxu0 0
  %4419 = vmatpush.bf16.xpose.msra.mxu0 0
  %4420 = vmatpush.bf16.xpose.msra.mxu0 0
  %4421 = vmatpush.bf16.xpose.msra.mxu0 0
  %4422 = vmatpush.bf16.xpose.msra.mxu0 0
  %4423 = vmatpush.bf16.xpose.msra.mxu0 0
  %4424 = vmatpush.bf16.xpose.msra.mxu0 %v4241
  %4425 = vmatmul.bf16.gmra.mxu0 %v4153
  %v4426 = vpop.f32.mrf.mxu0
  %v4427 = vadd.f32 %v4414, %v4426
  %v4428 = vpop.f32.mrf.mxu0
  %4429 = vdwg.mxu0
  %4430 = vmatpush.bf16.xpose.msra.mxu0 0
  %4431 = vmatpush.bf16.xpose.msra.mxu0 0
  %4432 = vmatpush.bf16.xpose.msra.mxu0 0
  %4433 = vmatpush.bf16.xpose.msra.mxu0 0
  %4434 = vmatpush.bf16.xpose.msra.mxu0 0
  %4435 = vmatpush.bf16.xpose.msra.mxu0 0
  %4436 = vmatpush.bf16.xpose.msra.mxu0 0
  %4437 = vmatpush.bf16.xpose.msra.mxu0 %v4242
  %4438 = vmatmul.bf16.gmra.mxu0 %v4154
  %v4439 = vpop.f32.mrf.mxu0
  %v4440 = vadd.f32 %v4427, %v4439
  %v4441 = vpop.f32.mrf.mxu0
  %4442 = vdwg.mxu0
  %4443 = vmatpush.bf16.xpose.msra.mxu0 0
  %4444 = vmatpush.bf16.xpose.msra.mxu0 0
  %4445 = vmatpush.bf16.xpose.msra.mxu0 0
  %4446 = vmatpush.bf16.xpose.msra.mxu0 0
  %4447 = vmatpush.bf16.xpose.msra.mxu0 0
  %4448 = vmatpush.bf16.xpose.msra.mxu0 0
  %4449 = vmatpush.bf16.xpose.msra.mxu0 0
  %4450 = vmatpush.bf16.xpose.msra.mxu0 %v4243
  %4451 = vmatmul.bf16.gmra.mxu0 %v4155
  %v4452 = vpop.f32.mrf.mxu0
  %v4453 = vadd.f32 %v4440, %v4452
  %v4454 = vpop.f32.mrf.mxu0
  %4455 = vdwg.mxu0
  %4456 = vmatpush.bf16.xpose.msra.mxu0 0
  %4457 = vmatpush.bf16.xpose.msra.mxu0 0
  %4458 = vmatpush.bf16.xpose.msra.mxu0 0
  %4459 = vmatpush.bf16.xpose.msra.mxu0 0
  %4460 = vmatpush.bf16.xpose.msra.mxu0 0
  %4461 = vmatpush.bf16.xpose.msra.mxu0 0
  %4462 = vmatpush.bf16.xpose.msra.mxu0 0
  %4463 = vmatpush.bf16.xpose.msra.mxu0 %v4244
  %4464 = vmatmul.bf16.gmra.mxu0 %v4156
  %v4465 = vpop.f32.mrf.mxu0
  %v4466 = vadd.f32 %v4453, %v4465
  %v4467 = vpop.f32.mrf.mxu0
  %4468 = vdwg.mxu0
  %4469 = vst.msk [vmem:[%s14] sm:$0xff] %vm1244, %v4466
  // Predicated region
  $region88: #{fenet_forward.1} parent=0 // pred_check
    _
  $region89: #{fenet_forward.1} parent=0 // pred_check_branch
    %4471 = sbr.rel (0) target = $region91
  $region90: #{fenet_forward.1} parent=0 // pred_region
    _
  $region91: #{fenet_forward.1} parent=0 // pred_fallthru
    _
  // Predicated region
  $region92: #{fenet_forward.1} parent=0 // pred_check
    _
  $region93: #{fenet_forward.1} parent=0 // pred_check_branch
    %4473 = sbr.rel (0) target = $region95
  $region94: #{fenet_forward.1} parent=0 // pred_region
    _
  $region95: #{fenet_forward.1} parent=0 // pred_fallthru
    _
  %4474 = vsyncmov [#allocation4]
  %s4475 = vpop.sfrf %4474
  %p4476 = scmp.eq.s32.totalorder %s4475, 0
  %p4477 = pneg %p4476
  %4479 = shalt.err (%p4477)
  %s4480 = scalar_lea.sflag [#allocation4], 1
  %4481 = vsyncmov %s4480
  %s4482 = vpop.sfrf %4481
  %p4483 = scmp.eq.s32.totalorder %s4482, 0
  %p4484 = pneg %p4483
  %4486 = shalt.err (%p4484)

</llo_original>
